<compile_context>
chip_gen: v7x
topology: tpu7x:2x2x1
jax: 0.10.0
libtpu: 0.0.40
codegen_flags: <defaults>
</compile_context>

<pallas_src>
import functools

import jax
import jax.numpy as jnp
import numpy as np
from jax import lax
from jax.experimental import pallas as pl
from jax.experimental.pallas import tpu as pltpu

_SEG = 128   # lane width of one packed projection segment


def _round_up(a, b):
    return (a + b - 1) // b * b


# ----------------------------- Pallas kernel --------------------------------


def _sab_kernel(x_ref, wqkv_ref, bqkv_ref, w9_ref, b9_ref, o_ref, *,
                width, pad):
    """Per-batch fused qkv proj + softmax attention + 3x3 conv/BN/ReLU + res.

    x_ref    : (1, HW, C)    f32   NHWC-flattened input
    wqkv_ref : (C, 2*SEG)    bf16  packed [v | q*scale | 0][0 | k | 0] weights
    bqkv_ref : (1, 2*SEG)    f32   packed biases (same layout)
    w9_ref   : (9*C, C)      bf16  3x3 conv weights, BN scale folded, rows
                                   ordered (dy, dx, c_in)
    b9_ref   : (1, C)        f32   conv bias + BN shift, folded
    o_ref    : (1, HW, C)    f32   output
    """
    hw, ch = x_ref.shape[1], x_ref.shape[2]

    # --- packed 1x1 q/k/v projection: one bf16 MXU matmul ---------------------
    x16 = x_ref[0].astype(jnp.bfloat16)                               # (HW, C)
    qkv = jnp.dot(x16, wqkv_ref[...],
                  preferred_element_type=jnp.float32) + bqkv_ref[...]  # (HW, 2*SEG)
    qkv16 = qkv.astype(jnp.bfloat16)
    seg_a = qkv16[:, :_SEG]          # [ v | q*scale | 0 ]   (128-aligned slice)
    seg_b = qkv16[:, _SEG:]          # [ 0 | k       | 0 ]   (128-aligned slice)

    # --- attention: softmax(scale * q k^T) v ----------------------------------
    # seg_b is zero outside k's lanes, so contracting the full 128 lanes gives
    # exactly (scaled q) . k with no masking / lane shuffles.
    scores = lax.dot_general(seg_a, seg_b, (((1,), (1,)), ((), ())),
                             preferred_element_type=jnp.float32)       # (HW, HW)
    m = jnp.max(scores, axis=-1, keepdims=True)
    p = jnp.exp(scores - m)
    denom = jnp.sum(p, axis=-1, keepdims=True)
    attn_pack = jnp.dot(p.astype(jnp.bfloat16), seg_a,
                        preferred_element_type=jnp.float32)            # (HW, SEG)
    attn = attn_pack[:, :ch] * pl.reciprocal(denom, approx=True)       # (HW, C)

    # --- 3x3 conv (bias/BN folded) + ReLU + residual, all in VMEM -------------
    # Zero-pad by `pad` flattened pixels on both ends; tap (dy, dx) is a
    # statically shifted (HW, C) view.  Column wrap-around across image rows
    # is removed with in-kernel iota masks; vertical edges are covered by the
    # zero pad rows.  The nine masked windows are lane-stacked into a single
    # (HW, 9C) operand so the whole conv is ONE K=9C bf16 matmul.
    zpad = jnp.zeros((pad, ch), jnp.float32)
    buf = jnp.concatenate([zpad, attn, zpad], axis=0)                  # (HW+2p, C)

    col = lax.broadcasted_iota(jnp.int32, (hw, 1), 0) % width
    left_ok = (col >= 1).astype(jnp.float32)           # tap column j-1 valid
    right_ok = (col <= width - 2).astype(jnp.float32)  # tap column j+1 valid

    wins = []
    for dy in range(3):
        for dx in range(3):
            start = pad + (dy - 1) * width + (dx - 1)
            win = buf[start:start + hw, :]                             # (HW, C)
            if dx == 0:
                win = win * left_ok
            elif dx == 2:
                win = win * right_ok
            wins.append(win)
    patches = jnp.concatenate(wins, axis=-1).astype(jnp.bfloat16)      # (HW, 9C)
    conv = jnp.dot(patches, w9_ref[...],
                   preferred_element_type=jnp.float32)                 # (HW, C)

    y = jnp.maximum(conv + b9_ref[...], 0.0)            # folded bias/BN + ReLU
    o_ref[0] = y + x_ref[0]                              # residual (re-read x)


# ------------------------------- wrapper -------------------------------------


def sab_forward(x_nchw, params):
    B, C, H, W = x_nchw.shape
    HW = H * W
    Cq = C // 8
    assert C % 8 == 0 and Cq >= 1, "SAB needs channels to be a multiple of 8"
    assert C + Cq <= _SEG, "packed projection layout needs C + C//8 <= 128"
    assert HW % 8 == 0

    x_flat = jnp.transpose(x_nchw, (0, 2, 3, 1)).reshape(B, HW, C)

    wqkv = params["wqkv"]          # (C, 2*SEG)  bf16
    bqkv = params["bqkv"]          # (1, 2*SEG)  f32
    w9 = params["w9_folded"]       # (9*C, C)    bf16
    b9 = params["b9_folded"]       # (1, C)      f32

    pad = _round_up(W + 1, 8)
    kernel = functools.partial(_sab_kernel, width=W, pad=pad)

    cost = pl.CostEstimate(
        flops=B * (2 * HW * C * 2 * _SEG        # packed qkv projection
                   + 2 * HW * HW * _SEG         # scores
                   + 2 * HW * HW * _SEG         # p @ v
                   + 2 * HW * 9 * C * C),       # fused 3x3 conv
        transcendentals=B * HW * HW,            # softmax exp
        bytes_accessed=(4 * 2 * B * HW * C      # x in + out
                        + 2 * (C * 2 * _SEG + 9 * C * C)   # bf16 weights
                        + 4 * (2 * _SEG + C)))             # f32 biases

    out_flat = pl.pallas_call(
        kernel,
        out_shape=jax.ShapeDtypeStruct((B, HW, C), jnp.float32),
        grid=(B,),
        in_specs=[
            pl.BlockSpec((1, HW, C), lambda b: (b, 0, 0)),     # x (per batch)
            pl.BlockSpec((C, 2 * _SEG), lambda b: (0, 0)),     # packed qkv W
            pl.BlockSpec((1, 2 * _SEG), lambda b: (0, 0)),     # packed qkv b
            pl.BlockSpec((9 * C, C), lambda b: (0, 0)),        # folded conv W
            pl.BlockSpec((1, C), lambda b: (0, 0)),            # folded conv b
        ],
        out_specs=pl.BlockSpec((1, HW, C), lambda b: (b, 0, 0)),
        compiler_params=pltpu.CompilerParams(
            dimension_semantics=("parallel",),
            vmem_limit_bytes=32 * 1024 * 1024),    # safe on v7x (64 MiB phys)
        cost_estimate=cost,
    )(x_flat, wqkv, bqkv, w9, b9)

    return jnp.transpose(out_flat.reshape(B, H, W, C), (0, 3, 1, 2))


# --------------------------- pure-JAX reference ------------------------------


def sab_reference(x_nchw, params):
    B, C, H, W = x_nchw.shape
    HW = H * W
    Cq = C // 8
    x_nhwc = jnp.transpose(x_nchw, (0, 2, 3, 1))
    x_flat = x_nhwc.reshape(B, HW, C)

    q = x_flat @ params["wq"] + params["bq"]
    k = x_flat @ params["wk"] + params["bk"]
    v = x_flat @ params["wv"] + params["bv"]
    scores = (float(Cq) ** -0.5) * jnp.einsum("bic,bjc->bij", q, k)
    attn = jax.nn.softmax(scores, axis=-1)
    out = jnp.einsum("bij,bjc->bic", attn, v).reshape(B, H, W, C)

    y = lax.conv_general_dilated(
        out, params["w3_hwio"], window_strides=(1, 1), padding="SAME",
        dimension_numbers=("NHWC", "HWIO", "NHWC"))
    y = y + params["b3"]
    y = y * params["bn_scale"] + params["bn_shift"]
    y = jnp.maximum(y, 0.0)
    y = y + x_nhwc                       # residual with the original input
    return jnp.transpose(y, (0, 3, 1, 2))


# ---------------------------------- params -----------------------------------


def _pad_cols(a, n):
    return jnp.pad(a, ((0, 0), (0, n - a.shape[1])))


def make_params(key, C):
    Cq = C // 8
    assert C + Cq <= _SEG
    ks = jax.random.split(key, 10)
    p = {}
    p["wq"] = 0.1 * jax.random.normal(ks[0], (C, Cq), jnp.float32)
    p["bq"] = 0.1 * jax.random.normal(ks[1], (1, Cq), jnp.float32)
    p["wk"] = 0.1 * jax.random.normal(ks[2], (C, Cq), jnp.float32)
    p["bk"] = 0.1 * jax.random.normal(ks[3], (1, Cq), jnp.float32)
    p["wv"] = 0.1 * jax.random.normal(ks[4], (C, C), jnp.float32)
    p["bv"] = 0.1 * jax.random.normal(ks[5], (1, C), jnp.float32)
    w3 = 0.1 * jax.random.normal(ks[6], (3, 3, C, C), jnp.float32)   # HWIO
    p["w3_hwio"] = w3
    p["b3"] = 0.1 * jax.random.normal(ks[7], (1, C), jnp.float32)

    # BatchNorm (eval mode, synthetic running stats).
    gamma = 1.0 + 0.1 * jax.random.normal(ks[8], (C,), jnp.float32)
    beta = 0.1 * jax.random.normal(ks[9], (C,), jnp.float32)
    run_mean = jnp.zeros((C,), jnp.float32)
    run_var = jnp.ones((C,), jnp.float32)
    eps = 1e-5
    bn_scale = gamma / jnp.sqrt(run_var + eps)
    bn_shift = beta - run_mean * bn_scale
    p["bn_scale"] = bn_scale.reshape(1, C)
    p["bn_shift"] = bn_shift.reshape(1, C)

    # ---- host-side folding / packing for the fused kernel --------------------
    # Segment A = [v | q*scale | 0], segment B = [0 | k | 0]: q and k share the
    # same intra-segment lane offset, so scores = segA . segB^T contracts the
    # full 128 lanes with no masking (padded columns are exactly zero).
    scale = float(Cq) ** -0.5
    seg_a_w = _pad_cols(jnp.concatenate([p["wv"], p["wq"] * scale], axis=1), _SEG)
    seg_b_w = _pad_cols(
        jnp.concatenate([jnp.zeros((C, C), jnp.float32), p["wk"]], axis=1), _SEG)
    p["wqkv"] = jnp.concatenate([seg_a_w, seg_b_w], axis=1).astype(jnp.bfloat16)

    seg_a_b = _pad_cols(jnp.concatenate([p["bv"], p["bq"] * scale], axis=1), _SEG)
    seg_b_b = _pad_cols(
        jnp.concatenate([jnp.zeros((1, C), jnp.float32), p["bk"]], axis=1), _SEG)
    p["bqkv"] = jnp.concatenate([seg_a_b, seg_b_b], axis=1)            # f32

    # Fold BN scale into the conv weight, BN shift + conv bias into one row.
    # Row order (dy, dx, c_in) matches the lane-stacked patches in the kernel.
    p["w9_folded"] = (w3 * p["bn_scale"].reshape(1, 1, 1, C)
                      ).reshape(9 * C, C).astype(jnp.bfloat16)
    p["b9_folded"] = p["b3"] * p["bn_scale"] + p["bn_shift"]
    return p


# ---------------------------------- main -------------------------------------


if __name__ == "__main__":
    B, C, H, W = 2, 32, 16, 16   # channels must be a multiple of 8 (Cq = C//8)
    key = jax.random.PRNGKey(0)
    kx, kp = jax.random.split(key)
    x = jax.random.normal(kx, (B, C, H, W), jnp.float32)
    params = make_params(kp, C)

    out = jax.block_until_ready(sab_forward(x, params))
    ref = jax.block_until_ready(sab_reference(x, params))

    assert out.shape == (B, C, H, W)
    # Tolerance covers bf16 MXU operands (weights + activations), the approx
    # (EUP) reciprocal in the softmax normalisation and the fused conv
    # accumulation order, measured against the f32 reference.
    np.testing.assert_allclose(np.asarray(out), np.asarray(ref),
                               rtol=2e-2, atol=2e-2)
    print("KERNEL_OK")
</pallas_src>

<mosaic_0001>
module attributes {stable_mosaic.version = 11 : i64} {
  func.func @_sab_kernel(%arg0: i32, %arg1: memref<1x256x32xf32, #tpu.memory_space<vmem>>, %arg2: memref<32x256xbf16, #tpu.memory_space<vmem>>, %arg3: memref<1x256xf32, #tpu.memory_space<vmem>>, %arg4: memref<288x32xbf16, #tpu.memory_space<vmem>>, %arg5: memref<1x32xf32, #tpu.memory_space<vmem>>, %arg6: memref<1x256x32xf32, #tpu.memory_space<vmem>>) attributes {dimension_semantics = [#tpu.dimension_semantics<parallel>], iteration_bounds = array<i64: 2>, scalar_prefetch = 0 : i64, scratch_operands = 0 : i64, tpu.core_type = #tpu.core_type<tc>, window_params = [{transform_indices = @transform_0, window_bounds = array<i64: 1, 256, 32>}, {pipeline_mode = #tpu.pipeline_mode<synchronous>, transform_indices = @transform_1, window_bounds = array<i64: 32, 256>}, {pipeline_mode = #tpu.pipeline_mode<synchronous>, transform_indices = @transform_2, window_bounds = array<i64: 1, 256>}, {pipeline_mode = #tpu.pipeline_mode<synchronous>, transform_indices = @transform_3, window_bounds = array<i64: 288, 32>}, {pipeline_mode = #tpu.pipeline_mode<synchronous>, transform_indices = @transform_4, window_bounds = array<i64: 1, 32>}, {transform_indices = @transform_5, window_bounds = array<i64: 1, 256, 32>}]} {
    %c0 = arith.constant 0 : index
    %c0_0 = arith.constant 0 : index
    %c0_1 = arith.constant 0 : index
    %0 = vector.load %arg1[%c0, %c0_0, %c0_1] : memref<1x256x32xf32, #tpu.memory_space<vmem>>, vector<1x256x32xf32>
    %1 = vector.shape_cast %0 : vector<1x256x32xf32> to vector<256x32xf32>
    %2 = arith.truncf %1 : vector<256x32xf32> to vector<256x32xbf16>
    %c0_2 = arith.constant 0 : index
    %c0_3 = arith.constant 0 : index
    %3 = vector.load %arg2[%c0_2, %c0_3] : memref<32x256xbf16, #tpu.memory_space<vmem>>, vector<32x256xbf16>
    %cst = arith.constant dense<0.000000e+00> : vector<256x256xf32>
    %4 = tpu.matmul %2, %3, %cst {dimension_numbers = #tpu.dot_dimension_numbers<[1], [0], [0], [1], [0, 0, 1, 1], [], []>} : vector<256x32xbf16>, vector<32x256xbf16>, vector<256x256xf32> -> vector<256x256xf32>
    %c0_4 = arith.constant 0 : index
    %c0_5 = arith.constant 0 : index
    %5 = vector.load %arg3[%c0_4, %c0_5] : memref<1x256xf32, #tpu.memory_space<vmem>>, vector<1x256xf32>
    %6 = vector.broadcast %5 : vector<1x256xf32> to vector<256x256xf32>
    %7 = arith.addf %4, %6 : vector<256x256xf32>
    %8 = arith.truncf %7 : vector<256x256xf32> to vector<256x256xbf16>
    %9 = vector.extract_strided_slice %8 {offsets = [0, 0], sizes = [256, 128], strides = [1, 1]} : vector<256x256xbf16> to vector<256x128xbf16>
    %10 = vector.extract_strided_slice %8 {offsets = [0, 128], sizes = [256, 128], strides = [1, 1]} : vector<256x256xbf16> to vector<256x128xbf16>
    %cst_6 = arith.constant dense<0.000000e+00> : vector<256x256xf32>
    %11 = tpu.matmul %9, %10, %cst_6 {dimension_numbers = #tpu.dot_dimension_numbers<[1], [1], [0], [0], [0, 0, 1, 0], [], []>} : vector<256x128xbf16>, vector<256x128xbf16>, vector<256x256xf32> -> vector<256x256xf32>
    %cst_7 = arith.constant dense<0xFF800000> : vector<256xf32>
    %12 = vector.multi_reduction <maximumf>, %11, %cst_7 [1] : vector<256x256xf32> to vector<256xf32>
    %13 = vector.shape_cast %12 : vector<256xf32> to vector<256x1xf32>
    %14 = vector.broadcast %13 : vector<256x1xf32> to vector<256x256xf32>
    %15 = arith.subf %11, %14 : vector<256x256xf32>
    %16 = math.exp %15 : vector<256x256xf32>
    %cst_8 = arith.constant dense<0.000000e+00> : vector<256xf32>
    %17 = vector.multi_reduction <add>, %16, %cst_8 [1] : vector<256x256xf32> to vector<256xf32>
    %18 = vector.shape_cast %17 : vector<256xf32> to vector<256x1xf32>
    %19 = arith.truncf %16 : vector<256x256xf32> to vector<256x256xbf16>
    %cst_9 = arith.constant dense<0.000000e+00> : vector<256x128xf32>
    %20 = tpu.matmul %19, %9, %cst_9 {dimension_numbers = #tpu.dot_dimension_numbers<[1], [0], [0], [1], [0, 0, 1, 1], [], []>} : vector<256x256xbf16>, vector<256x128xbf16>, vector<256x128xf32> -> vector<256x128xf32>
    %21 = vector.extract_strided_slice %20 {offsets = [0, 0], sizes = [256, 32], strides = [1, 1]} : vector<256x128xf32> to vector<256x32xf32>
    %22 = tpu.reciprocal %18 {approx = true} : vector<256x1xf32> -> vector<256x1xf32>
    %23 = vector.broadcast %22 : vector<256x1xf32> to vector<256x32xf32>
    %24 = arith.mulf %21, %23 : vector<256x32xf32>
    %cst_10 = arith.constant 0.000000e+00 : f32
    %25 = vector.broadcast %cst_10 : f32 to vector<24x32xf32>
    %26 = tpu.concatenate %25, %24, %25 in 0 : vector<24x32xf32>, vector<256x32xf32>, vector<24x32xf32> -> vector<304x32xf32>
    %27 = tpu.iota {dimensions = array<i32: 0>} : vector<256x1xi32>
    %c16_i32 = arith.constant 16 : i32
    %c0_i32 = arith.constant 0 : i32
    %28 = arith.cmpi eq, %c16_i32, %c0_i32 : i32
    %c1_i32 = arith.constant 1 : i32
    %29 = arith.select %28, %c1_i32, %c16_i32 : i32
    %30 = vector.broadcast %29 : i32 to vector<256x1xi32>
    %31 = arith.remsi %27, %30 : vector<256x1xi32>
    %c0_i32_11 = arith.constant 0 : i32
    %32 = vector.broadcast %c0_i32_11 : i32 to vector<256x1xi32>
    %33 = arith.cmpi ne, %31, %32 : vector<256x1xi32>
    %c0_i32_12 = arith.constant 0 : i32
    %34 = vector.broadcast %c0_i32_12 : i32 to vector<256x1xi32>
    %35 = arith.cmpi slt, %31, %34 : vector<256x1xi32>
    %c0_i32_13 = arith.constant 0 : i32
    %36 = arith.cmpi slt, %29, %c0_i32_13 : i32
    %37 = vector.broadcast %36 : i1 to vector<256x1xi1>
    %38 = vector.broadcast %37 : vector<256x1xi1> to vector<256x1xi1>
    %39 = arith.xori %35, %38 : vector<256x1xi1>
    %40 = arith.andi %39, %33 : vector<256x1xi1>
    %41 = vector.broadcast %29 : i32 to vector<256x1xi32>
    %42 = arith.addi %31, %41 : vector<256x1xi32>
    %43 = arith.select %40, %42, %31 : vector<256x1xi1>, vector<256x1xi32>
    %c1_i32_14 = arith.constant 1 : i32
    %44 = vector.broadcast %c1_i32_14 : i32 to vector<256x1xi32>
    %45 = arith.cmpi sge, %43, %44 : vector<256x1xi32>
    %46 = arith.extui %45 : vector<256x1xi1> to vector<256x1xi32>
    %47 = arith.sitofp %46 : vector<256x1xi32> to vector<256x1xf32>
    %c14_i32 = arith.constant 14 : i32
    %48 = vector.broadcast %c14_i32 : i32 to vector<256x1xi32>
    %49 = arith.cmpi sle, %43, %48 : vector<256x1xi32>
    %50 = arith.extui %49 : vector<256x1xi1> to vector<256x1xi32>
    %51 = arith.sitofp %50 : vector<256x1xi32> to vector<256x1xf32>
    %52 = vector.extract_strided_slice %26 {offsets = [7, 0], sizes = [256, 32], strides = [1, 1]} : vector<304x32xf32> to vector<256x32xf32>
    %53 = vector.broadcast %47 : vector<256x1xf32> to vector<256x32xf32>
    %54 = arith.mulf %52, %53 : vector<256x32xf32>
    %55 = vector.extract_strided_slice %26 {offsets = [8, 0], sizes = [256, 32], strides = [1, 1]} : vector<304x32xf32> to vector<256x32xf32>
    %56 = vector.extract_strided_slice %26 {offsets = [9, 0], sizes = [256, 32], strides = [1, 1]} : vector<304x32xf32> to vector<256x32xf32>
    %57 = vector.broadcast %51 : vector<256x1xf32> to vector<256x32xf32>
    %58 = arith.mulf %56, %57 : vector<256x32xf32>
    %59 = vector.extract_strided_slice %26 {offsets = [23, 0], sizes = [256, 32], strides = [1, 1]} : vector<304x32xf32> to vector<256x32xf32>
    %60 = vector.broadcast %47 : vector<256x1xf32> to vector<256x32xf32>
    %61 = arith.mulf %59, %60 : vector<256x32xf32>
    %62 = vector.extract_strided_slice %26 {offsets = [24, 0], sizes = [256, 32], strides = [1, 1]} : vector<304x32xf32> to vector<256x32xf32>
    %63 = vector.extract_strided_slice %26 {offsets = [25, 0], sizes = [256, 32], strides = [1, 1]} : vector<304x32xf32> to vector<256x32xf32>
    %64 = vector.broadcast %51 : vector<256x1xf32> to vector<256x32xf32>
    %65 = arith.mulf %63, %64 : vector<256x32xf32>
    %66 = vector.extract_strided_slice %26 {offsets = [39, 0], sizes = [256, 32], strides = [1, 1]} : vector<304x32xf32> to vector<256x32xf32>
    %67 = vector.broadcast %47 : vector<256x1xf32> to vector<256x32xf32>
    %68 = arith.mulf %66, %67 : vector<256x32xf32>
    %69 = vector.extract_strided_slice %26 {offsets = [40, 0], sizes = [256, 32], strides = [1, 1]} : vector<304x32xf32> to vector<256x32xf32>
    %70 = vector.extract_strided_slice %26 {offsets = [41, 0], sizes = [256, 32], strides = [1, 1]} : vector<304x32xf32> to vector<256x32xf32>
    %71 = vector.broadcast %51 : vector<256x1xf32> to vector<256x32xf32>
    %72 = arith.mulf %70, %71 : vector<256x32xf32>
    %73 = tpu.concatenate %54, %55, %58, %61, %62, %65, %68, %69, %72 in 1 : vector<256x32xf32>, vector<256x32xf32>, vector<256x32xf32>, vector<256x32xf32>, vector<256x32xf32>, vector<256x32xf32>, vector<256x32xf32>, vector<256x32xf32>, vector<256x32xf32> -> vector<256x288xf32>
    %74 = arith.truncf %73 : vector<256x288xf32> to vector<256x288xbf16>
    %c0_15 = arith.constant 0 : index
    %c0_16 = arith.constant 0 : index
    %75 = vector.load %arg4[%c0_15, %c0_16] : memref<288x32xbf16, #tpu.memory_space<vmem>>, vector<288x32xbf16>
    %cst_17 = arith.constant dense<0.000000e+00> : vector<256x32xf32>
    %76 = tpu.matmul %74, %75, %cst_17 {dimension_numbers = #tpu.dot_dimension_numbers<[1], [0], [0], [1], [0, 0, 1, 1], [], []>} : vector<256x288xbf16>, vector<288x32xbf16>, vector<256x32xf32> -> vector<256x32xf32>
    %c0_18 = arith.constant 0 : index
    %c0_19 = arith.constant 0 : index
    %77 = vector.load %arg5[%c0_18, %c0_19] : memref<1x32xf32, #tpu.memory_space<vmem>>, vector<1x32xf32>
    %78 = vector.broadcast %77 : vector<1x32xf32> to vector<256x32xf32>
    %79 = arith.addf %76, %78 : vector<256x32xf32>
    %cst_20 = arith.constant 0.000000e+00 : f32
    %80 = vector.broadcast %cst_20 : f32 to vector<256x32xf32>
    %81 = arith.maximumf %79, %80 : vector<256x32xf32>
    %c0_21 = arith.constant 0 : index
    %c0_22 = arith.constant 0 : index
    %c0_23 = arith.constant 0 : index
    %82 = vector.load %arg1[%c0_21, %c0_22, %c0_23] : memref<1x256x32xf32, #tpu.memory_space<vmem>>, vector<1x256x32xf32>
    %83 = vector.shape_cast %82 : vector<1x256x32xf32> to vector<256x32xf32>
    %84 = arith.addf %81, %83 : vector<256x32xf32>
    %c0_24 = arith.constant 0 : index
    %c0_25 = arith.constant 0 : index
    %c0_26 = arith.constant 0 : index
    %85 = vector.load %arg6[%c0_24, %c0_25, %c0_26] : memref<1x256x32xf32, #tpu.memory_space<vmem>>, vector<1x256x32xf32>
    %86 = vector.shape_cast %85 : vector<1x256x32xf32> to vector<256x32xf32>
    %87 = vector.shape_cast %84 : vector<256x32xf32> to vector<1x256x32xf32>
    tpu.vector_store %arg6[%c0_24, %c0_25, %c0_26], %87 {strides = array<i32>} : memref<1x256x32xf32, #tpu.memory_space<vmem>>, vector<1x256x32xf32>,
    return
  }
  func.func @transform_0(%arg0: i32) -> (i32, i32, i32) {
    %c0_i32 = arith.constant 0 : i32
    %c0_i32_0 = arith.constant 0 : i32
    %c0_i32_1 = arith.constant 0 : i32
    return %arg0, %c0_i32, %c0_i32_0 : i32, i32, i32
  }
  func.func @transform_1(%arg0: i32) -> (i32, i32) {
    %c0_i32 = arith.constant 0 : i32
    %c0_i32_0 = arith.constant 0 : i32
    %c0_i32_1 = arith.constant 0 : i32
    return %c0_i32, %c0_i32_0 : i32, i32
  }
  func.func @transform_2(%arg0: i32) -> (i32, i32) {
    %c0_i32 = arith.constant 0 : i32
    %c0_i32_0 = arith.constant 0 : i32
    %c0_i32_1 = arith.constant 0 : i32
    return %c0_i32, %c0_i32_0 : i32, i32
  }
  func.func @transform_3(%arg0: i32) -> (i32, i32) {
    %c0_i32 = arith.constant 0 : i32
    %c0_i32_0 = arith.constant 0 : i32
    %c0_i32_1 = arith.constant 0 : i32
    return %c0_i32, %c0_i32_0 : i32, i32
  }
  func.func @transform_4(%arg0: i32) -> (i32, i32) {
    %c0_i32 = arith.constant 0 : i32
    %c0_i32_0 = arith.constant 0 : i32
    %c0_i32_1 = arith.constant 0 : i32
    return %c0_i32, %c0_i32_0 : i32, i32
  }
  func.func @transform_5(%arg0: i32) -> (i32, i32, i32) {
    %c0_i32 = arith.constant 0 : i32
    %c0_i32_0 = arith.constant 0 : i32
    %c0_i32_1 = arith.constant 0 : i32
    return %arg0, %c0_i32, %c0_i32_0 : i32, i32, i32
  }
}

</mosaic_0001>

<llo_original>
// kernel: tpu_custom_call.1
$region0: #{tpu_custom_call.1}
  #allocation0 [shape = 'u32[]', space=smem, size = 0x4, offset = 0x4, fixed_abs, tag = 'smem constant byte address 0x4 - core index']
  #allocation1 [shape = 'u32[144,128]{1,0:T(1,128)}', space=vmem, size = 0x12000, scoped, tag = 'internal scratch']
  %s0 = inlined_call_operand.vmem [shape: f32[2,256,32], index: 0, kind: input, shape index: {}]
  %s1 = inlined_call_operand.vmem [shape: bf16[32,256], index: 1, kind: input, shape index: {}]
  %s2 = inlined_call_operand.vmem [shape: f32[1,256], index: 2, kind: input, shape index: {}]
  %s3 = inlined_call_operand.vmem [shape: bf16[288,32], index: 3, kind: input, shape index: {}]
  %s4 = inlined_call_operand.vmem [shape: f32[1,32], index: 4, kind: input, shape index: {}]
  %s5 = inlined_call_operand.vmem [shape: f32[2,256,32], index: 5, kind: output, shape index: {}]
  %s6 = sld [smem:[#allocation0]]
  $region53: #{tpu_custom_call.1} parent=0
    _
  %s8 = ssub.s32 1, %s6
  %s9 = scalar_select 0, %s8, %s6
  loop: start=0, step=1, limit=4
  $region2: #{tpu_custom_call.1} parent=0 // loop_pre_header
    _
  $region3: #{tpu_custom_call.1} parent=0 // loop_header
    %s11 = sphi 0, %s15
    %p12 = scmp.ge.s32.totalorder %s11, 4
    %s21 = sphi 0, %s23
    %s24 = sphi 0, %s21
    %s25 = sphi 0, %s24
    %s41 = sphi 0, %s25
    %s45 = sphi 0, %s45
    %s47 = sphi 0, %s45
    %s48 = sphi 0, %s47
    %s62 = sphi 0, %s48
    %s66 = sphi 0, %s66
    %s68 = sphi 0, %s66
    %s69 = sphi 0, %s68
    %s83 = sphi 0, %s69
    %s87 = sphi 0, %s87
    %s89 = sphi 0, %s87
    %s90 = sphi 0, %s89
    %s104 = sphi 0, %s90
    %s108 = sphi 0, %s108
    %s110 = sphi 0, %s108
    %s111 = sphi 0, %s110
    %s125 = sphi 0, %s111
    %s131 = sphi 0, %s133
    %s134 = sphi 0, %s131
    %s135 = sphi 0, %s134
    %s151 = sphi 0, %s135
  $region4: #{tpu_custom_call.1} parent=0 // loop_header_branch
    %14 = sbr.rel (%p12) target = $region8
  $region5: #{tpu_custom_call.1} parent=0 // loop_body
    %s16 = ssub.s32 %s11, 1
    %s17 = ssub.s32 %s11, 2
    %s18 = sadd.s32 %s11, 1
    %s19 = ssub.s32 %s11, %s18
    %p20 = scmp.eq.s32.totalorder %s19, 0
    %s22 = sadd.s32 %s21, 1
    %s23 = scalar_select %p20, %s21, %s22
    %p26 = pneg %p20
    %p27 = scmp.eq.s32.totalorder %s11, 1
    %p28 = por %p26, %p27
    %p29 = scmp.ne.s32.totalorder %s21, %s24
    %p30 = scmp.eq.s32.totalorder %s11, 0
    %p31 = por %p29, %p30
    %p32 = scmp.ne.s32.totalorder %s21, %s24
    %p33 = scmp.eq.s32.totalorder %s16, 1
    %p34 = por %p32, %p33
    %p35 = scmp.ne.s32.totalorder %s24, %s25
    %p36 = scmp.eq.s32.totalorder %s16, 0
    %p37 = por %p35, %p36
    %p38 = scmp.ne.s32.totalorder %s24, %s25
    %p39 = scmp.eq.s32.totalorder %s17, 1
    %p40 = por %p38, %p39
    %p42 = scmp.ne.s32.totalorder %s25, %s41
    %p43 = scmp.eq.s32.totalorder %s17, 0
    %p44 = por %p42, %p43
    %s46 = sadd.s32 %s45, 1
    %p49 = scmp.eq.s32.totalorder %s11, 1
    %p50 = scmp.ne.s32.totalorder %s45, %s47
    %p51 = scmp.eq.s32.totalorder %s11, 0
    %p52 = por %p50, %p51
    %p53 = scmp.ne.s32.totalorder %s45, %s47
    %p54 = scmp.eq.s32.totalorder %s16, 1
    %p55 = por %p53, %p54
    %p56 = scmp.ne.s32.totalorder %s47, %s48
    %p57 = scmp.eq.s32.totalorder %s16, 0
    %p58 = por %p56, %p57
    %p59 = scmp.ne.s32.totalorder %s47, %s48
    %p60 = scmp.eq.s32.totalorder %s17, 1
    %p61 = por %p59, %p60
    %p63 = scmp.ne.s32.totalorder %s48, %s62
    %p64 = scmp.eq.s32.totalorder %s17, 0
    %p65 = por %p63, %p64
    %s67 = sadd.s32 %s66, 1
    %p70 = scmp.eq.s32.totalorder %s11, 1
    %p71 = scmp.ne.s32.totalorder %s66, %s68
    %p72 = scmp.eq.s32.totalorder %s11, 0
    %p73 = por %p71, %p72
    %p74 = scmp.ne.s32.totalorder %s66, %s68
    %p75 = scmp.eq.s32.totalorder %s16, 1
    %p76 = por %p74, %p75
    %p77 = scmp.ne.s32.totalorder %s68, %s69
    %p78 = scmp.eq.s32.totalorder %s16, 0
    %p79 = por %p77, %p78
    %p80 = scmp.ne.s32.totalorder %s68, %s69
    %p81 = scmp.eq.s32.totalorder %s17, 1
    %p82 = por %p80, %p81
    %p84 = scmp.ne.s32.totalorder %s69, %s83
    %p85 = scmp.eq.s32.totalorder %s17, 0
    %p86 = por %p84, %p85
    %s88 = sadd.s32 %s87, 1
    %p91 = scmp.eq.s32.totalorder %s11, 1
    %p92 = scmp.ne.s32.totalorder %s87, %s89
    %p93 = scmp.eq.s32.totalorder %s11, 0
    %p94 = por %p92, %p93
    %p95 = scmp.ne.s32.totalorder %s87, %s89
    %p96 = scmp.eq.s32.totalorder %s16, 1
    %p97 = por %p95, %p96
    %p98 = scmp.ne.s32.totalorder %s89, %s90
    %p99 = scmp.eq.s32.totalorder %s16, 0
    %p100 = por %p98, %p99
    %p101 = scmp.ne.s32.totalorder %s89, %s90
    %p102 = scmp.eq.s32.totalorder %s17, 1
    %p103 = por %p101, %p102
    %p105 = scmp.ne.s32.totalorder %s90, %s104
    %p106 = scmp.eq.s32.totalorder %s17, 0
    %p107 = por %p105, %p106
    %s109 = sadd.s32 %s108, 1
    %p112 = scmp.eq.s32.totalorder %s11, 1
    %p113 = scmp.ne.s32.totalorder %s108, %s110
    %p114 = scmp.eq.s32.totalorder %s11, 0
    %p115 = por %p113, %p114
    %p116 = scmp.ne.s32.totalorder %s108, %s110
    %p117 = scmp.eq.s32.totalorder %s16, 1
    %p118 = por %p116, %p117
    %p119 = scmp.ne.s32.totalorder %s110, %s111
    %p120 = scmp.eq.s32.totalorder %s16, 0
    %p121 = por %p119, %p120
    %p122 = scmp.ne.s32.totalorder %s110, %s111
    %p123 = scmp.eq.s32.totalorder %s17, 1
    %p124 = por %p122, %p123
    %p126 = scmp.ne.s32.totalorder %s111, %s125
    %p127 = scmp.eq.s32.totalorder %s17, 0
    %p128 = por %p126, %p127
    %s129 = ssub.s32 %s11, %s18
    %p130 = scmp.eq.s32.totalorder %s129, 0
    %s132 = sadd.s32 %s131, 1
    %s133 = scalar_select %p130, %s131, %s132
    %p136 = pneg %p130
    %p137 = scmp.eq.s32.totalorder %s11, 1
    %p138 = por %p136, %p137
    %p139 = scmp.ne.s32.totalorder %s131, %s134
    %p140 = scmp.eq.s32.totalorder %s11, 0
    %p141 = por %p139, %p140
    %p142 = scmp.ne.s32.totalorder %s131, %s134
    %p143 = scmp.eq.s32.totalorder %s16, 1
    %p144 = por %p142, %p143
    %p145 = scmp.ne.s32.totalorder %s134, %s135
    %p146 = scmp.eq.s32.totalorder %s16, 0
    %p147 = por %p145, %p146
    %p148 = scmp.ne.s32.totalorder %s134, %s135
    %p149 = scmp.eq.s32.totalorder %s17, 1
    %p150 = por %p148, %p149
    %p152 = scmp.ne.s32.totalorder %s135, %s151
    %p153 = scmp.eq.s32.totalorder %s17, 0
    %p154 = por %p152, %p153
    %p155 = scmp.le.s32.totalorder 1, %s11
    %p156 = scmp.lt.s32.totalorder %s11, 3
    %p157 = pnand %p155, %p156
    %p158 = pneg %p157
    // Predicated region
    $region9: #{tpu_custom_call.1} parent=5 // pred_check
      _
    $region10: #{tpu_custom_call.1} parent=5 // pred_check_branch
      %160 = sbr.rel (%p157) target = $region12
    $region11: #{tpu_custom_call.1} parent=5 // pred_region
      %s161 = ssub.s32 %s11, 1
      // Predicated region
      $region13: #{tpu_custom_call.1} parent=11 // pred_check
        %p162 = pneg %p58
      $region14: #{tpu_custom_call.1} parent=11 // pred_check_branch
        %164 = sbr.rel (%p162) target = $region16
      $region15: #{tpu_custom_call.1} parent=11 // pred_region
        _
      $region16: #{tpu_custom_call.1} parent=11 // pred_fallthru
        _
      // Predicated region
      $region17: #{tpu_custom_call.1} parent=11 // pred_check
        %p165 = pneg %p79
      $region18: #{tpu_custom_call.1} parent=11 // pred_check_branch
        %167 = sbr.rel (%p165) target = $region20
      $region19: #{tpu_custom_call.1} parent=11 // pred_region
        _
      $region20: #{tpu_custom_call.1} parent=11 // pred_fallthru
        _
      // Predicated region
      $region21: #{tpu_custom_call.1} parent=11 // pred_check
        %p168 = pneg %p100
      $region22: #{tpu_custom_call.1} parent=11 // pred_check_branch
        %170 = sbr.rel (%p168) target = $region24
      $region23: #{tpu_custom_call.1} parent=11 // pred_region
        _
      $region24: #{tpu_custom_call.1} parent=11 // pred_fallthru
        _
      // Predicated region
      $region25: #{tpu_custom_call.1} parent=11 // pred_check
        %p171 = pneg %p121
      $region26: #{tpu_custom_call.1} parent=11 // pred_check_branch
        %173 = sbr.rel (%p171) target = $region28
      $region27: #{tpu_custom_call.1} parent=11 // pred_region
        _
      $region28: #{tpu_custom_call.1} parent=11 // pred_fallthru
        _
    $region12: #{tpu_custom_call.1} parent=5 // pred_fallthru
      _
    %p174 = scmp.lt.s32.totalorder %s11, 2
    // Predicated region
    $region29: #{tpu_custom_call.1} parent=5 // pred_check
      %p175 = pneg %p174
    $region30: #{tpu_custom_call.1} parent=5 // pred_check_branch
      %177 = sbr.rel (%p175) target = $region32
    $region31: #{tpu_custom_call.1} parent=5 // pred_region
      // Predicated region
      $region33: #{tpu_custom_call.1} parent=31 // pred_check
        %p178 = pneg %p31
      $region34: #{tpu_custom_call.1} parent=31 // pred_check_branch
        %180 = sbr.rel (%p178) target = $region36
      $region35: #{tpu_custom_call.1} parent=31 // pred_region
        %p181 = scmp.lt.s32.totalorder %s11, 1
        %s182 = scalar_select %p181, %s11, 1
        %s183 = smul.addr %s182, 32
        %s184 = smul.addr %s183, 8
        %s185 = scalar_lea.vmem %s0, %s184
      $region36: #{tpu_custom_call.1} parent=31 // pred_fallthru
        _
    $region32: #{tpu_custom_call.1} parent=5 // pred_fallthru
      _
    %p186 = scmp.le.s32.totalorder 1, %s11
    %p187 = scmp.lt.s32.totalorder %s11, 3
    %p188 = pnand %p186, %p187
    %p189 = pneg %p188
    // Predicated region
    $region37: #{tpu_custom_call.1} parent=5 // pred_check
      _
    $region38: #{tpu_custom_call.1} parent=5 // pred_check_branch
      %191 = sbr.rel (%p188) target = $region40
    $region39: #{tpu_custom_call.1} parent=5 // pred_region
      %s192 = ssub.s32 %s11, 1
      %p193 = scmp.lt.s32.totalorder %s16, 1
      %s194 = scalar_select %p193, %s16, 1
      %s195 = smul.addr %s194, 32
      %s196 = smul.addr %s195, 8
      %s197 = scalar_lea.vmem %s0, %s196
      %p198 = pneg %p37
      %p199 = pneg %p34
      %p200 = pneg %p58
      %p201 = pneg %p55
      %p202 = pneg %p79
      %p203 = pneg %p76
      %p204 = pneg %p100
      %p205 = pneg %p97
      %p206 = pneg %p121
      %p207 = pneg %p118
      %p208 = pneg %p147
      %p209 = pneg %p144
      %p210 = scmp.lt.s32.totalorder %s16, 1
      %s211 = scalar_select %p210, %s16, 1
      %s212 = smul.addr %s211, 32
      %s213 = smul.addr %s212, 8
      %s214 = scalar_lea.vmem %s5, %s213
      %p215 = scmp.lt.s32.totalorder %s16, 1
      %s216 = scalar_select %p215, %s16, 1
      %s217 = smul.addr %s216, 32
      %s218 = smul.addr %s217, 8
      %s219 = scalar_lea.vmem %s0, %s218
      %p220 = scmp.lt.s32.totalorder %s16, 1
      %s221 = scalar_select %p220, %s16, 1
      %s222 = smul.addr %s221, 32
      %s223 = smul.addr %s222, 8
      %s224 = scalar_lea.vmem %s5, %s223
      %v226 = vld [vmem:[%s219] sm:$0xff]
      %v227 = vld [vmem:[%s219 + $0x8] sm:$0xff]
      %v228 = vld [vmem:[%s219 + $0x10] sm:$0xff]
      %v229 = vld [vmem:[%s219 + $0x18] sm:$0xff]
      %v230 = vld [vmem:[%s219 + $0x20] sm:$0xff]
      %v231 = vld [vmem:[%s219 + $0x28] sm:$0xff]
      %v232 = vld [vmem:[%s219 + $0x30] sm:$0xff]
      %v233 = vld [vmem:[%s219 + $0x38] sm:$0xff]
      %v234 = vld [vmem:[%s219 + $0x40] sm:$0xff]
      %v235 = vld [vmem:[%s219 + $0x48] sm:$0xff]
      %v236 = vld [vmem:[%s219 + $0x50] sm:$0xff]
      %v237 = vld [vmem:[%s219 + $0x58] sm:$0xff]
      %v238 = vld [vmem:[%s219 + $0x60] sm:$0xff]
      %v239 = vld [vmem:[%s219 + $0x68] sm:$0xff]
      %v240 = vld [vmem:[%s219 + $0x70] sm:$0xff]
      %v241 = vld [vmem:[%s219 + $0x78] sm:$0xff]
      %v242 = vld [vmem:[%s219 + $0x80] sm:$0xff]
      %v243 = vld [vmem:[%s219 + $0x88] sm:$0xff]
      %v244 = vld [vmem:[%s219 + $0x90] sm:$0xff]
      %v245 = vld [vmem:[%s219 + $0x98] sm:$0xff]
      %v246 = vld [vmem:[%s219 + $0xa0] sm:$0xff]
      %v247 = vld [vmem:[%s219 + $0xa8] sm:$0xff]
      %v248 = vld [vmem:[%s219 + $0xb0] sm:$0xff]
      %v249 = vld [vmem:[%s219 + $0xb8] sm:$0xff]
      %v250 = vld [vmem:[%s219 + $0xc0] sm:$0xff]
      %v251 = vld [vmem:[%s219 + $0xc8] sm:$0xff]
      %v252 = vld [vmem:[%s219 + $0xd0] sm:$0xff]
      %v253 = vld [vmem:[%s219 + $0xd8] sm:$0xff]
      %v254 = vld [vmem:[%s219 + $0xe0] sm:$0xff]
      %v255 = vld [vmem:[%s219 + $0xe8] sm:$0xff]
      %v256 = vld [vmem:[%s219 + $0xf0] sm:$0xff]
      %v257 = vld [vmem:[%s219 + $0xf8] sm:$0xff]
      %v258 = vpack.c.bf16 %v227, %v226
      %v259 = vpack.c.bf16 %v229, %v228
      %v260 = vpack.c.bf16 %v231, %v230
      %v261 = vpack.c.bf16 %v233, %v232
      %v262 = vpack.c.bf16 %v235, %v234
      %v263 = vpack.c.bf16 %v237, %v236
      %v264 = vpack.c.bf16 %v239, %v238
      %v265 = vpack.c.bf16 %v241, %v240
      %v266 = vpack.c.bf16 %v243, %v242
      %v267 = vpack.c.bf16 %v245, %v244
      %v268 = vpack.c.bf16 %v247, %v246
      %v269 = vpack.c.bf16 %v249, %v248
      %v270 = vpack.c.bf16 %v251, %v250
      %v271 = vpack.c.bf16 %v253, %v252
      %v272 = vpack.c.bf16 %v255, %v254
      %v273 = vpack.c.bf16 %v257, %v256
      %v274 = vld [vmem:[%s1] sm:$0xff]
      %v275 = vld [vmem:[%s1 + $0x8] sm:$0xff]
      %v276 = vld [vmem:[%s1 + $0x10] sm:$0xff]
      %v277 = vld [vmem:[%s1 + $0x18] sm:$0xff]
      %v278 = vld [vmem:[%s2] sm:$0x3]
      %v280 = vlaneseq
      %v281 = vshrl.u32 %v280, 7
      %v282 = vsub.s32 0, %v281
      %v283 = vrot.slane %v278, %v282
      %v284 = vlaneseq
      %v285 = vshrl.u32 %v284, 7
      %v286 = vsub.s32 1, %v285
      %v287 = vrot.slane %v278, %v286
      %v294 = vunpack.c.l.b16 %v274
      %v295 = vunpack.c.h.b16 %v274
      %v296 = vunpack.c.l.b16 %v275
      %v297 = vunpack.c.h.b16 %v275
      %v298 = vunpack.c.l.b16 %v276
      %v299 = vunpack.c.h.b16 %v276
      %v300 = vunpack.c.l.b16 %v277
      %v301 = vunpack.c.h.b16 %v277
      %v302 = vpack.c.b16 %v296, %v294
      %v303 = vpack.c.b16 %v297, %v295
      %v304 = vpack.c.b16 %v300, %v298
      %v305 = vpack.c.b16 %v301, %v299
      %vm310 = vcmask 261120
      %v312 = vsel %vm310, %v258, 0
      %v315 = vsel %vm310, %v259, 0
      %v318 = vsel %vm310, %v260, 0
      %v321 = vsel %vm310, %v261, 0
      %v324 = vsel %vm310, %v262, 0
      %v327 = vsel %vm310, %v263, 0
      %v330 = vsel %vm310, %v264, 0
      %v333 = vsel %vm310, %v265, 0
      %v336 = vsel %vm310, %v266, 0
      %v339 = vsel %vm310, %v267, 0
      %v342 = vsel %vm310, %v268, 0
      %v345 = vsel %vm310, %v269, 0
      %v348 = vsel %vm310, %v270, 0
      %v351 = vsel %vm310, %v271, 0
      %v354 = vsel %vm310, %v272, 0
      %v357 = vsel %vm310, %v273, 0
      %359 = vmatprep.subr.bf16.mxu0 %v303
      %360 = vmatpush1.bf16.msra.mxu0 %v302
      %361 = vmatprep.subr.bf16.mxu0 %v305
      %362 = vmatpush1.bf16.msra.mxu0 %v304
      %363 = vmatprep.subr.bf16.mxu0 0
      %364 = vmatpush1.bf16.msra.mxu0 0
      %365 = vmatprep.subr.bf16.mxu0 0
      %366 = vmatpush1.bf16.msra.mxu0 0
      %367 = vmatprep.subr.bf16.mxu0 0
      %368 = vmatpush1.bf16.msra.mxu0 0
      %369 = vmatprep.subr.bf16.mxu0 0
      %370 = vmatpush1.bf16.msra.mxu0 0
      %371 = vmatprep.subr.bf16.mxu0 0
      %372 = vmatpush1.bf16.msra.mxu0 0
      %373 = vmatprep.subr.bf16.mxu0 0
      %374 = vmatpush1.bf16.msra.mxu0 0
      %375 = vmatprep.subr.bf16.mxu0 0
      %376 = vmatpush1.bf16.msra.mxu0 0
      %377 = vmatprep.subr.bf16.mxu0 0
      %378 = vmatpush1.bf16.msra.mxu0 0
      %379 = vmatprep.subr.bf16.mxu0 0
      %380 = vmatpush1.bf16.msra.mxu0 0
      %381 = vmatprep.subr.bf16.mxu0 0
      %382 = vmatpush1.bf16.msra.mxu0 0
      %383 = vmatprep.subr.bf16.mxu0 0
      %384 = vmatpush1.bf16.msra.mxu0 0
      %385 = vmatprep.subr.bf16.mxu0 0
      %386 = vmatpush1.bf16.msra.mxu0 0
      %387 = vmatprep.subr.bf16.mxu0 0
      %388 = vmatpush1.bf16.msra.mxu0 0
      %389 = vmatprep.subr.bf16.mxu0 0
      %390 = vmatpush1.bf16.msra.mxu0 0
      %391 = vmatprep.mubr.bf16.mxu0 0
      %392 = vmatmul.mubr.bf16.gmra.mrb[0].mxu0 %v312
      %v393 = vpop.f32.mrb[0].mxu0
      %v394 = vadd.f32 %v283, %v393
      %v395 = vpop.f32.mrb[0].mxu0
      %v396 = vadd.f32 %v287, %v395
      %v397 = vpop.f32.mrb[0].mxu0
      %v398 = vadd.f32 %v283, %v397
      %v399 = vpop.f32.mrb[0].mxu0
      %v400 = vadd.f32 %v287, %v399
      %401 = vmatprep.mubr.bf16.mxu0 0
      %402 = vmatmul.mubr.bf16.gmra.mrb[0].mxu0 %v315
      %v403 = vpop.f32.mrb[0].mxu0
      %v404 = vadd.f32 %v283, %v403
      %v405 = vpop.f32.mrb[0].mxu0
      %v406 = vadd.f32 %v287, %v405
      %v407 = vpop.f32.mrb[0].mxu0
      %v408 = vadd.f32 %v283, %v407
      %v409 = vpop.f32.mrb[0].mxu0
      %v410 = vadd.f32 %v287, %v409
      %411 = vmatprep.mubr.bf16.mxu0 0
      %412 = vmatmul.mubr.bf16.gmra.mrb[0].mxu0 %v318
      %v413 = vpop.f32.mrb[0].mxu0
      %v414 = vadd.f32 %v283, %v413
      %v415 = vpop.f32.mrb[0].mxu0
      %v416 = vadd.f32 %v287, %v415
      %v417 = vpop.f32.mrb[0].mxu0
      %v418 = vadd.f32 %v283, %v417
      %v419 = vpop.f32.mrb[0].mxu0
      %v420 = vadd.f32 %v287, %v419
      %421 = vmatprep.mubr.bf16.mxu0 0
      %422 = vmatmul.mubr.bf16.gmra.mrb[0].mxu0 %v321
      %v423 = vpop.f32.mrb[0].mxu0
      %v424 = vadd.f32 %v283, %v423
      %v425 = vpop.f32.mrb[0].mxu0
      %v426 = vadd.f32 %v287, %v425
      %v427 = vpop.f32.mrb[0].mxu0
      %v428 = vadd.f32 %v283, %v427
      %v429 = vpop.f32.mrb[0].mxu0
      %v430 = vadd.f32 %v287, %v429
      %431 = vmatprep.mubr.bf16.mxu0 0
      %432 = vmatmul.mubr.bf16.gmra.mrb[0].mxu0 %v324
      %v433 = vpop.f32.mrb[0].mxu0
      %v434 = vadd.f32 %v283, %v433
      %v435 = vpop.f32.mrb[0].mxu0
      %v436 = vadd.f32 %v287, %v435
      %v437 = vpop.f32.mrb[0].mxu0
      %v438 = vadd.f32 %v283, %v437
      %v439 = vpop.f32.mrb[0].mxu0
      %v440 = vadd.f32 %v287, %v439
      %441 = vmatprep.mubr.bf16.mxu0 0
      %442 = vmatmul.mubr.bf16.gmra.mrb[0].mxu0 %v327
      %v443 = vpop.f32.mrb[0].mxu0
      %v444 = vadd.f32 %v283, %v443
      %v445 = vpop.f32.mrb[0].mxu0
      %v446 = vadd.f32 %v287, %v445
      %v447 = vpop.f32.mrb[0].mxu0
      %v448 = vadd.f32 %v283, %v447
      %v449 = vpop.f32.mrb[0].mxu0
      %v450 = vadd.f32 %v287, %v449
      %451 = vmatprep.mubr.bf16.mxu0 0
      %452 = vmatmul.mubr.bf16.gmra.mrb[0].mxu0 %v330
      %v453 = vpop.f32.mrb[0].mxu0
      %v454 = vadd.f32 %v283, %v453
      %v455 = vpop.f32.mrb[0].mxu0
      %v456 = vadd.f32 %v287, %v455
      %v457 = vpop.f32.mrb[0].mxu0
      %v458 = vadd.f32 %v283, %v457
      %v459 = vpop.f32.mrb[0].mxu0
      %v460 = vadd.f32 %v287, %v459
      %461 = vmatprep.mubr.bf16.mxu0 0
      %462 = vmatmul.mubr.bf16.gmra.mrb[0].mxu0 %v333
      %v463 = vpop.f32.mrb[0].mxu0
      %v464 = vadd.f32 %v283, %v463
      %v465 = vpop.f32.mrb[0].mxu0
      %v466 = vadd.f32 %v287, %v465
      %v467 = vpop.f32.mrb[0].mxu0
      %v468 = vadd.f32 %v283, %v467
      %v469 = vpop.f32.mrb[0].mxu0
      %v470 = vadd.f32 %v287, %v469
      %471 = vmatprep.mubr.bf16.mxu0 0
      %472 = vmatmul.mubr.bf16.gmra.mrb[0].mxu0 %v336
      %v473 = vpop.f32.mrb[0].mxu0
      %v474 = vadd.f32 %v283, %v473
      %v475 = vpop.f32.mrb[0].mxu0
      %v476 = vadd.f32 %v287, %v475
      %v477 = vpop.f32.mrb[0].mxu0
      %v478 = vadd.f32 %v283, %v477
      %v479 = vpop.f32.mrb[0].mxu0
      %v480 = vadd.f32 %v287, %v479
      %481 = vmatprep.mubr.bf16.mxu0 0
      %482 = vmatmul.mubr.bf16.gmra.mrb[0].mxu0 %v339
      %v483 = vpop.f32.mrb[0].mxu0
      %v484 = vadd.f32 %v283, %v483
      %v485 = vpop.f32.mrb[0].mxu0
      %v486 = vadd.f32 %v287, %v485
      %v487 = vpop.f32.mrb[0].mxu0
      %v488 = vadd.f32 %v283, %v487
      %v489 = vpop.f32.mrb[0].mxu0
      %v490 = vadd.f32 %v287, %v489
      %491 = vmatprep.mubr.bf16.mxu0 0
      %492 = vmatmul.mubr.bf16.gmra.mrb[0].mxu0 %v342
      %v493 = vpop.f32.mrb[0].mxu0
      %v494 = vadd.f32 %v283, %v493
      %v495 = vpop.f32.mrb[0].mxu0
      %v496 = vadd.f32 %v287, %v495
      %v497 = vpop.f32.mrb[0].mxu0
      %v498 = vadd.f32 %v283, %v497
      %v499 = vpop.f32.mrb[0].mxu0
      %v500 = vadd.f32 %v287, %v499
      %501 = vmatprep.mubr.bf16.mxu0 0
      %502 = vmatmul.mubr.bf16.gmra.mrb[0].mxu0 %v345
      %v503 = vpop.f32.mrb[0].mxu0
      %v504 = vadd.f32 %v283, %v503
      %v505 = vpop.f32.mrb[0].mxu0
      %v506 = vadd.f32 %v287, %v505
      %v507 = vpop.f32.mrb[0].mxu0
      %v508 = vadd.f32 %v283, %v507
      %v509 = vpop.f32.mrb[0].mxu0
      %v510 = vadd.f32 %v287, %v509
      %511 = vmatprep.mubr.bf16.mxu0 0
      %512 = vmatmul.mubr.bf16.gmra.mrb[0].mxu0 %v348
      %v513 = vpop.f32.mrb[0].mxu0
      %v514 = vadd.f32 %v283, %v513
      %v515 = vpop.f32.mrb[0].mxu0
      %v516 = vadd.f32 %v287, %v515
      %v517 = vpop.f32.mrb[0].mxu0
      %v518 = vadd.f32 %v283, %v517
      %v519 = vpop.f32.mrb[0].mxu0
      %v520 = vadd.f32 %v287, %v519
      %521 = vmatprep.mubr.bf16.mxu0 0
      %522 = vmatmul.mubr.bf16.gmra.mrb[0].mxu0 %v351
      %v523 = vpop.f32.mrb[0].mxu0
      %v524 = vadd.f32 %v283, %v523
      %v525 = vpop.f32.mrb[0].mxu0
      %v526 = vadd.f32 %v287, %v525
      %v527 = vpop.f32.mrb[0].mxu0
      %v528 = vadd.f32 %v283, %v527
      %v529 = vpop.f32.mrb[0].mxu0
      %v530 = vadd.f32 %v287, %v529
      %531 = vmatprep.mubr.bf16.mxu0 0
      %532 = vmatmul.mubr.bf16.gmra.mrb[0].mxu0 %v354
      %v533 = vpop.f32.mrb[0].mxu0
      %v534 = vadd.f32 %v283, %v533
      %v535 = vpop.f32.mrb[0].mxu0
      %v536 = vadd.f32 %v287, %v535
      %v537 = vpop.f32.mrb[0].mxu0
      %v538 = vadd.f32 %v283, %v537
      %v539 = vpop.f32.mrb[0].mxu0
      %v540 = vadd.f32 %v287, %v539
      %541 = vmatprep.mubr.bf16.mxu0 0
      %542 = vmatmul.mubr.bf16.gmra.mrb[0].mxu0 %v357
      %v543 = vpop.f32.mrb[0].mxu0
      %v544 = vadd.f32 %v283, %v543
      %v545 = vpop.f32.mrb[0].mxu0
      %v546 = vadd.f32 %v287, %v545
      %v547 = vpop.f32.mrb[0].mxu0
      %v548 = vadd.f32 %v283, %v547
      %v549 = vpop.f32.mrb[0].mxu0
      %v550 = vadd.f32 %v287, %v549
      %551 = vdwg.mxu0
      %v552 = vpack.c.bf16 %v398, %v394
      %v553 = vpack.c.bf16 %v400, %v396
      %v554 = vpack.c.bf16 %v408, %v404
      %v555 = vpack.c.bf16 %v410, %v406
      %v556 = vpack.c.bf16 %v418, %v414
      %v557 = vpack.c.bf16 %v420, %v416
      %v558 = vpack.c.bf16 %v428, %v424
      %v559 = vpack.c.bf16 %v430, %v426
      %v560 = vpack.c.bf16 %v438, %v434
      %v561 = vpack.c.bf16 %v440, %v436
      %v562 = vpack.c.bf16 %v448, %v444
      %v563 = vpack.c.bf16 %v450, %v446
      %v564 = vpack.c.bf16 %v458, %v454
      %v565 = vpack.c.bf16 %v460, %v456
      %v566 = vpack.c.bf16 %v468, %v464
      %v567 = vpack.c.bf16 %v470, %v466
      %v568 = vpack.c.bf16 %v478, %v474
      %v569 = vpack.c.bf16 %v480, %v476
      %v570 = vpack.c.bf16 %v488, %v484
      %v571 = vpack.c.bf16 %v490, %v486
      %v572 = vpack.c.bf16 %v498, %v494
      %v573 = vpack.c.bf16 %v500, %v496
      %v574 = vpack.c.bf16 %v508, %v504
      %v575 = vpack.c.bf16 %v510, %v506
      %v576 = vpack.c.bf16 %v518, %v514
      %v577 = vpack.c.bf16 %v520, %v516
      %v578 = vpack.c.bf16 %v528, %v524
      %v579 = vpack.c.bf16 %v530, %v526
      %v580 = vpack.c.bf16 %v538, %v534
      %v581 = vpack.c.bf16 %v540, %v536
      %v582 = vpack.c.bf16 %v548, %v544
      %v583 = vpack.c.bf16 %v550, %v546
      %584 = vmatprep.subr.bf16.mxu0 0
      %585 = vmatpush1.bf16.xpose.msra.mxu0 %v553
      %586 = vmatprep.subr.bf16.mxu0 0
      %587 = vmatpush1.bf16.xpose.msra.mxu0 %v555
      %588 = vmatprep.subr.bf16.mxu0 0
      %589 = vmatpush1.bf16.xpose.msra.mxu0 %v557
      %590 = vmatprep.subr.bf16.mxu0 0
      %591 = vmatpush1.bf16.xpose.msra.mxu0 %v559
      %592 = vmatprep.subr.bf16.mxu0 0
      %593 = vmatpush1.bf16.xpose.msra.mxu0 %v561
      %594 = vmatprep.subr.bf16.mxu0 0
      %595 = vmatpush1.bf16.xpose.msra.mxu0 %v563
      %596 = vmatprep.subr.bf16.mxu0 0
      %597 = vmatpush1.bf16.xpose.msra.mxu0 %v565
      %598 = vmatprep.subr.bf16.mxu0 0
      %599 = vmatpush1.bf16.xpose.msra.mxu0 %v567
      %600 = vmatprep.subr.bf16.mxu0 0
      %601 = vmatpush1.bf16.xpose.msra.mxu0 %v569
      %602 = vmatprep.subr.bf16.mxu0 0
      %603 = vmatpush1.bf16.xpose.msra.mxu0 %v571
      %604 = vmatprep.subr.bf16.mxu0 0
      %605 = vmatpush1.bf16.xpose.msra.mxu0 %v573
      %606 = vmatprep.subr.bf16.mxu0 0
      %607 = vmatpush1.bf16.xpose.msra.mxu0 %v575
      %608 = vmatprep.subr.bf16.mxu0 0
      %609 = vmatpush1.bf16.xpose.msra.mxu0 %v577
      %610 = vmatprep.subr.bf16.mxu0 0
      %611 = vmatpush1.bf16.xpose.msra.mxu0 %v579
      %612 = vmatprep.subr.bf16.mxu0 0
      %613 = vmatpush1.bf16.xpose.msra.mxu0 %v581
      %614 = vmatprep.subr.bf16.mxu0 0
      %615 = vmatpush1.bf16.xpose.msra.mxu0 %v583
      %616 = vmatprep.mubr.bf16.mxu0 0
      %617 = vmatmul.mubr.bf16.gmra.mrb[0].mxu0 %v552
      %v618 = vpop.f32.mrb[0].mxu0
      %v619 = vadd.f32 0.0, %v618
      %v620 = vpop.f32.mrb[0].mxu0
      %v621 = vadd.f32 0.0, %v620
      %v622 = vpop.f32.mrb[0].mxu0
      %v623 = vadd.f32 0.0, %v622
      %v624 = vpop.f32.mrb[0].mxu0
      %v625 = vadd.f32 0.0, %v624
      %626 = vmatprep.mubr.bf16.mxu0 0
      %627 = vmatmul.mubr.bf16.gmra.mrb[0].mxu0 %v554
      %v628 = vpop.f32.mrb[0].mxu0
      %v629 = vadd.f32 0.0, %v628
      %v630 = vpop.f32.mrb[0].mxu0
      %v631 = vadd.f32 0.0, %v630
      %v632 = vpop.f32.mrb[0].mxu0
      %v633 = vadd.f32 0.0, %v632
      %v634 = vpop.f32.mrb[0].mxu0
      %v635 = vadd.f32 0.0, %v634
      %636 = vmatprep.mubr.bf16.mxu0 0
      %637 = vmatmul.mubr.bf16.gmra.mrb[0].mxu0 %v556
      %v638 = vpop.f32.mrb[0].mxu0
      %v639 = vadd.f32 0.0, %v638
      %v640 = vpop.f32.mrb[0].mxu0
      %v641 = vadd.f32 0.0, %v640
      %v642 = vpop.f32.mrb[0].mxu0
      %v643 = vadd.f32 0.0, %v642
      %v644 = vpop.f32.mrb[0].mxu0
      %v645 = vadd.f32 0.0, %v644
      %646 = vmatprep.mubr.bf16.mxu0 0
      %647 = vmatmul.mubr.bf16.gmra.mrb[0].mxu0 %v558
      %v648 = vpop.f32.mrb[0].mxu0
      %v649 = vadd.f32 0.0, %v648
      %v650 = vpop.f32.mrb[0].mxu0
      %v651 = vadd.f32 0.0, %v650
      %v652 = vpop.f32.mrb[0].mxu0
      %v653 = vadd.f32 0.0, %v652
      %v654 = vpop.f32.mrb[0].mxu0
      %v655 = vadd.f32 0.0, %v654
      %656 = vmatprep.mubr.bf16.mxu0 0
      %657 = vmatmul.mubr.bf16.gmra.mrb[0].mxu0 %v560
      %v658 = vpop.f32.mrb[0].mxu0
      %v659 = vadd.f32 0.0, %v658
      %v660 = vpop.f32.mrb[0].mxu0
      %v661 = vadd.f32 0.0, %v660
      %v662 = vpop.f32.mrb[0].mxu0
      %v663 = vadd.f32 0.0, %v662
      %v664 = vpop.f32.mrb[0].mxu0
      %v665 = vadd.f32 0.0, %v664
      %666 = vmatprep.mubr.bf16.mxu0 0
      %667 = vmatmul.mubr.bf16.gmra.mrb[0].mxu0 %v562
      %v668 = vpop.f32.mrb[0].mxu0
      %v669 = vadd.f32 0.0, %v668
      %v670 = vpop.f32.mrb[0].mxu0
      %v671 = vadd.f32 0.0, %v670
      %v672 = vpop.f32.mrb[0].mxu0
      %v673 = vadd.f32 0.0, %v672
      %v674 = vpop.f32.mrb[0].mxu0
      %v675 = vadd.f32 0.0, %v674
      %676 = vmatprep.mubr.bf16.mxu0 0
      %677 = vmatmul.mubr.bf16.gmra.mrb[0].mxu0 %v564
      %v678 = vpop.f32.mrb[0].mxu0
      %v679 = vadd.f32 0.0, %v678
      %v680 = vpop.f32.mrb[0].mxu0
      %v681 = vadd.f32 0.0, %v680
      %v682 = vpop.f32.mrb[0].mxu0
      %v683 = vadd.f32 0.0, %v682
      %v684 = vpop.f32.mrb[0].mxu0
      %v685 = vadd.f32 0.0, %v684
      %686 = vmatprep.mubr.bf16.mxu0 0
      %687 = vmatmul.mubr.bf16.gmra.mrb[0].mxu0 %v566
      %v688 = vpop.f32.mrb[0].mxu0
      %v689 = vadd.f32 0.0, %v688
      %v690 = vpop.f32.mrb[0].mxu0
      %v691 = vadd.f32 0.0, %v690
      %v692 = vpop.f32.mrb[0].mxu0
      %v693 = vadd.f32 0.0, %v692
      %v694 = vpop.f32.mrb[0].mxu0
      %v695 = vadd.f32 0.0, %v694
      %696 = vmatprep.mubr.bf16.mxu0 0
      %697 = vmatmul.mubr.bf16.gmra.mrb[0].mxu0 %v568
      %v698 = vpop.f32.mrb[0].mxu0
      %v699 = vadd.f32 0.0, %v698
      %v700 = vpop.f32.mrb[0].mxu0
      %v701 = vadd.f32 0.0, %v700
      %v702 = vpop.f32.mrb[0].mxu0
      %v703 = vadd.f32 0.0, %v702
      %v704 = vpop.f32.mrb[0].mxu0
      %v705 = vadd.f32 0.0, %v704
      %706 = vmatprep.mubr.bf16.mxu0 0
      %707 = vmatmul.mubr.bf16.gmra.mrb[0].mxu0 %v570
      %v708 = vpop.f32.mrb[0].mxu0
      %v709 = vadd.f32 0.0, %v708
      %v710 = vpop.f32.mrb[0].mxu0
      %v711 = vadd.f32 0.0, %v710
      %v712 = vpop.f32.mrb[0].mxu0
      %v713 = vadd.f32 0.0, %v712
      %v714 = vpop.f32.mrb[0].mxu0
      %v715 = vadd.f32 0.0, %v714
      %716 = vmatprep.mubr.bf16.mxu0 0
      %717 = vmatmul.mubr.bf16.gmra.mrb[0].mxu0 %v572
      %v718 = vpop.f32.mrb[0].mxu0
      %v719 = vadd.f32 0.0, %v718
      %v720 = vpop.f32.mrb[0].mxu0
      %v721 = vadd.f32 0.0, %v720
      %v722 = vpop.f32.mrb[0].mxu0
      %v723 = vadd.f32 0.0, %v722
      %v724 = vpop.f32.mrb[0].mxu0
      %v725 = vadd.f32 0.0, %v724
      %726 = vmatprep.mubr.bf16.mxu0 0
      %727 = vmatmul.mubr.bf16.gmra.mrb[0].mxu0 %v574
      %v728 = vpop.f32.mrb[0].mxu0
      %v729 = vadd.f32 0.0, %v728
      %v730 = vpop.f32.mrb[0].mxu0
      %v731 = vadd.f32 0.0, %v730
      %v732 = vpop.f32.mrb[0].mxu0
      %v733 = vadd.f32 0.0, %v732
      %v734 = vpop.f32.mrb[0].mxu0
      %v735 = vadd.f32 0.0, %v734
      %736 = vmatprep.mubr.bf16.mxu0 0
      %737 = vmatmul.mubr.bf16.gmra.mrb[0].mxu0 %v576
      %v738 = vpop.f32.mrb[0].mxu0
      %v739 = vadd.f32 0.0, %v738
      %v740 = vpop.f32.mrb[0].mxu0
      %v741 = vadd.f32 0.0, %v740
      %v742 = vpop.f32.mrb[0].mxu0
      %v743 = vadd.f32 0.0, %v742
      %v744 = vpop.f32.mrb[0].mxu0
      %v745 = vadd.f32 0.0, %v744
      %746 = vmatprep.mubr.bf16.mxu0 0
      %747 = vmatmul.mubr.bf16.gmra.mrb[0].mxu0 %v578
      %v748 = vpop.f32.mrb[0].mxu0
      %v749 = vadd.f32 0.0, %v748
      %v750 = vpop.f32.mrb[0].mxu0
      %v751 = vadd.f32 0.0, %v750
      %v752 = vpop.f32.mrb[0].mxu0
      %v753 = vadd.f32 0.0, %v752
      %v754 = vpop.f32.mrb[0].mxu0
      %v755 = vadd.f32 0.0, %v754
      %756 = vmatprep.mubr.bf16.mxu0 0
      %757 = vmatmul.mubr.bf16.gmra.mrb[0].mxu0 %v580
      %v758 = vpop.f32.mrb[0].mxu0
      %v759 = vadd.f32 0.0, %v758
      %v760 = vpop.f32.mrb[0].mxu0
      %v761 = vadd.f32 0.0, %v760
      %v762 = vpop.f32.mrb[0].mxu0
      %v763 = vadd.f32 0.0, %v762
      %v764 = vpop.f32.mrb[0].mxu0
      %v765 = vadd.f32 0.0, %v764
      %766 = vmatprep.mubr.bf16.mxu0 0
      %767 = vmatmul.mubr.bf16.gmra.mrb[0].mxu0 %v582
      %v768 = vpop.f32.mrb[0].mxu0
      %v769 = vadd.f32 0.0, %v768
      %v770 = vpop.f32.mrb[0].mxu0
      %v771 = vadd.f32 0.0, %v770
      %v772 = vpop.f32.mrb[0].mxu0
      %v773 = vadd.f32 0.0, %v772
      %v774 = vpop.f32.mrb[0].mxu0
      %v775 = vadd.f32 0.0, %v774
      %776 = vdwg.mxu0
      %v777 = vmax.f32 %v619, %v621
      %778 = vmax.xlane.f32.xlu0 %v777
      %v779 = vpop.xlane.xlu0 %778
      %v780 = vmax.f32 %v623, %v625
      %781 = vmax.xlane.f32.xlu0 %v780
      %v782 = vpop.xlane.xlu0 %781
      %v783 = vmax.f32 %v629, %v631
      %784 = vmax.xlane.f32.xlu0 %v783
      %v785 = vpop.xlane.xlu0 %784
      %v786 = vmax.f32 %v633, %v635
      %787 = vmax.xlane.f32.xlu0 %v786
      %v788 = vpop.xlane.xlu0 %787
      %v789 = vmax.f32 %v639, %v641
      %790 = vmax.xlane.f32.xlu0 %v789
      %v791 = vpop.xlane.xlu0 %790
      %v792 = vmax.f32 %v643, %v645
      %793 = vmax.xlane.f32.xlu0 %v792
      %v794 = vpop.xlane.xlu0 %793
      %v795 = vmax.f32 %v649, %v651
      %796 = vmax.xlane.f32.xlu0 %v795
      %v797 = vpop.xlane.xlu0 %796
      %v798 = vmax.f32 %v653, %v655
      %799 = vmax.xlane.f32.xlu0 %v798
      %v800 = vpop.xlane.xlu0 %799
      %v801 = vmax.f32 %v659, %v661
      %802 = vmax.xlane.f32.xlu0 %v801
      %v803 = vpop.xlane.xlu0 %802
      %v804 = vmax.f32 %v663, %v665
      %805 = vmax.xlane.f32.xlu0 %v804
      %v806 = vpop.xlane.xlu0 %805
      %v807 = vmax.f32 %v669, %v671
      %808 = vmax.xlane.f32.xlu0 %v807
      %v809 = vpop.xlane.xlu0 %808
      %v810 = vmax.f32 %v673, %v675
      %811 = vmax.xlane.f32.xlu0 %v810
      %v812 = vpop.xlane.xlu0 %811
      %v813 = vmax.f32 %v679, %v681
      %814 = vmax.xlane.f32.xlu0 %v813
      %v815 = vpop.xlane.xlu0 %814
      %v816 = vmax.f32 %v683, %v685
      %817 = vmax.xlane.f32.xlu0 %v816
      %v818 = vpop.xlane.xlu0 %817
      %v819 = vmax.f32 %v689, %v691
      %820 = vmax.xlane.f32.xlu0 %v819
      %v821 = vpop.xlane.xlu0 %820
      %v822 = vmax.f32 %v693, %v695
      %823 = vmax.xlane.f32.xlu0 %v822
      %v824 = vpop.xlane.xlu0 %823
      %v825 = vmax.f32 %v699, %v701
      %826 = vmax.xlane.f32.xlu0 %v825
      %v827 = vpop.xlane.xlu0 %826
      %v828 = vmax.f32 %v703, %v705
      %829 = vmax.xlane.f32.xlu0 %v828
      %v830 = vpop.xlane.xlu0 %829
      %v831 = vmax.f32 %v709, %v711
      %832 = vmax.xlane.f32.xlu0 %v831
      %v833 = vpop.xlane.xlu0 %832
      %v834 = vmax.f32 %v713, %v715
      %835 = vmax.xlane.f32.xlu0 %v834
      %v836 = vpop.xlane.xlu0 %835
      %v837 = vmax.f32 %v719, %v721
      %838 = vmax.xlane.f32.xlu0 %v837
      %v839 = vpop.xlane.xlu0 %838
      %v840 = vmax.f32 %v723, %v725
      %841 = vmax.xlane.f32.xlu0 %v840
      %v842 = vpop.xlane.xlu0 %841
      %v843 = vmax.f32 %v729, %v731
      %844 = vmax.xlane.f32.xlu0 %v843
      %v845 = vpop.xlane.xlu0 %844
      %v846 = vmax.f32 %v733, %v735
      %847 = vmax.xlane.f32.xlu0 %v846
      %v848 = vpop.xlane.xlu0 %847
      %v849 = vmax.f32 %v739, %v741
      %850 = vmax.xlane.f32.xlu0 %v849
      %v851 = vpop.xlane.xlu0 %850
      %v852 = vmax.f32 %v743, %v745
      %853 = vmax.xlane.f32.xlu0 %v852
      %v854 = vpop.xlane.xlu0 %853
      %v855 = vmax.f32 %v749, %v751
      %856 = vmax.xlane.f32.xlu0 %v855
      %v857 = vpop.xlane.xlu0 %856
      %v858 = vmax.f32 %v753, %v755
      %859 = vmax.xlane.f32.xlu0 %v858
      %v860 = vpop.xlane.xlu0 %859
      %v861 = vmax.f32 %v759, %v761
      %862 = vmax.xlane.f32.xlu0 %v861
      %v863 = vpop.xlane.xlu0 %862
      %v864 = vmax.f32 %v763, %v765
      %865 = vmax.xlane.f32.xlu0 %v864
      %v866 = vpop.xlane.xlu0 %865
      %v867 = vmax.f32 %v769, %v771
      %868 = vmax.xlane.f32.xlu0 %v867
      %v869 = vpop.xlane.xlu0 %868
      %v870 = vmax.f32 %v773, %v775
      %871 = vmax.xlane.f32.xlu0 %v870
      %v872 = vpop.xlane.xlu0 %871
      %v873 = vsub.f32 %v619, %v779
      %v874 = vsub.f32 %v621, %v779
      %v875 = vsub.f32 %v623, %v782
      %v876 = vsub.f32 %v625, %v782
      %v877 = vsub.f32 %v629, %v785
      %v878 = vsub.f32 %v631, %v785
      %v879 = vsub.f32 %v633, %v788
      %v880 = vsub.f32 %v635, %v788
      %v881 = vsub.f32 %v639, %v791
      %v882 = vsub.f32 %v641, %v791
      %v883 = vsub.f32 %v643, %v794
      %v884 = vsub.f32 %v645, %v794
      %v885 = vsub.f32 %v649, %v797
      %v886 = vsub.f32 %v651, %v797
      %v887 = vsub.f32 %v653, %v800
      %v888 = vsub.f32 %v655, %v800
      %v889 = vsub.f32 %v659, %v803
      %v890 = vsub.f32 %v661, %v803
      %v891 = vsub.f32 %v663, %v806
      %v892 = vsub.f32 %v665, %v806
      %v893 = vsub.f32 %v669, %v809
      %v894 = vsub.f32 %v671, %v809
      %v895 = vsub.f32 %v673, %v812
      %v896 = vsub.f32 %v675, %v812
      %v897 = vsub.f32 %v679, %v815
      %v898 = vsub.f32 %v681, %v815
      %v899 = vsub.f32 %v683, %v818
      %v900 = vsub.f32 %v685, %v818
      %v901 = vsub.f32 %v689, %v821
      %v902 = vsub.f32 %v691, %v821
      %v903 = vsub.f32 %v693, %v824
      %v904 = vsub.f32 %v695, %v824
      %v905 = vsub.f32 %v699, %v827
      %v906 = vsub.f32 %v701, %v827
      %v907 = vsub.f32 %v703, %v830
      %v908 = vsub.f32 %v705, %v830
      %v909 = vsub.f32 %v709, %v833
      %v910 = vsub.f32 %v711, %v833
      %v911 = vsub.f32 %v713, %v836
      %v912 = vsub.f32 %v715, %v836
      %v913 = vsub.f32 %v719, %v839
      %v914 = vsub.f32 %v721, %v839
      %v915 = vsub.f32 %v723, %v842
      %v916 = vsub.f32 %v725, %v842
      %v917 = vsub.f32 %v729, %v845
      %v918 = vsub.f32 %v731, %v845
      %v919 = vsub.f32 %v733, %v848
      %v920 = vsub.f32 %v735, %v848
      %v921 = vsub.f32 %v739, %v851
      %v922 = vsub.f32 %v741, %v851
      %v923 = vsub.f32 %v743, %v854
      %v924 = vsub.f32 %v745, %v854
      %v925 = vsub.f32 %v749, %v857
      %v926 = vsub.f32 %v751, %v857
      %v927 = vsub.f32 %v753, %v860
      %v928 = vsub.f32 %v755, %v860
      %v929 = vsub.f32 %v759, %v863
      %v930 = vsub.f32 %v761, %v863
      %v931 = vsub.f32 %v763, %v866
      %v932 = vsub.f32 %v765, %v866
      %v933 = vsub.f32 %v769, %v869
      %v934 = vsub.f32 %v771, %v869
      %v935 = vsub.f32 %v773, %v872
      %v936 = vsub.f32 %v775, %v872
      %v937 = vmul.f32 %v873, 1.442695
      %v938 = vpow.pop %v937
      %v939 = vmul.f32 %v874, 1.442695
      %v940 = vpow.pop %v939
      %v941 = vmul.f32 %v875, 1.442695
      %v942 = vpow.pop %v941
      %v943 = vmul.f32 %v876, 1.442695
      %v944 = vpow.pop %v943
      %v945 = vmul.f32 %v877, 1.442695
      %v946 = vpow.pop %v945
      %v947 = vmul.f32 %v878, 1.442695
      %v948 = vpow.pop %v947
      %v949 = vmul.f32 %v879, 1.442695
      %v950 = vpow.pop %v949
      %v951 = vmul.f32 %v880, 1.442695
      %v952 = vpow.pop %v951
      %v953 = vmul.f32 %v881, 1.442695
      %v954 = vpow.pop %v953
      %v955 = vmul.f32 %v882, 1.442695
      %v956 = vpow.pop %v955
      %v957 = vmul.f32 %v883, 1.442695
      %v958 = vpow.pop %v957
      %v959 = vmul.f32 %v884, 1.442695
      %v960 = vpow.pop %v959
      %v961 = vmul.f32 %v885, 1.442695
      %v962 = vpow.pop %v961
      %v963 = vmul.f32 %v886, 1.442695
      %v964 = vpow.pop %v963
      %v965 = vmul.f32 %v887, 1.442695
      %v966 = vpow.pop %v965
      %v967 = vmul.f32 %v888, 1.442695
      %v968 = vpow.pop %v967
      %v969 = vmul.f32 %v889, 1.442695
      %v970 = vpow.pop %v969
      %v971 = vmul.f32 %v890, 1.442695
      %v972 = vpow.pop %v971
      %v973 = vmul.f32 %v891, 1.442695
      %v974 = vpow.pop %v973
      %v975 = vmul.f32 %v892, 1.442695
      %v976 = vpow.pop %v975
      %v977 = vmul.f32 %v893, 1.442695
      %v978 = vpow.pop %v977
      %v979 = vmul.f32 %v894, 1.442695
      %v980 = vpow.pop %v979
      %v981 = vmul.f32 %v895, 1.442695
      %v982 = vpow.pop %v981
      %v983 = vmul.f32 %v896, 1.442695
      %v984 = vpow.pop %v983
      %v985 = vmul.f32 %v897, 1.442695
      %v986 = vpow.pop %v985
      %v987 = vmul.f32 %v898, 1.442695
      %v988 = vpow.pop %v987
      %v989 = vmul.f32 %v899, 1.442695
      %v990 = vpow.pop %v989
      %v991 = vmul.f32 %v900, 1.442695
      %v992 = vpow.pop %v991
      %v993 = vmul.f32 %v901, 1.442695
      %v994 = vpow.pop %v993
      %v995 = vmul.f32 %v902, 1.442695
      %v996 = vpow.pop %v995
      %v997 = vmul.f32 %v903, 1.442695
      %v998 = vpow.pop %v997
      %v999 = vmul.f32 %v904, 1.442695
      %v1000 = vpow.pop %v999
      %v1001 = vmul.f32 %v905, 1.442695
      %v1002 = vpow.pop %v1001
      %v1003 = vmul.f32 %v906, 1.442695
      %v1004 = vpow.pop %v1003
      %v1005 = vmul.f32 %v907, 1.442695
      %v1006 = vpow.pop %v1005
      %v1007 = vmul.f32 %v908, 1.442695
      %v1008 = vpow.pop %v1007
      %v1009 = vmul.f32 %v909, 1.442695
      %v1010 = vpow.pop %v1009
      %v1011 = vmul.f32 %v910, 1.442695
      %v1012 = vpow.pop %v1011
      %v1013 = vmul.f32 %v911, 1.442695
      %v1014 = vpow.pop %v1013
      %v1015 = vmul.f32 %v912, 1.442695
      %v1016 = vpow.pop %v1015
      %v1017 = vmul.f32 %v913, 1.442695
      %v1018 = vpow.pop %v1017
      %v1019 = vmul.f32 %v914, 1.442695
      %v1020 = vpow.pop %v1019
      %v1021 = vmul.f32 %v915, 1.442695
      %v1022 = vpow.pop %v1021
      %v1023 = vmul.f32 %v916, 1.442695
      %v1024 = vpow.pop %v1023
      %v1025 = vmul.f32 %v917, 1.442695
      %v1026 = vpow.pop %v1025
      %v1027 = vmul.f32 %v918, 1.442695
      %v1028 = vpow.pop %v1027
      %v1029 = vmul.f32 %v919, 1.442695
      %v1030 = vpow.pop %v1029
      %v1031 = vmul.f32 %v920, 1.442695
      %v1032 = vpow.pop %v1031
      %v1033 = vmul.f32 %v921, 1.442695
      %v1034 = vpow.pop %v1033
      %v1035 = vmul.f32 %v922, 1.442695
      %v1036 = vpow.pop %v1035
      %v1037 = vmul.f32 %v923, 1.442695
      %v1038 = vpow.pop %v1037
      %v1039 = vmul.f32 %v924, 1.442695
      %v1040 = vpow.pop %v1039
      %v1041 = vmul.f32 %v925, 1.442695
      %v1042 = vpow.pop %v1041
      %v1043 = vmul.f32 %v926, 1.442695
      %v1044 = vpow.pop %v1043
      %v1045 = vmul.f32 %v927, 1.442695
      %v1046 = vpow.pop %v1045
      %v1047 = vmul.f32 %v928, 1.442695
      %v1048 = vpow.pop %v1047
      %v1049 = vmul.f32 %v929, 1.442695
      %v1050 = vpow.pop %v1049
      %v1051 = vmul.f32 %v930, 1.442695
      %v1052 = vpow.pop %v1051
      %v1053 = vmul.f32 %v931, 1.442695
      %v1054 = vpow.pop %v1053
      %v1055 = vmul.f32 %v932, 1.442695
      %v1056 = vpow.pop %v1055
      %v1057 = vmul.f32 %v933, 1.442695
      %v1058 = vpow.pop %v1057
      %v1059 = vmul.f32 %v934, 1.442695
      %v1060 = vpow.pop %v1059
      %v1061 = vmul.f32 %v935, 1.442695
      %v1062 = vpow.pop %v1061
      %v1063 = vmul.f32 %v936, 1.442695
      %v1064 = vpow.pop %v1063
      %v1065 = vadd.f32 %v938, %v940
      %1066 = vadd.xlane.f32.xlu0 %v1065
      %v1067 = vpop.xlane.xlu0 %1066
      %v1068 = vadd.f32 %v942, %v944
      %1069 = vadd.xlane.f32.xlu0 %v1068
      %v1070 = vpop.xlane.xlu0 %1069
      %v1071 = vadd.f32 %v946, %v948
      %1072 = vadd.xlane.f32.xlu0 %v1071
      %v1073 = vpop.xlane.xlu0 %1072
      %v1074 = vadd.f32 %v950, %v952
      %1075 = vadd.xlane.f32.xlu0 %v1074
      %v1076 = vpop.xlane.xlu0 %1075
      %v1077 = vadd.f32 %v954, %v956
      %1078 = vadd.xlane.f32.xlu0 %v1077
      %v1079 = vpop.xlane.xlu0 %1078
      %v1080 = vadd.f32 %v958, %v960
      %1081 = vadd.xlane.f32.xlu0 %v1080
      %v1082 = vpop.xlane.xlu0 %1081
      %v1083 = vadd.f32 %v962, %v964
      %1084 = vadd.xlane.f32.xlu0 %v1083
      %v1085 = vpop.xlane.xlu0 %1084
      %v1086 = vadd.f32 %v966, %v968
      %1087 = vadd.xlane.f32.xlu0 %v1086
      %v1088 = vpop.xlane.xlu0 %1087
      %v1089 = vadd.f32 %v970, %v972
      %1090 = vadd.xlane.f32.xlu0 %v1089
      %v1091 = vpop.xlane.xlu0 %1090
      %v1092 = vadd.f32 %v974, %v976
      %1093 = vadd.xlane.f32.xlu0 %v1092
      %v1094 = vpop.xlane.xlu0 %1093
      %v1095 = vadd.f32 %v978, %v980
      %1096 = vadd.xlane.f32.xlu0 %v1095
      %v1097 = vpop.xlane.xlu0 %1096
      %v1098 = vadd.f32 %v982, %v984
      %1099 = vadd.xlane.f32.xlu0 %v1098
      %v1100 = vpop.xlane.xlu0 %1099
      %v1101 = vadd.f32 %v986, %v988
      %1102 = vadd.xlane.f32.xlu0 %v1101
      %v1103 = vpop.xlane.xlu0 %1102
      %v1104 = vadd.f32 %v990, %v992
      %1105 = vadd.xlane.f32.xlu0 %v1104
      %v1106 = vpop.xlane.xlu0 %1105
      %v1107 = vadd.f32 %v994, %v996
      %1108 = vadd.xlane.f32.xlu0 %v1107
      %v1109 = vpop.xlane.xlu0 %1108
      %v1110 = vadd.f32 %v998, %v1000
      %1111 = vadd.xlane.f32.xlu0 %v1110
      %v1112 = vpop.xlane.xlu0 %1111
      %v1113 = vadd.f32 %v1002, %v1004
      %1114 = vadd.xlane.f32.xlu0 %v1113
      %v1115 = vpop.xlane.xlu0 %1114
      %v1116 = vadd.f32 %v1006, %v1008
      %1117 = vadd.xlane.f32.xlu0 %v1116
      %v1118 = vpop.xlane.xlu0 %1117
      %v1119 = vadd.f32 %v1010, %v1012
      %1120 = vadd.xlane.f32.xlu0 %v1119
      %v1121 = vpop.xlane.xlu0 %1120
      %v1122 = vadd.f32 %v1014, %v1016
      %1123 = vadd.xlane.f32.xlu0 %v1122
      %v1124 = vpop.xlane.xlu0 %1123
      %v1125 = vadd.f32 %v1018, %v1020
      %1126 = vadd.xlane.f32.xlu0 %v1125
      %v1127 = vpop.xlane.xlu0 %1126
      %v1128 = vadd.f32 %v1022, %v1024
      %1129 = vadd.xlane.f32.xlu0 %v1128
      %v1130 = vpop.xlane.xlu0 %1129
      %v1131 = vadd.f32 %v1026, %v1028
      %1132 = vadd.xlane.f32.xlu0 %v1131
      %v1133 = vpop.xlane.xlu0 %1132
      %v1134 = vadd.f32 %v1030, %v1032
      %1135 = vadd.xlane.f32.xlu0 %v1134
      %v1136 = vpop.xlane.xlu0 %1135
      %v1137 = vadd.f32 %v1034, %v1036
      %1138 = vadd.xlane.f32.xlu0 %v1137
      %v1139 = vpop.xlane.xlu0 %1138
      %v1140 = vadd.f32 %v1038, %v1040
      %1141 = vadd.xlane.f32.xlu0 %v1140
      %v1142 = vpop.xlane.xlu0 %1141
      %v1143 = vadd.f32 %v1042, %v1044
      %1144 = vadd.xlane.f32.xlu0 %v1143
      %v1145 = vpop.xlane.xlu0 %1144
      %v1146 = vadd.f32 %v1046, %v1048
      %1147 = vadd.xlane.f32.xlu0 %v1146
      %v1148 = vpop.xlane.xlu0 %1147
      %v1149 = vadd.f32 %v1050, %v1052
      %1150 = vadd.xlane.f32.xlu0 %v1149
      %v1151 = vpop.xlane.xlu0 %1150
      %v1152 = vadd.f32 %v1054, %v1056
      %1153 = vadd.xlane.f32.xlu0 %v1152
      %v1154 = vpop.xlane.xlu0 %1153
      %v1155 = vadd.f32 %v1058, %v1060
      %1156 = vadd.xlane.f32.xlu0 %v1155
      %v1157 = vpop.xlane.xlu0 %1156
      %v1158 = vadd.f32 %v1062, %v1064
      %1159 = vadd.xlane.f32.xlu0 %v1158
      %v1160 = vpop.xlane.xlu0 %1159
      %v1161 = vpack.c.bf16 %v942, %v938
      %v1162 = vpack.c.bf16 %v944, %v940
      %v1163 = vpack.c.bf16 %v950, %v946
      %v1164 = vpack.c.bf16 %v952, %v948
      %v1165 = vpack.c.bf16 %v958, %v954
      %v1166 = vpack.c.bf16 %v960, %v956
      %v1167 = vpack.c.bf16 %v966, %v962
      %v1168 = vpack.c.bf16 %v968, %v964
      %v1169 = vpack.c.bf16 %v974, %v970
      %v1170 = vpack.c.bf16 %v976, %v972
      %v1171 = vpack.c.bf16 %v982, %v978
      %v1172 = vpack.c.bf16 %v984, %v980
      %v1173 = vpack.c.bf16 %v990, %v986
      %v1174 = vpack.c.bf16 %v992, %v988
      %v1175 = vpack.c.bf16 %v998, %v994
      %v1176 = vpack.c.bf16 %v1000, %v996
      %v1177 = vpack.c.bf16 %v1006, %v1002
      %v1178 = vpack.c.bf16 %v1008, %v1004
      %v1179 = vpack.c.bf16 %v1014, %v1010
      %v1180 = vpack.c.bf16 %v1016, %v1012
      %v1181 = vpack.c.bf16 %v1022, %v1018
      %v1182 = vpack.c.bf16 %v1024, %v1020
      %v1183 = vpack.c.bf16 %v1030, %v1026
      %v1184 = vpack.c.bf16 %v1032, %v1028
      %v1185 = vpack.c.bf16 %v1038, %v1034
      %v1186 = vpack.c.bf16 %v1040, %v1036
      %v1187 = vpack.c.bf16 %v1046, %v1042
      %v1188 = vpack.c.bf16 %v1048, %v1044
      %v1189 = vpack.c.bf16 %v1054, %v1050
      %v1190 = vpack.c.bf16 %v1056, %v1052
      %v1191 = vpack.c.bf16 %v1062, %v1058
      %v1192 = vpack.c.bf16 %v1064, %v1060
      %1193 = vmatprep.subr.bf16.mxu0 0
      %1194 = vmatpush1.bf16.msra.mxu0 %v552
      %1195 = vmatprep.subr.bf16.mxu0 0
      %1196 = vmatpush1.bf16.msra.mxu0 %v554
      %1197 = vmatprep.subr.bf16.mxu0 0
      %1198 = vmatpush1.bf16.msra.mxu0 %v556
      %1199 = vmatprep.subr.bf16.mxu0 0
      %1200 = vmatpush1.bf16.msra.mxu0 %v558
      %1201 = vmatprep.subr.bf16.mxu0 0
      %1202 = vmatpush1.bf16.msra.mxu0 %v560
      %1203 = vmatprep.subr.bf16.mxu0 0
      %1204 = vmatpush1.bf16.msra.mxu0 %v562
      %1205 = vmatprep.subr.bf16.mxu0 0
      %1206 = vmatpush1.bf16.msra.mxu0 %v564
      %1207 = vmatprep.subr.bf16.mxu0 0
      %1208 = vmatpush1.bf16.msra.mxu0 %v566
      %1209 = vmatprep.subr.bf16.mxu0 0
      %1210 = vmatpush1.bf16.msra.mxu0 %v568
      %1211 = vmatprep.subr.bf16.mxu0 0
      %1212 = vmatpush1.bf16.msra.mxu0 %v570
      %1213 = vmatprep.subr.bf16.mxu0 0
      %1214 = vmatpush1.bf16.msra.mxu0 %v572
      %1215 = vmatprep.subr.bf16.mxu0 0
      %1216 = vmatpush1.bf16.msra.mxu0 %v574
      %1217 = vmatprep.subr.bf16.mxu0 0
      %1218 = vmatpush1.bf16.msra.mxu0 %v576
      %1219 = vmatprep.subr.bf16.mxu0 0
      %1220 = vmatpush1.bf16.msra.mxu0 %v578
      %1221 = vmatprep.subr.bf16.mxu0 0
      %1222 = vmatpush1.bf16.msra.mxu0 %v580
      %1223 = vmatprep.subr.bf16.mxu0 0
      %1224 = vmatpush1.bf16.msra.mxu0 %v582
      %1225 = vmatprep.mubr.bf16.mxu0 %v1162
      %1226 = vmatmul.mubr.bf16.gmra.mrb[0].mxu0 %v1161
      %v1227 = vpop.f32.mrb[0].mxu0
      %v1228 = vadd.f32 0.0, %v1227
      %v1229 = vpop.f32.mrb[0].mxu0
      %v1230 = vpop.f32.mrb[0].mxu0
      %v1231 = vadd.f32 0.0, %v1230
      %v1232 = vpop.f32.mrb[0].mxu0
      %1233 = vmatprep.mubr.bf16.mxu0 %v1164
      %1234 = vmatmul.mubr.bf16.gmra.mrb[0].mxu0 %v1163
      %v1235 = vpop.f32.mrb[0].mxu0
      %v1236 = vadd.f32 0.0, %v1235
      %v1237 = vpop.f32.mrb[0].mxu0
      %v1238 = vpop.f32.mrb[0].mxu0
      %v1239 = vadd.f32 0.0, %v1238
      %v1240 = vpop.f32.mrb[0].mxu0
      %1241 = vmatprep.mubr.bf16.mxu0 %v1166
      %1242 = vmatmul.mubr.bf16.gmra.mrb[0].mxu0 %v1165
      %v1243 = vpop.f32.mrb[0].mxu0
      %v1244 = vadd.f32 0.0, %v1243
      %v1245 = vpop.f32.mrb[0].mxu0
      %v1246 = vpop.f32.mrb[0].mxu0
      %v1247 = vadd.f32 0.0, %v1246
      %v1248 = vpop.f32.mrb[0].mxu0
      %1249 = vmatprep.mubr.bf16.mxu0 %v1168
      %1250 = vmatmul.mubr.bf16.gmra.mrb[0].mxu0 %v1167
      %v1251 = vpop.f32.mrb[0].mxu0
      %v1252 = vadd.f32 0.0, %v1251
      %v1253 = vpop.f32.mrb[0].mxu0
      %v1254 = vpop.f32.mrb[0].mxu0
      %v1255 = vadd.f32 0.0, %v1254
      %v1256 = vpop.f32.mrb[0].mxu0
      %1257 = vmatprep.mubr.bf16.mxu0 %v1170
      %1258 = vmatmul.mubr.bf16.gmra.mrb[0].mxu0 %v1169
      %v1259 = vpop.f32.mrb[0].mxu0
      %v1260 = vadd.f32 0.0, %v1259
      %v1261 = vpop.f32.mrb[0].mxu0
      %v1262 = vpop.f32.mrb[0].mxu0
      %v1263 = vadd.f32 0.0, %v1262
      %v1264 = vpop.f32.mrb[0].mxu0
      %1265 = vmatprep.mubr.bf16.mxu0 %v1172
      %1266 = vmatmul.mubr.bf16.gmra.mrb[0].mxu0 %v1171
      %v1267 = vpop.f32.mrb[0].mxu0
      %v1268 = vadd.f32 0.0, %v1267
      %v1269 = vpop.f32.mrb[0].mxu0
      %v1270 = vpop.f32.mrb[0].mxu0
      %v1271 = vadd.f32 0.0, %v1270
      %v1272 = vpop.f32.mrb[0].mxu0
      %1273 = vmatprep.mubr.bf16.mxu0 %v1174
      %1274 = vmatmul.mubr.bf16.gmra.mrb[0].mxu0 %v1173
      %v1275 = vpop.f32.mrb[0].mxu0
      %v1276 = vadd.f32 0.0, %v1275
      %v1277 = vpop.f32.mrb[0].mxu0
      %v1278 = vpop.f32.mrb[0].mxu0
      %v1279 = vadd.f32 0.0, %v1278
      %v1280 = vpop.f32.mrb[0].mxu0
      %1281 = vmatprep.mubr.bf16.mxu0 %v1176
      %1282 = vmatmul.mubr.bf16.gmra.mrb[0].mxu0 %v1175
      %v1283 = vpop.f32.mrb[0].mxu0
      %v1284 = vadd.f32 0.0, %v1283
      %v1285 = vpop.f32.mrb[0].mxu0
      %v1286 = vpop.f32.mrb[0].mxu0
      %v1287 = vadd.f32 0.0, %v1286
      %v1288 = vpop.f32.mrb[0].mxu0
      %1289 = vmatprep.mubr.bf16.mxu0 %v1178
      %1290 = vmatmul.mubr.bf16.gmra.mrb[0].mxu0 %v1177
      %v1291 = vpop.f32.mrb[0].mxu0
      %v1292 = vadd.f32 0.0, %v1291
      %v1293 = vpop.f32.mrb[0].mxu0
      %v1294 = vpop.f32.mrb[0].mxu0
      %v1295 = vadd.f32 0.0, %v1294
      %v1296 = vpop.f32.mrb[0].mxu0
      %1297 = vmatprep.mubr.bf16.mxu0 %v1180
      %1298 = vmatmul.mubr.bf16.gmra.mrb[0].mxu0 %v1179
      %v1299 = vpop.f32.mrb[0].mxu0
      %v1300 = vadd.f32 0.0, %v1299
      %v1301 = vpop.f32.mrb[0].mxu0
      %v1302 = vpop.f32.mrb[0].mxu0
      %v1303 = vadd.f32 0.0, %v1302
      %v1304 = vpop.f32.mrb[0].mxu0
      %1305 = vmatprep.mubr.bf16.mxu0 %v1182
      %1306 = vmatmul.mubr.bf16.gmra.mrb[0].mxu0 %v1181
      %v1307 = vpop.f32.mrb[0].mxu0
      %v1308 = vadd.f32 0.0, %v1307
      %v1309 = vpop.f32.mrb[0].mxu0
      %v1310 = vpop.f32.mrb[0].mxu0
      %v1311 = vadd.f32 0.0, %v1310
      %v1312 = vpop.f32.mrb[0].mxu0
      %1313 = vmatprep.mubr.bf16.mxu0 %v1184
      %1314 = vmatmul.mubr.bf16.gmra.mrb[0].mxu0 %v1183
      %v1315 = vpop.f32.mrb[0].mxu0
      %v1316 = vadd.f32 0.0, %v1315
      %v1317 = vpop.f32.mrb[0].mxu0
      %v1318 = vpop.f32.mrb[0].mxu0
      %v1319 = vadd.f32 0.0, %v1318
      %v1320 = vpop.f32.mrb[0].mxu0
      %1321 = vmatprep.mubr.bf16.mxu0 %v1186
      %1322 = vmatmul.mubr.bf16.gmra.mrb[0].mxu0 %v1185
      %v1323 = vpop.f32.mrb[0].mxu0
      %v1324 = vadd.f32 0.0, %v1323
      %v1325 = vpop.f32.mrb[0].mxu0
      %v1326 = vpop.f32.mrb[0].mxu0
      %v1327 = vadd.f32 0.0, %v1326
      %v1328 = vpop.f32.mrb[0].mxu0
      %1329 = vmatprep.mubr.bf16.mxu0 %v1188
      %1330 = vmatmul.mubr.bf16.gmra.mrb[0].mxu0 %v1187
      %v1331 = vpop.f32.mrb[0].mxu0
      %v1332 = vadd.f32 0.0, %v1331
      %v1333 = vpop.f32.mrb[0].mxu0
      %v1334 = vpop.f32.mrb[0].mxu0
      %v1335 = vadd.f32 0.0, %v1334
      %v1336 = vpop.f32.mrb[0].mxu0
      %1337 = vmatprep.mubr.bf16.mxu0 %v1190
      %1338 = vmatmul.mubr.bf16.gmra.mrb[0].mxu0 %v1189
      %v1339 = vpop.f32.mrb[0].mxu0
      %v1340 = vadd.f32 0.0, %v1339
      %v1341 = vpop.f32.mrb[0].mxu0
      %v1342 = vpop.f32.mrb[0].mxu0
      %v1343 = vadd.f32 0.0, %v1342
      %v1344 = vpop.f32.mrb[0].mxu0
      %1345 = vmatprep.mubr.bf16.mxu0 %v1192
      %1346 = vmatmul.mubr.bf16.gmra.mrb[0].mxu0 %v1191
      %v1347 = vpop.f32.mrb[0].mxu0
      %v1348 = vadd.f32 0.0, %v1347
      %v1349 = vpop.f32.mrb[0].mxu0
      %v1350 = vpop.f32.mrb[0].mxu0
      %v1351 = vadd.f32 0.0, %v1350
      %v1352 = vpop.f32.mrb[0].mxu0
      %1353 = vdwg.mxu0
      %v1354 = vrcp.pop %v1067
      %v1355 = vrcp.pop %v1070
      %v1356 = vrcp.pop %v1073
      %v1357 = vrcp.pop %v1076
      %v1358 = vrcp.pop %v1079
      %v1359 = vrcp.pop %v1082
      %v1360 = vrcp.pop %v1085
      %v1361 = vrcp.pop %v1088
      %v1362 = vrcp.pop %v1091
      %v1363 = vrcp.pop %v1094
      %v1364 = vrcp.pop %v1097
      %v1365 = vrcp.pop %v1100
      %v1366 = vrcp.pop %v1103
      %v1367 = vrcp.pop %v1106
      %v1368 = vrcp.pop %v1109
      %v1369 = vrcp.pop %v1112
      %v1370 = vrcp.pop %v1115
      %v1371 = vrcp.pop %v1118
      %v1372 = vrcp.pop %v1121
      %v1373 = vrcp.pop %v1124
      %v1374 = vrcp.pop %v1127
      %v1375 = vrcp.pop %v1130
      %v1376 = vrcp.pop %v1133
      %v1377 = vrcp.pop %v1136
      %v1378 = vrcp.pop %v1139
      %v1379 = vrcp.pop %v1142
      %v1380 = vrcp.pop %v1145
      %v1381 = vrcp.pop %v1148
      %v1382 = vrcp.pop %v1151
      %v1383 = vrcp.pop %v1154
      %v1384 = vrcp.pop %v1157
      %v1385 = vrcp.pop %v1160
      %v1386 = vmul.f32 %v1228, %v1354
      %v1387 = vmul.f32 %v1231, %v1355
      %v1388 = vmul.f32 %v1236, %v1356
      %v1389 = vmul.f32 %v1239, %v1357
      %v1390 = vmul.f32 %v1244, %v1358
      %v1391 = vmul.f32 %v1247, %v1359
      %v1392 = vmul.f32 %v1252, %v1360
      %v1393 = vmul.f32 %v1255, %v1361
      %v1394 = vmul.f32 %v1260, %v1362
      %v1395 = vmul.f32 %v1263, %v1363
      %v1396 = vmul.f32 %v1268, %v1364
      %v1397 = vmul.f32 %v1271, %v1365
      %v1398 = vmul.f32 %v1276, %v1366
      %v1399 = vmul.f32 %v1279, %v1367
      %v1400 = vmul.f32 %v1284, %v1368
      %v1401 = vmul.f32 %v1287, %v1369
      %v1402 = vmul.f32 %v1292, %v1370
      %v1403 = vmul.f32 %v1295, %v1371
      %v1404 = vmul.f32 %v1300, %v1372
      %v1405 = vmul.f32 %v1303, %v1373
      %v1406 = vmul.f32 %v1308, %v1374
      %v1407 = vmul.f32 %v1311, %v1375
      %v1408 = vmul.f32 %v1316, %v1376
      %v1409 = vmul.f32 %v1319, %v1377
      %v1410 = vmul.f32 %v1324, %v1378
      %v1411 = vmul.f32 %v1327, %v1379
      %v1412 = vmul.f32 %v1332, %v1380
      %v1413 = vmul.f32 %v1335, %v1381
      %v1414 = vmul.f32 %v1340, %v1382
      %v1415 = vmul.f32 %v1343, %v1383
      %v1416 = vmul.f32 %v1348, %v1384
      %v1417 = vmul.f32 %v1351, %v1385
      %v1418 = vlaneseq
      %v1419 = vshrl.u32 %v1418, 7
      %v1420 = vadd.s32 %v1419, 8
      %v1421 = vadd.s32 %v1419, 16
      %v1422 = vadd.s32 %v1419, 24
      %v1423 = vadd.s32 %v1419, 32
      %v1424 = vadd.s32 %v1419, 40
      %v1425 = vadd.s32 %v1419, 48
      %v1426 = vadd.s32 %v1419, 56
      %v1427 = vadd.s32 %v1419, 64
      %v1428 = vadd.s32 %v1419, 72
      %v1429 = vadd.s32 %v1419, 80
      %v1430 = vadd.s32 %v1419, 88
      %v1431 = vadd.s32 %v1419, 96
      %v1432 = vadd.s32 %v1419, 104
      %v1433 = vadd.s32 %v1419, 112
      %v1434 = vadd.s32 %v1419, 120
      %v1435 = vadd.s32 %v1419, 128
      %v1436 = vadd.s32 %v1419, 136
      %v1437 = vadd.s32 %v1419, 144
      %v1438 = vadd.s32 %v1419, 152
      %v1439 = vadd.s32 %v1419, 160
      %v1440 = vadd.s32 %v1419, 168
      %v1441 = vadd.s32 %v1419, 176
      %v1442 = vadd.s32 %v1419, 184
      %v1443 = vadd.s32 %v1419, 192
      %v1444 = vadd.s32 %v1419, 200
      %v1445 = vadd.s32 %v1419, 208
      %v1446 = vadd.s32 %v1419, 216
      %v1447 = vadd.s32 %v1419, 224
      %v1448 = vadd.s32 %v1419, 232
      %v1449 = vadd.s32 %v1419, 240
      %v1450 = vadd.s32 %v1419, 248
      %vm1451 = vcmp.lt.s32.totalorder %v1419, 0
      %v1452 = vsub.s32 0, %v1419
      %v1453 = vsel %vm1451, %v1452, %v1419
      %v1454 = vshrl.u32 %v1453, 4
      %v1455 = vand.u32 %v1453, 15
      %v1456 = vsub.s32 0, %v1455
      %v1457 = vsel %vm1451, %v1456, %v1455
      %vm1458 = vcmp.lt.s32.totalorder %v1420, 0
      %v1459 = vsub.s32 0, %v1420
      %v1460 = vsel %vm1458, %v1459, %v1420
      %v1461 = vshrl.u32 %v1460, 4
      %v1462 = vand.u32 %v1460, 15
      %v1463 = vsub.s32 0, %v1462
      %v1464 = vsel %vm1458, %v1463, %v1462
      %vm1465 = vcmp.lt.s32.totalorder %v1421, 0
      %v1466 = vsub.s32 0, %v1421
      %v1467 = vsel %vm1465, %v1466, %v1421
      %v1468 = vshrl.u32 %v1467, 4
      %v1469 = vand.u32 %v1467, 15
      %v1470 = vsub.s32 0, %v1469
      %v1471 = vsel %vm1465, %v1470, %v1469
      %vm1472 = vcmp.lt.s32.totalorder %v1422, 0
      %v1473 = vsub.s32 0, %v1422
      %v1474 = vsel %vm1472, %v1473, %v1422
      %v1475 = vshrl.u32 %v1474, 4
      %v1476 = vand.u32 %v1474, 15
      %v1477 = vsub.s32 0, %v1476
      %v1478 = vsel %vm1472, %v1477, %v1476
      %vm1479 = vcmp.lt.s32.totalorder %v1423, 0
      %v1480 = vsub.s32 0, %v1423
      %v1481 = vsel %vm1479, %v1480, %v1423
      %v1482 = vshrl.u32 %v1481, 4
      %v1483 = vand.u32 %v1481, 15
      %v1484 = vsub.s32 0, %v1483
      %v1485 = vsel %vm1479, %v1484, %v1483
      %vm1486 = vcmp.lt.s32.totalorder %v1424, 0
      %v1487 = vsub.s32 0, %v1424
      %v1488 = vsel %vm1486, %v1487, %v1424
      %v1489 = vshrl.u32 %v1488, 4
      %v1490 = vand.u32 %v1488, 15
      %v1491 = vsub.s32 0, %v1490
      %v1492 = vsel %vm1486, %v1491, %v1490
      %vm1493 = vcmp.lt.s32.totalorder %v1425, 0
      %v1494 = vsub.s32 0, %v1425
      %v1495 = vsel %vm1493, %v1494, %v1425
      %v1496 = vshrl.u32 %v1495, 4
      %v1497 = vand.u32 %v1495, 15
      %v1498 = vsub.s32 0, %v1497
      %v1499 = vsel %vm1493, %v1498, %v1497
      %vm1500 = vcmp.lt.s32.totalorder %v1426, 0
      %v1501 = vsub.s32 0, %v1426
      %v1502 = vsel %vm1500, %v1501, %v1426
      %v1503 = vshrl.u32 %v1502, 4
      %v1504 = vand.u32 %v1502, 15
      %v1505 = vsub.s32 0, %v1504
      %v1506 = vsel %vm1500, %v1505, %v1504
      %vm1507 = vcmp.lt.s32.totalorder %v1427, 0
      %v1508 = vsub.s32 0, %v1427
      %v1509 = vsel %vm1507, %v1508, %v1427
      %v1510 = vshrl.u32 %v1509, 4
      %v1511 = vand.u32 %v1509, 15
      %v1512 = vsub.s32 0, %v1511
      %v1513 = vsel %vm1507, %v1512, %v1511
      %vm1514 = vcmp.lt.s32.totalorder %v1428, 0
      %v1515 = vsub.s32 0, %v1428
      %v1516 = vsel %vm1514, %v1515, %v1428
      %v1517 = vshrl.u32 %v1516, 4
      %v1518 = vand.u32 %v1516, 15
      %v1519 = vsub.s32 0, %v1518
      %v1520 = vsel %vm1514, %v1519, %v1518
      %vm1521 = vcmp.lt.s32.totalorder %v1429, 0
      %v1522 = vsub.s32 0, %v1429
      %v1523 = vsel %vm1521, %v1522, %v1429
      %v1524 = vshrl.u32 %v1523, 4
      %v1525 = vand.u32 %v1523, 15
      %v1526 = vsub.s32 0, %v1525
      %v1527 = vsel %vm1521, %v1526, %v1525
      %vm1528 = vcmp.lt.s32.totalorder %v1430, 0
      %v1529 = vsub.s32 0, %v1430
      %v1530 = vsel %vm1528, %v1529, %v1430
      %v1531 = vshrl.u32 %v1530, 4
      %v1532 = vand.u32 %v1530, 15
      %v1533 = vsub.s32 0, %v1532
      %v1534 = vsel %vm1528, %v1533, %v1532
      %vm1535 = vcmp.lt.s32.totalorder %v1431, 0
      %v1536 = vsub.s32 0, %v1431
      %v1537 = vsel %vm1535, %v1536, %v1431
      %v1538 = vshrl.u32 %v1537, 4
      %v1539 = vand.u32 %v1537, 15
      %v1540 = vsub.s32 0, %v1539
      %v1541 = vsel %vm1535, %v1540, %v1539
      %vm1542 = vcmp.lt.s32.totalorder %v1432, 0
      %v1543 = vsub.s32 0, %v1432
      %v1544 = vsel %vm1542, %v1543, %v1432
      %v1545 = vshrl.u32 %v1544, 4
      %v1546 = vand.u32 %v1544, 15
      %v1547 = vsub.s32 0, %v1546
      %v1548 = vsel %vm1542, %v1547, %v1546
      %vm1549 = vcmp.lt.s32.totalorder %v1433, 0
      %v1550 = vsub.s32 0, %v1433
      %v1551 = vsel %vm1549, %v1550, %v1433
      %v1552 = vshrl.u32 %v1551, 4
      %v1553 = vand.u32 %v1551, 15
      %v1554 = vsub.s32 0, %v1553
      %v1555 = vsel %vm1549, %v1554, %v1553
      %vm1556 = vcmp.lt.s32.totalorder %v1434, 0
      %v1557 = vsub.s32 0, %v1434
      %v1558 = vsel %vm1556, %v1557, %v1434
      %v1559 = vshrl.u32 %v1558, 4
      %v1560 = vand.u32 %v1558, 15
      %v1561 = vsub.s32 0, %v1560
      %v1562 = vsel %vm1556, %v1561, %v1560
      %vm1563 = vcmp.lt.s32.totalorder %v1435, 0
      %v1564 = vsub.s32 0, %v1435
      %v1565 = vsel %vm1563, %v1564, %v1435
      %v1566 = vshrl.u32 %v1565, 4
      %v1567 = vand.u32 %v1565, 15
      %v1568 = vsub.s32 0, %v1567
      %v1569 = vsel %vm1563, %v1568, %v1567
      %vm1570 = vcmp.lt.s32.totalorder %v1436, 0
      %v1571 = vsub.s32 0, %v1436
      %v1572 = vsel %vm1570, %v1571, %v1436
      %v1573 = vshrl.u32 %v1572, 4
      %v1574 = vand.u32 %v1572, 15
      %v1575 = vsub.s32 0, %v1574
      %v1576 = vsel %vm1570, %v1575, %v1574
      %vm1577 = vcmp.lt.s32.totalorder %v1437, 0
      %v1578 = vsub.s32 0, %v1437
      %v1579 = vsel %vm1577, %v1578, %v1437
      %v1580 = vshrl.u32 %v1579, 4
      %v1581 = vand.u32 %v1579, 15
      %v1582 = vsub.s32 0, %v1581
      %v1583 = vsel %vm1577, %v1582, %v1581
      %vm1584 = vcmp.lt.s32.totalorder %v1438, 0
      %v1585 = vsub.s32 0, %v1438
      %v1586 = vsel %vm1584, %v1585, %v1438
      %v1587 = vshrl.u32 %v1586, 4
      %v1588 = vand.u32 %v1586, 15
      %v1589 = vsub.s32 0, %v1588
      %v1590 = vsel %vm1584, %v1589, %v1588
      %vm1591 = vcmp.lt.s32.totalorder %v1439, 0
      %v1592 = vsub.s32 0, %v1439
      %v1593 = vsel %vm1591, %v1592, %v1439
      %v1594 = vshrl.u32 %v1593, 4
      %v1595 = vand.u32 %v1593, 15
      %v1596 = vsub.s32 0, %v1595
      %v1597 = vsel %vm1591, %v1596, %v1595
      %vm1598 = vcmp.lt.s32.totalorder %v1440, 0
      %v1599 = vsub.s32 0, %v1440
      %v1600 = vsel %vm1598, %v1599, %v1440
      %v1601 = vshrl.u32 %v1600, 4
      %v1602 = vand.u32 %v1600, 15
      %v1603 = vsub.s32 0, %v1602
      %v1604 = vsel %vm1598, %v1603, %v1602
      %vm1605 = vcmp.lt.s32.totalorder %v1441, 0
      %v1606 = vsub.s32 0, %v1441
      %v1607 = vsel %vm1605, %v1606, %v1441
      %v1608 = vshrl.u32 %v1607, 4
      %v1609 = vand.u32 %v1607, 15
      %v1610 = vsub.s32 0, %v1609
      %v1611 = vsel %vm1605, %v1610, %v1609
      %vm1612 = vcmp.lt.s32.totalorder %v1442, 0
      %v1613 = vsub.s32 0, %v1442
      %v1614 = vsel %vm1612, %v1613, %v1442
      %v1615 = vshrl.u32 %v1614, 4
      %v1616 = vand.u32 %v1614, 15
      %v1617 = vsub.s32 0, %v1616
      %v1618 = vsel %vm1612, %v1617, %v1616
      %vm1619 = vcmp.lt.s32.totalorder %v1443, 0
      %v1620 = vsub.s32 0, %v1443
      %v1621 = vsel %vm1619, %v1620, %v1443
      %v1622 = vshrl.u32 %v1621, 4
      %v1623 = vand.u32 %v1621, 15
      %v1624 = vsub.s32 0, %v1623
      %v1625 = vsel %vm1619, %v1624, %v1623
      %vm1626 = vcmp.lt.s32.totalorder %v1444, 0
      %v1627 = vsub.s32 0, %v1444
      %v1628 = vsel %vm1626, %v1627, %v1444
      %v1629 = vshrl.u32 %v1628, 4
      %v1630 = vand.u32 %v1628, 15
      %v1631 = vsub.s32 0, %v1630
      %v1632 = vsel %vm1626, %v1631, %v1630
      %vm1633 = vcmp.lt.s32.totalorder %v1445, 0
      %v1634 = vsub.s32 0, %v1445
      %v1635 = vsel %vm1633, %v1634, %v1445
      %v1636 = vshrl.u32 %v1635, 4
      %v1637 = vand.u32 %v1635, 15
      %v1638 = vsub.s32 0, %v1637
      %v1639 = vsel %vm1633, %v1638, %v1637
      %vm1640 = vcmp.lt.s32.totalorder %v1446, 0
      %v1641 = vsub.s32 0, %v1446
      %v1642 = vsel %vm1640, %v1641, %v1446
      %v1643 = vshrl.u32 %v1642, 4
      %v1644 = vand.u32 %v1642, 15
      %v1645 = vsub.s32 0, %v1644
      %v1646 = vsel %vm1640, %v1645, %v1644
      %vm1647 = vcmp.lt.s32.totalorder %v1447, 0
      %v1648 = vsub.s32 0, %v1447
      %v1649 = vsel %vm1647, %v1648, %v1447
      %v1650 = vshrl.u32 %v1649, 4
      %v1651 = vand.u32 %v1649, 15
      %v1652 = vsub.s32 0, %v1651
      %v1653 = vsel %vm1647, %v1652, %v1651
      %vm1654 = vcmp.lt.s32.totalorder %v1448, 0
      %v1655 = vsub.s32 0, %v1448
      %v1656 = vsel %vm1654, %v1655, %v1448
      %v1657 = vshrl.u32 %v1656, 4
      %v1658 = vand.u32 %v1656, 15
      %v1659 = vsub.s32 0, %v1658
      %v1660 = vsel %vm1654, %v1659, %v1658
      %vm1661 = vcmp.lt.s32.totalorder %v1449, 0
      %v1662 = vsub.s32 0, %v1449
      %v1663 = vsel %vm1661, %v1662, %v1449
      %v1664 = vshrl.u32 %v1663, 4
      %v1665 = vand.u32 %v1663, 15
      %v1666 = vsub.s32 0, %v1665
      %v1667 = vsel %vm1661, %v1666, %v1665
      %vm1668 = vcmp.lt.s32.totalorder %v1450, 0
      %v1669 = vsub.s32 0, %v1450
      %v1670 = vsel %vm1668, %v1669, %v1450
      %v1671 = vshrl.u32 %v1670, 4
      %v1672 = vand.u32 %v1670, 15
      %v1673 = vsub.s32 0, %v1672
      %v1674 = vsel %vm1668, %v1673, %v1672
      %vm1675 = vcmp.ne.s32.totalorder %v1457, 0
      %vm1676 = vcmp.ne.s32.totalorder %v1464, 0
      %vm1677 = vcmp.ne.s32.totalorder %v1471, 0
      %vm1678 = vcmp.ne.s32.totalorder %v1478, 0
      %vm1679 = vcmp.ne.s32.totalorder %v1485, 0
      %vm1680 = vcmp.ne.s32.totalorder %v1492, 0
      %vm1681 = vcmp.ne.s32.totalorder %v1499, 0
      %vm1682 = vcmp.ne.s32.totalorder %v1506, 0
      %vm1683 = vcmp.ne.s32.totalorder %v1513, 0
      %vm1684 = vcmp.ne.s32.totalorder %v1520, 0
      %vm1685 = vcmp.ne.s32.totalorder %v1527, 0
      %vm1686 = vcmp.ne.s32.totalorder %v1534, 0
      %vm1687 = vcmp.ne.s32.totalorder %v1541, 0
      %vm1688 = vcmp.ne.s32.totalorder %v1548, 0
      %vm1689 = vcmp.ne.s32.totalorder %v1555, 0
      %vm1690 = vcmp.ne.s32.totalorder %v1562, 0
      %vm1691 = vcmp.ne.s32.totalorder %v1569, 0
      %vm1692 = vcmp.ne.s32.totalorder %v1576, 0
      %vm1693 = vcmp.ne.s32.totalorder %v1583, 0
      %vm1694 = vcmp.ne.s32.totalorder %v1590, 0
      %vm1695 = vcmp.ne.s32.totalorder %v1597, 0
      %vm1696 = vcmp.ne.s32.totalorder %v1604, 0
      %vm1697 = vcmp.ne.s32.totalorder %v1611, 0
      %vm1698 = vcmp.ne.s32.totalorder %v1618, 0
      %vm1699 = vcmp.ne.s32.totalorder %v1625, 0
      %vm1700 = vcmp.ne.s32.totalorder %v1632, 0
      %vm1701 = vcmp.ne.s32.totalorder %v1639, 0
      %vm1702 = vcmp.ne.s32.totalorder %v1646, 0
      %vm1703 = vcmp.ne.s32.totalorder %v1653, 0
      %vm1704 = vcmp.ne.s32.totalorder %v1660, 0
      %vm1705 = vcmp.ne.s32.totalorder %v1667, 0
      %vm1706 = vcmp.ne.s32.totalorder %v1674, 0
      %vm1707 = vcmp.lt.s32.totalorder %v1457, 0
      %vm1708 = vcmp.lt.s32.totalorder %v1464, 0
      %vm1709 = vcmp.lt.s32.totalorder %v1471, 0
      %vm1710 = vcmp.lt.s32.totalorder %v1478, 0
      %vm1711 = vcmp.lt.s32.totalorder %v1485, 0
      %vm1712 = vcmp.lt.s32.totalorder %v1492, 0
      %vm1713 = vcmp.lt.s32.totalorder %v1499, 0
      %vm1714 = vcmp.lt.s32.totalorder %v1506, 0
      %vm1715 = vcmp.lt.s32.totalorder %v1513, 0
      %vm1716 = vcmp.lt.s32.totalorder %v1520, 0
      %vm1717 = vcmp.lt.s32.totalorder %v1527, 0
      %vm1718 = vcmp.lt.s32.totalorder %v1534, 0
      %vm1719 = vcmp.lt.s32.totalorder %v1541, 0
      %vm1720 = vcmp.lt.s32.totalorder %v1548, 0
      %vm1721 = vcmp.lt.s32.totalorder %v1555, 0
      %vm1722 = vcmp.lt.s32.totalorder %v1562, 0
      %vm1723 = vcmp.lt.s32.totalorder %v1569, 0
      %vm1724 = vcmp.lt.s32.totalorder %v1576, 0
      %vm1725 = vcmp.lt.s32.totalorder %v1583, 0
      %vm1726 = vcmp.lt.s32.totalorder %v1590, 0
      %vm1727 = vcmp.lt.s32.totalorder %v1597, 0
      %vm1728 = vcmp.lt.s32.totalorder %v1604, 0
      %vm1729 = vcmp.lt.s32.totalorder %v1611, 0
      %vm1730 = vcmp.lt.s32.totalorder %v1618, 0
      %vm1731 = vcmp.lt.s32.totalorder %v1625, 0
      %vm1732 = vcmp.lt.s32.totalorder %v1632, 0
      %vm1733 = vcmp.lt.s32.totalorder %v1639, 0
      %vm1734 = vcmp.lt.s32.totalorder %v1646, 0
      %vm1735 = vcmp.lt.s32.totalorder %v1653, 0
      %vm1736 = vcmp.lt.s32.totalorder %v1660, 0
      %vm1737 = vcmp.lt.s32.totalorder %v1667, 0
      %vm1738 = vcmp.lt.s32.totalorder %v1674, 0
      %vm1739 = vmand %vm1707, %vm1675
      %vm1740 = vmand %vm1708, %vm1676
      %vm1741 = vmand %vm1709, %vm1677
      %vm1742 = vmand %vm1710, %vm1678
      %vm1743 = vmand %vm1711, %vm1679
      %vm1744 = vmand %vm1712, %vm1680
      %vm1745 = vmand %vm1713, %vm1681
      %vm1746 = vmand %vm1714, %vm1682
      %vm1747 = vmand %vm1715, %vm1683
      %vm1748 = vmand %vm1716, %vm1684
      %vm1749 = vmand %vm1717, %vm1685
      %vm1750 = vmand %vm1718, %vm1686
      %vm1751 = vmand %vm1719, %vm1687
      %vm1752 = vmand %vm1720, %vm1688
      %vm1753 = vmand %vm1721, %vm1689
      %vm1754 = vmand %vm1722, %vm1690
      %vm1755 = vmand %vm1723, %vm1691
      %vm1756 = vmand %vm1724, %vm1692
      %vm1757 = vmand %vm1725, %vm1693
      %vm1758 = vmand %vm1726, %vm1694
      %vm1759 = vmand %vm1727, %vm1695
      %vm1760 = vmand %vm1728, %vm1696
      %vm1761 = vmand %vm1729, %vm1697
      %vm1762 = vmand %vm1730, %vm1698
      %vm1763 = vmand %vm1731, %vm1699
      %vm1764 = vmand %vm1732, %vm1700
      %vm1765 = vmand %vm1733, %vm1701
      %vm1766 = vmand %vm1734, %vm1702
      %vm1767 = vmand %vm1735, %vm1703
      %vm1768 = vmand %vm1736, %vm1704
      %vm1769 = vmand %vm1737, %vm1705
      %vm1770 = vmand %vm1738, %vm1706
      %v1771 = vadd.s32 %v1457, 16
      %v1772 = vadd.s32 %v1464, 16
      %v1773 = vadd.s32 %v1471, 16
      %v1774 = vadd.s32 %v1478, 16
      %v1775 = vadd.s32 %v1485, 16
      %v1776 = vadd.s32 %v1492, 16
      %v1777 = vadd.s32 %v1499, 16
      %v1778 = vadd.s32 %v1506, 16
      %v1779 = vadd.s32 %v1513, 16
      %v1780 = vadd.s32 %v1520, 16
      %v1781 = vadd.s32 %v1527, 16
      %v1782 = vadd.s32 %v1534, 16
      %v1783 = vadd.s32 %v1541, 16
      %v1784 = vadd.s32 %v1548, 16
      %v1785 = vadd.s32 %v1555, 16
      %v1786 = vadd.s32 %v1562, 16
      %v1787 = vadd.s32 %v1569, 16
      %v1788 = vadd.s32 %v1576, 16
      %v1789 = vadd.s32 %v1583, 16
      %v1790 = vadd.s32 %v1590, 16
      %v1791 = vadd.s32 %v1597, 16
      %v1792 = vadd.s32 %v1604, 16
      %v1793 = vadd.s32 %v1611, 16
      %v1794 = vadd.s32 %v1618, 16
      %v1795 = vadd.s32 %v1625, 16
      %v1796 = vadd.s32 %v1632, 16
      %v1797 = vadd.s32 %v1639, 16
      %v1798 = vadd.s32 %v1646, 16
      %v1799 = vadd.s32 %v1653, 16
      %v1800 = vadd.s32 %v1660, 16
      %v1801 = vadd.s32 %v1667, 16
      %v1802 = vadd.s32 %v1674, 16
      %v1803 = vsel %vm1739, %v1771, %v1457
      %v1804 = vsel %vm1740, %v1772, %v1464
      %v1805 = vsel %vm1741, %v1773, %v1471
      %v1806 = vsel %vm1742, %v1774, %v1478
      %v1807 = vsel %vm1743, %v1775, %v1485
      %v1808 = vsel %vm1744, %v1776, %v1492
      %v1809 = vsel %vm1745, %v1777, %v1499
      %v1810 = vsel %vm1746, %v1778, %v1506
      %v1811 = vsel %vm1747, %v1779, %v1513
      %v1812 = vsel %vm1748, %v1780, %v1520
      %v1813 = vsel %vm1749, %v1781, %v1527
      %v1814 = vsel %vm1750, %v1782, %v1534
      %v1815 = vsel %vm1751, %v1783, %v1541
      %v1816 = vsel %vm1752, %v1784, %v1548
      %v1817 = vsel %vm1753, %v1785, %v1555
      %v1818 = vsel %vm1754, %v1786, %v1562
      %v1819 = vsel %vm1755, %v1787, %v1569
      %v1820 = vsel %vm1756, %v1788, %v1576
      %v1821 = vsel %vm1757, %v1789, %v1583
      %v1822 = vsel %vm1758, %v1790, %v1590
      %v1823 = vsel %vm1759, %v1791, %v1597
      %v1824 = vsel %vm1760, %v1792, %v1604
      %v1825 = vsel %vm1761, %v1793, %v1611
      %v1826 = vsel %vm1762, %v1794, %v1618
      %v1827 = vsel %vm1763, %v1795, %v1625
      %v1828 = vsel %vm1764, %v1796, %v1632
      %v1829 = vsel %vm1765, %v1797, %v1639
      %v1830 = vsel %vm1766, %v1798, %v1646
      %v1831 = vsel %vm1767, %v1799, %v1653
      %v1832 = vsel %vm1768, %v1800, %v1660
      %v1833 = vsel %vm1769, %v1801, %v1667
      %v1834 = vsel %vm1770, %v1802, %v1674
      %vm1835 = vcmp.ge.s32.totalorder %v1803, 1
      %vm1836 = vcmp.ge.s32.totalorder %v1804, 1
      %vm1837 = vcmp.ge.s32.totalorder %v1805, 1
      %vm1838 = vcmp.ge.s32.totalorder %v1806, 1
      %vm1839 = vcmp.ge.s32.totalorder %v1807, 1
      %vm1840 = vcmp.ge.s32.totalorder %v1808, 1
      %vm1841 = vcmp.ge.s32.totalorder %v1809, 1
      %vm1842 = vcmp.ge.s32.totalorder %v1810, 1
      %vm1843 = vcmp.ge.s32.totalorder %v1811, 1
      %vm1844 = vcmp.ge.s32.totalorder %v1812, 1
      %vm1845 = vcmp.ge.s32.totalorder %v1813, 1
      %vm1846 = vcmp.ge.s32.totalorder %v1814, 1
      %vm1847 = vcmp.ge.s32.totalorder %v1815, 1
      %vm1848 = vcmp.ge.s32.totalorder %v1816, 1
      %vm1849 = vcmp.ge.s32.totalorder %v1817, 1
      %vm1850 = vcmp.ge.s32.totalorder %v1818, 1
      %vm1851 = vcmp.ge.s32.totalorder %v1819, 1
      %vm1852 = vcmp.ge.s32.totalorder %v1820, 1
      %vm1853 = vcmp.ge.s32.totalorder %v1821, 1
      %vm1854 = vcmp.ge.s32.totalorder %v1822, 1
      %vm1855 = vcmp.ge.s32.totalorder %v1823, 1
      %vm1856 = vcmp.ge.s32.totalorder %v1824, 1
      %vm1857 = vcmp.ge.s32.totalorder %v1825, 1
      %vm1858 = vcmp.ge.s32.totalorder %v1826, 1
      %vm1859 = vcmp.ge.s32.totalorder %v1827, 1
      %vm1860 = vcmp.ge.s32.totalorder %v1828, 1
      %vm1861 = vcmp.ge.s32.totalorder %v1829, 1
      %vm1862 = vcmp.ge.s32.totalorder %v1830, 1
      %vm1863 = vcmp.ge.s32.totalorder %v1831, 1
      %vm1864 = vcmp.ge.s32.totalorder %v1832, 1
      %vm1865 = vcmp.ge.s32.totalorder %v1833, 1
      %vm1866 = vcmp.ge.s32.totalorder %v1834, 1
      %v1867 = vsel %vm1835, 1, 0
      %v1868 = vsel %vm1836, 1, 0
      %v1869 = vsel %vm1837, 1, 0
      %v1870 = vsel %vm1838, 1, 0
      %v1871 = vsel %vm1839, 1, 0
      %v1872 = vsel %vm1840, 1, 0
      %v1873 = vsel %vm1841, 1, 0
      %v1874 = vsel %vm1842, 1, 0
      %v1875 = vsel %vm1843, 1, 0
      %v1876 = vsel %vm1844, 1, 0
      %v1877 = vsel %vm1845, 1, 0
      %v1878 = vsel %vm1846, 1, 0
      %v1879 = vsel %vm1847, 1, 0
      %v1880 = vsel %vm1848, 1, 0
      %v1881 = vsel %vm1849, 1, 0
      %v1882 = vsel %vm1850, 1, 0
      %v1883 = vsel %vm1851, 1, 0
      %v1884 = vsel %vm1852, 1, 0
      %v1885 = vsel %vm1853, 1, 0
      %v1886 = vsel %vm1854, 1, 0
      %v1887 = vsel %vm1855, 1, 0
      %v1888 = vsel %vm1856, 1, 0
      %v1889 = vsel %vm1857, 1, 0
      %v1890 = vsel %vm1858, 1, 0
      %v1891 = vsel %vm1859, 1, 0
      %v1892 = vsel %vm1860, 1, 0
      %v1893 = vsel %vm1861, 1, 0
      %v1894 = vsel %vm1862, 1, 0
      %v1895 = vsel %vm1863, 1, 0
      %v1896 = vsel %vm1864, 1, 0
      %v1897 = vsel %vm1865, 1, 0
      %v1898 = vsel %vm1866, 1, 0
      %v1899 = vcvt.s32.f32 %v1867
      %v1900 = vcvt.s32.f32 %v1868
      %v1901 = vcvt.s32.f32 %v1869
      %v1902 = vcvt.s32.f32 %v1870
      %v1903 = vcvt.s32.f32 %v1871
      %v1904 = vcvt.s32.f32 %v1872
      %v1905 = vcvt.s32.f32 %v1873
      %v1906 = vcvt.s32.f32 %v1874
      %v1907 = vcvt.s32.f32 %v1875
      %v1908 = vcvt.s32.f32 %v1876
      %v1909 = vcvt.s32.f32 %v1877
      %v1910 = vcvt.s32.f32 %v1878
      %v1911 = vcvt.s32.f32 %v1879
      %v1912 = vcvt.s32.f32 %v1880
      %v1913 = vcvt.s32.f32 %v1881
      %v1914 = vcvt.s32.f32 %v1882
      %v1915 = vcvt.s32.f32 %v1883
      %v1916 = vcvt.s32.f32 %v1884
      %v1917 = vcvt.s32.f32 %v1885
      %v1918 = vcvt.s32.f32 %v1886
      %v1919 = vcvt.s32.f32 %v1887
      %v1920 = vcvt.s32.f32 %v1888
      %v1921 = vcvt.s32.f32 %v1889
      %v1922 = vcvt.s32.f32 %v1890
      %v1923 = vcvt.s32.f32 %v1891
      %v1924 = vcvt.s32.f32 %v1892
      %v1925 = vcvt.s32.f32 %v1893
      %v1926 = vcvt.s32.f32 %v1894
      %v1927 = vcvt.s32.f32 %v1895
      %v1928 = vcvt.s32.f32 %v1896
      %v1929 = vcvt.s32.f32 %v1897
      %v1930 = vcvt.s32.f32 %v1898
      %vm1931 = vcmp.le.s32.totalorder %v1803, 14
      %vm1932 = vcmp.le.s32.totalorder %v1804, 14
      %vm1933 = vcmp.le.s32.totalorder %v1805, 14
      %vm1934 = vcmp.le.s32.totalorder %v1806, 14
      %vm1935 = vcmp.le.s32.totalorder %v1807, 14
      %vm1936 = vcmp.le.s32.totalorder %v1808, 14
      %vm1937 = vcmp.le.s32.totalorder %v1809, 14
      %vm1938 = vcmp.le.s32.totalorder %v1810, 14
      %vm1939 = vcmp.le.s32.totalorder %v1811, 14
      %vm1940 = vcmp.le.s32.totalorder %v1812, 14
      %vm1941 = vcmp.le.s32.totalorder %v1813, 14
      %vm1942 = vcmp.le.s32.totalorder %v1814, 14
      %vm1943 = vcmp.le.s32.totalorder %v1815, 14
      %vm1944 = vcmp.le.s32.totalorder %v1816, 14
      %vm1945 = vcmp.le.s32.totalorder %v1817, 14
      %vm1946 = vcmp.le.s32.totalorder %v1818, 14
      %vm1947 = vcmp.le.s32.totalorder %v1819, 14
      %vm1948 = vcmp.le.s32.totalorder %v1820, 14
      %vm1949 = vcmp.le.s32.totalorder %v1821, 14
      %vm1950 = vcmp.le.s32.totalorder %v1822, 14
      %vm1951 = vcmp.le.s32.totalorder %v1823, 14
      %vm1952 = vcmp.le.s32.totalorder %v1824, 14
      %vm1953 = vcmp.le.s32.totalorder %v1825, 14
      %vm1954 = vcmp.le.s32.totalorder %v1826, 14
      %vm1955 = vcmp.le.s32.totalorder %v1827, 14
      %vm1956 = vcmp.le.s32.totalorder %v1828, 14
      %vm1957 = vcmp.le.s32.totalorder %v1829, 14
      %vm1958 = vcmp.le.s32.totalorder %v1830, 14
      %vm1959 = vcmp.le.s32.totalorder %v1831, 14
      %vm1960 = vcmp.le.s32.totalorder %v1832, 14
      %vm1961 = vcmp.le.s32.totalorder %v1833, 14
      %vm1962 = vcmp.le.s32.totalorder %v1834, 14
      %v1963 = vsel %vm1931, 1, 0
      %v1964 = vsel %vm1932, 1, 0
      %v1965 = vsel %vm1933, 1, 0
      %v1966 = vsel %vm1934, 1, 0
      %v1967 = vsel %vm1935, 1, 0
      %v1968 = vsel %vm1936, 1, 0
      %v1969 = vsel %vm1937, 1, 0
      %v1970 = vsel %vm1938, 1, 0
      %v1971 = vsel %vm1939, 1, 0
      %v1972 = vsel %vm1940, 1, 0
      %v1973 = vsel %vm1941, 1, 0
      %v1974 = vsel %vm1942, 1, 0
      %v1975 = vsel %vm1943, 1, 0
      %v1976 = vsel %vm1944, 1, 0
      %v1977 = vsel %vm1945, 1, 0
      %v1978 = vsel %vm1946, 1, 0
      %v1979 = vsel %vm1947, 1, 0
      %v1980 = vsel %vm1948, 1, 0
      %v1981 = vsel %vm1949, 1, 0
      %v1982 = vsel %vm1950, 1, 0
      %v1983 = vsel %vm1951, 1, 0
      %v1984 = vsel %vm1952, 1, 0
      %v1985 = vsel %vm1953, 1, 0
      %v1986 = vsel %vm1954, 1, 0
      %v1987 = vsel %vm1955, 1, 0
      %v1988 = vsel %vm1956, 1, 0
      %v1989 = vsel %vm1957, 1, 0
      %v1990 = vsel %vm1958, 1, 0
      %v1991 = vsel %vm1959, 1, 0
      %v1992 = vsel %vm1960, 1, 0
      %v1993 = vsel %vm1961, 1, 0
      %v1994 = vsel %vm1962, 1, 0
      %v1995 = vcvt.s32.f32 %v1963
      %v1996 = vcvt.s32.f32 %v1964
      %v1997 = vcvt.s32.f32 %v1965
      %v1998 = vcvt.s32.f32 %v1966
      %v1999 = vcvt.s32.f32 %v1967
      %v2000 = vcvt.s32.f32 %v1968
      %v2001 = vcvt.s32.f32 %v1969
      %v2002 = vcvt.s32.f32 %v1970
      %v2003 = vcvt.s32.f32 %v1971
      %v2004 = vcvt.s32.f32 %v1972
      %v2005 = vcvt.s32.f32 %v1973
      %v2006 = vcvt.s32.f32 %v1974
      %v2007 = vcvt.s32.f32 %v1975
      %v2008 = vcvt.s32.f32 %v1976
      %v2009 = vcvt.s32.f32 %v1977
      %v2010 = vcvt.s32.f32 %v1978
      %v2011 = vcvt.s32.f32 %v1979
      %v2012 = vcvt.s32.f32 %v1980
      %v2013 = vcvt.s32.f32 %v1981
      %v2014 = vcvt.s32.f32 %v1982
      %v2015 = vcvt.s32.f32 %v1983
      %v2016 = vcvt.s32.f32 %v1984
      %v2017 = vcvt.s32.f32 %v1985
      %v2018 = vcvt.s32.f32 %v1986
      %v2019 = vcvt.s32.f32 %v1987
      %v2020 = vcvt.s32.f32 %v1988
      %v2021 = vcvt.s32.f32 %v1989
      %v2022 = vcvt.s32.f32 %v1990
      %v2023 = vcvt.s32.f32 %v1991
      %v2024 = vcvt.s32.f32 %v1992
      %v2025 = vcvt.s32.f32 %v1993
      %v2026 = vcvt.s32.f32 %v1994
      %vm2059 = vcmask 1046528
      %v2060 = vrot.slane %v1899, 1
      %v2061 = vrot.slane %v1900, 1
      %v2062 = vsel %vm2059, %v2060, %v2061
      %v2063 = vrot.slane %v1901, 1
      %v2064 = vsel %vm2059, %v2061, %v2063
      %v2065 = vrot.slane %v1902, 1
      %v2066 = vsel %vm2059, %v2063, %v2065
      %v2067 = vrot.slane %v1903, 1
      %v2068 = vsel %vm2059, %v2065, %v2067
      %v2069 = vrot.slane %v1904, 1
      %v2070 = vsel %vm2059, %v2067, %v2069
      %v2071 = vrot.slane %v1905, 1
      %v2072 = vsel %vm2059, %v2069, %v2071
      %v2073 = vrot.slane %v1906, 1
      %v2074 = vsel %vm2059, %v2071, %v2073
      %v2075 = vrot.slane %v1907, 1
      %v2076 = vsel %vm2059, %v2073, %v2075
      %v2077 = vrot.slane %v1908, 1
      %v2078 = vsel %vm2059, %v2075, %v2077
      %v2079 = vrot.slane %v1909, 1
      %v2080 = vsel %vm2059, %v2077, %v2079
      %v2081 = vrot.slane %v1910, 1
      %v2082 = vsel %vm2059, %v2079, %v2081
      %v2083 = vrot.slane %v1911, 1
      %v2084 = vsel %vm2059, %v2081, %v2083
      %v2085 = vrot.slane %v1912, 1
      %v2086 = vsel %vm2059, %v2083, %v2085
      %v2087 = vrot.slane %v1913, 1
      %v2088 = vsel %vm2059, %v2085, %v2087
      %v2089 = vrot.slane %v1914, 1
      %v2090 = vsel %vm2059, %v2087, %v2089
      %v2091 = vrot.slane %v1915, 1
      %v2092 = vsel %vm2059, %v2089, %v2091
      %v2093 = vrot.slane %v1916, 1
      %v2094 = vsel %vm2059, %v2091, %v2093
      %v2095 = vrot.slane %v1917, 1
      %v2096 = vsel %vm2059, %v2093, %v2095
      %v2097 = vrot.slane %v1918, 1
      %v2098 = vsel %vm2059, %v2095, %v2097
      %v2099 = vrot.slane %v1919, 1
      %v2100 = vsel %vm2059, %v2097, %v2099
      %v2101 = vrot.slane %v1920, 1
      %v2102 = vsel %vm2059, %v2099, %v2101
      %v2103 = vrot.slane %v1921, 1
      %v2104 = vsel %vm2059, %v2101, %v2103
      %v2105 = vrot.slane %v1922, 1
      %v2106 = vsel %vm2059, %v2103, %v2105
      %v2107 = vrot.slane %v1923, 1
      %v2108 = vsel %vm2059, %v2105, %v2107
      %v2109 = vrot.slane %v1924, 1
      %v2110 = vsel %vm2059, %v2107, %v2109
      %v2111 = vrot.slane %v1925, 1
      %v2112 = vsel %vm2059, %v2109, %v2111
      %v2113 = vrot.slane %v1926, 1
      %v2114 = vsel %vm2059, %v2111, %v2113
      %v2115 = vrot.slane %v1927, 1
      %v2116 = vsel %vm2059, %v2113, %v2115
      %v2117 = vrot.slane %v1928, 1
      %v2118 = vsel %vm2059, %v2115, %v2117
      %v2119 = vrot.slane %v1929, 1
      %v2120 = vsel %vm2059, %v2117, %v2119
      %v2121 = vrot.slane %v1930, 1
      %v2122 = vsel %vm2059, %v2119, %v2121
      %v2156 = vmul.f32 %v2060, 0.0
      %v2157 = vmul.f32 %v2062, 0.0
      %v2158 = vmul.f32 %v2064, 0.0
      %v2159 = vmul.f32 %v1386, %v2066
      %v2160 = vmul.f32 %v1387, %v2068
      %v2161 = vmul.f32 %v1388, %v2070
      %v2162 = vmul.f32 %v1389, %v2072
      %v2163 = vmul.f32 %v1390, %v2074
      %v2164 = vmul.f32 %v1391, %v2076
      %v2165 = vmul.f32 %v1392, %v2078
      %v2166 = vmul.f32 %v1393, %v2080
      %v2167 = vmul.f32 %v1394, %v2082
      %v2168 = vmul.f32 %v1395, %v2084
      %v2169 = vmul.f32 %v1396, %v2086
      %v2170 = vmul.f32 %v1397, %v2088
      %v2171 = vmul.f32 %v1398, %v2090
      %v2172 = vmul.f32 %v1399, %v2092
      %v2173 = vmul.f32 %v1400, %v2094
      %v2174 = vmul.f32 %v1401, %v2096
      %v2175 = vmul.f32 %v1402, %v2098
      %v2176 = vmul.f32 %v1403, %v2100
      %v2177 = vmul.f32 %v1404, %v2102
      %v2178 = vmul.f32 %v1405, %v2104
      %v2179 = vmul.f32 %v1406, %v2106
      %v2180 = vmul.f32 %v1407, %v2108
      %v2181 = vmul.f32 %v1408, %v2110
      %v2182 = vmul.f32 %v1409, %v2112
      %v2183 = vmul.f32 %v1410, %v2114
      %v2184 = vmul.f32 %v1411, %v2116
      %v2185 = vmul.f32 %v1412, %v2118
      %v2186 = vmul.f32 %v1413, %v2120
      %v2187 = vmul.f32 %v1414, %v2122
      %v2188 = vmul.f32 %v1415, %v2121
      %vm2221 = vcmask 1040384
      %v2222 = vrot.slane %v1995, 7
      %v2223 = vrot.slane %v1996, 7
      %v2224 = vsel %vm2221, %v2222, %v2223
      %v2225 = vrot.slane %v1997, 7
      %v2226 = vsel %vm2221, %v2223, %v2225
      %v2227 = vrot.slane %v1998, 7
      %v2228 = vsel %vm2221, %v2225, %v2227
      %v2229 = vrot.slane %v1999, 7
      %v2230 = vsel %vm2221, %v2227, %v2229
      %v2231 = vrot.slane %v2000, 7
      %v2232 = vsel %vm2221, %v2229, %v2231
      %v2233 = vrot.slane %v2001, 7
      %v2234 = vsel %vm2221, %v2231, %v2233
      %v2235 = vrot.slane %v2002, 7
      %v2236 = vsel %vm2221, %v2233, %v2235
      %v2237 = vrot.slane %v2003, 7
      %v2238 = vsel %vm2221, %v2235, %v2237
      %v2239 = vrot.slane %v2004, 7
      %v2240 = vsel %vm2221, %v2237, %v2239
      %v2241 = vrot.slane %v2005, 7
      %v2242 = vsel %vm2221, %v2239, %v2241
      %v2243 = vrot.slane %v2006, 7
      %v2244 = vsel %vm2221, %v2241, %v2243
      %v2245 = vrot.slane %v2007, 7
      %v2246 = vsel %vm2221, %v2243, %v2245
      %v2247 = vrot.slane %v2008, 7
      %v2248 = vsel %vm2221, %v2245, %v2247
      %v2249 = vrot.slane %v2009, 7
      %v2250 = vsel %vm2221, %v2247, %v2249
      %v2251 = vrot.slane %v2010, 7
      %v2252 = vsel %vm2221, %v2249, %v2251
      %v2253 = vrot.slane %v2011, 7
      %v2254 = vsel %vm2221, %v2251, %v2253
      %v2255 = vrot.slane %v2012, 7
      %v2256 = vsel %vm2221, %v2253, %v2255
      %v2257 = vrot.slane %v2013, 7
      %v2258 = vsel %vm2221, %v2255, %v2257
      %v2259 = vrot.slane %v2014, 7
      %v2260 = vsel %vm2221, %v2257, %v2259
      %v2261 = vrot.slane %v2015, 7
      %v2262 = vsel %vm2221, %v2259, %v2261
      %v2263 = vrot.slane %v2016, 7
      %v2264 = vsel %vm2221, %v2261, %v2263
      %v2265 = vrot.slane %v2017, 7
      %v2266 = vsel %vm2221, %v2263, %v2265
      %v2267 = vrot.slane %v2018, 7
      %v2268 = vsel %vm2221, %v2265, %v2267
      %v2269 = vrot.slane %v2019, 7
      %v2270 = vsel %vm2221, %v2267, %v2269
      %v2271 = vrot.slane %v2020, 7
      %v2272 = vsel %vm2221, %v2269, %v2271
      %v2273 = vrot.slane %v2021, 7
      %v2274 = vsel %vm2221, %v2271, %v2273
      %v2275 = vrot.slane %v2022, 7
      %v2276 = vsel %vm2221, %v2273, %v2275
      %v2277 = vrot.slane %v2023, 7
      %v2278 = vsel %vm2221, %v2275, %v2277
      %v2279 = vrot.slane %v2024, 7
      %v2280 = vsel %vm2221, %v2277, %v2279
      %v2281 = vrot.slane %v2025, 7
      %v2282 = vsel %vm2221, %v2279, %v2281
      %v2283 = vrot.slane %v2026, 7
      %v2284 = vsel %vm2221, %v2281, %v2283
      %v2318 = vmul.f32 %v2222, 0.0
      %v2319 = vmul.f32 %v2224, 0.0
      %v2320 = vmul.f32 %v1386, %v2226
      %v2321 = vmul.f32 %v1387, %v2228
      %v2322 = vmul.f32 %v1388, %v2230
      %v2323 = vmul.f32 %v1389, %v2232
      %v2324 = vmul.f32 %v1390, %v2234
      %v2325 = vmul.f32 %v1391, %v2236
      %v2326 = vmul.f32 %v1392, %v2238
      %v2327 = vmul.f32 %v1393, %v2240
      %v2328 = vmul.f32 %v1394, %v2242
      %v2329 = vmul.f32 %v1395, %v2244
      %v2330 = vmul.f32 %v1396, %v2246
      %v2331 = vmul.f32 %v1397, %v2248
      %v2332 = vmul.f32 %v1398, %v2250
      %v2333 = vmul.f32 %v1399, %v2252
      %v2334 = vmul.f32 %v1400, %v2254
      %v2335 = vmul.f32 %v1401, %v2256
      %v2336 = vmul.f32 %v1402, %v2258
      %v2337 = vmul.f32 %v1403, %v2260
      %v2338 = vmul.f32 %v1404, %v2262
      %v2339 = vmul.f32 %v1405, %v2264
      %v2340 = vmul.f32 %v1406, %v2266
      %v2341 = vmul.f32 %v1407, %v2268
      %v2342 = vmul.f32 %v1408, %v2270
      %v2343 = vmul.f32 %v1409, %v2272
      %v2344 = vmul.f32 %v1410, %v2274
      %v2345 = vmul.f32 %v1411, %v2276
      %v2346 = vmul.f32 %v1412, %v2278
      %v2347 = vmul.f32 %v1413, %v2280
      %v2348 = vmul.f32 %v1414, %v2282
      %v2349 = vmul.f32 %v1415, %v2284
      %v2350 = vmul.f32 %v1416, %v2283
      %v2351 = vmul.f32 %v1386, %v2062
      %v2352 = vmul.f32 %v1387, %v2064
      %v2353 = vmul.f32 %v1388, %v2066
      %v2354 = vmul.f32 %v1389, %v2068
      %v2355 = vmul.f32 %v1390, %v2070
      %v2356 = vmul.f32 %v1391, %v2072
      %v2357 = vmul.f32 %v1392, %v2074
      %v2358 = vmul.f32 %v1393, %v2076
      %v2359 = vmul.f32 %v1394, %v2078
      %v2360 = vmul.f32 %v1395, %v2080
      %v2361 = vmul.f32 %v1396, %v2082
      %v2362 = vmul.f32 %v1397, %v2084
      %v2363 = vmul.f32 %v1398, %v2086
      %v2364 = vmul.f32 %v1399, %v2088
      %v2365 = vmul.f32 %v1400, %v2090
      %v2366 = vmul.f32 %v1401, %v2092
      %v2367 = vmul.f32 %v1402, %v2094
      %v2368 = vmul.f32 %v1403, %v2096
      %v2369 = vmul.f32 %v1404, %v2098
      %v2370 = vmul.f32 %v1405, %v2100
      %v2371 = vmul.f32 %v1406, %v2102
      %v2372 = vmul.f32 %v1407, %v2104
      %v2373 = vmul.f32 %v1408, %v2106
      %v2374 = vmul.f32 %v1409, %v2108
      %v2375 = vmul.f32 %v1410, %v2110
      %v2376 = vmul.f32 %v1411, %v2112
      %v2377 = vmul.f32 %v1412, %v2114
      %v2378 = vmul.f32 %v1413, %v2116
      %v2379 = vmul.f32 %v1414, %v2118
      %v2380 = vmul.f32 %v1415, %v2120
      %v2381 = vmul.f32 %v1416, %v2122
      %v2382 = vmul.f32 %v1417, %v2121
      %v2383 = vmul.f32 %v1386, %v2222
      %v2384 = vmul.f32 %v1387, %v2224
      %v2385 = vmul.f32 %v1388, %v2226
      %v2386 = vmul.f32 %v1389, %v2228
      %v2387 = vmul.f32 %v1390, %v2230
      %v2388 = vmul.f32 %v1391, %v2232
      %v2389 = vmul.f32 %v1392, %v2234
      %v2390 = vmul.f32 %v1393, %v2236
      %v2391 = vmul.f32 %v1394, %v2238
      %v2392 = vmul.f32 %v1395, %v2240
      %v2393 = vmul.f32 %v1396, %v2242
      %v2394 = vmul.f32 %v1397, %v2244
      %v2395 = vmul.f32 %v1398, %v2246
      %v2396 = vmul.f32 %v1399, %v2248
      %v2397 = vmul.f32 %v1400, %v2250
      %v2398 = vmul.f32 %v1401, %v2252
      %v2399 = vmul.f32 %v1402, %v2254
      %v2400 = vmul.f32 %v1403, %v2256
      %v2401 = vmul.f32 %v1404, %v2258
      %v2402 = vmul.f32 %v1405, %v2260
      %v2403 = vmul.f32 %v1406, %v2262
      %v2404 = vmul.f32 %v1407, %v2264
      %v2405 = vmul.f32 %v1408, %v2266
      %v2406 = vmul.f32 %v1409, %v2268
      %v2407 = vmul.f32 %v1410, %v2270
      %v2408 = vmul.f32 %v1411, %v2272
      %v2409 = vmul.f32 %v1412, %v2274
      %v2410 = vmul.f32 %v1413, %v2276
      %v2411 = vmul.f32 %v1414, %v2278
      %v2412 = vmul.f32 %v1415, %v2280
      %v2413 = vmul.f32 %v1416, %v2282
      %v2414 = vmul.f32 %v1417, %v2284
      %v2415 = vmul.f32 %v2283, 0.0
      %v2416 = vmul.f32 %v1387, %v2060
      %v2417 = vmul.f32 %v1388, %v2062
      %v2418 = vmul.f32 %v1389, %v2064
      %v2419 = vmul.f32 %v1390, %v2066
      %v2420 = vmul.f32 %v1391, %v2068
      %v2421 = vmul.f32 %v1392, %v2070
      %v2422 = vmul.f32 %v1393, %v2072
      %v2423 = vmul.f32 %v1394, %v2074
      %v2424 = vmul.f32 %v1395, %v2076
      %v2425 = vmul.f32 %v1396, %v2078
      %v2426 = vmul.f32 %v1397, %v2080
      %v2427 = vmul.f32 %v1398, %v2082
      %v2428 = vmul.f32 %v1399, %v2084
      %v2429 = vmul.f32 %v1400, %v2086
      %v2430 = vmul.f32 %v1401, %v2088
      %v2431 = vmul.f32 %v1402, %v2090
      %v2432 = vmul.f32 %v1403, %v2092
      %v2433 = vmul.f32 %v1404, %v2094
      %v2434 = vmul.f32 %v1405, %v2096
      %v2435 = vmul.f32 %v1406, %v2098
      %v2436 = vmul.f32 %v1407, %v2100
      %v2437 = vmul.f32 %v1408, %v2102
      %v2438 = vmul.f32 %v1409, %v2104
      %v2439 = vmul.f32 %v1410, %v2106
      %v2440 = vmul.f32 %v1411, %v2108
      %v2441 = vmul.f32 %v1412, %v2110
      %v2442 = vmul.f32 %v1413, %v2112
      %v2443 = vmul.f32 %v1414, %v2114
      %v2444 = vmul.f32 %v1415, %v2116
      %v2445 = vmul.f32 %v1416, %v2118
      %v2446 = vmul.f32 %v1417, %v2120
      %v2447 = vmul.f32 %v2122, 0.0
      %v2448 = vmul.f32 %v2121, 0.0
      %v2449 = vmul.f32 %v1388, %v2222
      %v2450 = vmul.f32 %v1389, %v2224
      %v2451 = vmul.f32 %v1390, %v2226
      %v2452 = vmul.f32 %v1391, %v2228
      %v2453 = vmul.f32 %v1392, %v2230
      %v2454 = vmul.f32 %v1393, %v2232
      %v2455 = vmul.f32 %v1394, %v2234
      %v2456 = vmul.f32 %v1395, %v2236
      %v2457 = vmul.f32 %v1396, %v2238
      %v2458 = vmul.f32 %v1397, %v2240
      %v2459 = vmul.f32 %v1398, %v2242
      %v2460 = vmul.f32 %v1399, %v2244
      %v2461 = vmul.f32 %v1400, %v2246
      %v2462 = vmul.f32 %v1401, %v2248
      %v2463 = vmul.f32 %v1402, %v2250
      %v2464 = vmul.f32 %v1403, %v2252
      %v2465 = vmul.f32 %v1404, %v2254
      %v2466 = vmul.f32 %v1405, %v2256
      %v2467 = vmul.f32 %v1406, %v2258
      %v2468 = vmul.f32 %v1407, %v2260
      %v2469 = vmul.f32 %v1408, %v2262
      %v2470 = vmul.f32 %v1409, %v2264
      %v2471 = vmul.f32 %v1410, %v2266
      %v2472 = vmul.f32 %v1411, %v2268
      %v2473 = vmul.f32 %v1412, %v2270
      %v2474 = vmul.f32 %v1413, %v2272
      %v2475 = vmul.f32 %v1414, %v2274
      %v2476 = vmul.f32 %v1415, %v2276
      %v2477 = vmul.f32 %v1416, %v2278
      %v2478 = vmul.f32 %v1417, %v2280
      %v2479 = vmul.f32 %v2282, 0.0
      %v2480 = vmul.f32 %v2284, 0.0
      %v2512 = vrot.slane 0.0, 1
      %v2513 = vsel %vm2059, %v2512, %v2512
      %v2514 = vrot.slane %v1386, 1
      %v2515 = vsel %vm2059, %v2512, %v2514
      %v2516 = vrot.slane %v1387, 1
      %v2517 = vsel %vm2059, %v2514, %v2516
      %v2518 = vrot.slane %v1388, 1
      %v2519 = vsel %vm2059, %v2516, %v2518
      %v2520 = vrot.slane %v1389, 1
      %v2521 = vsel %vm2059, %v2518, %v2520
      %v2522 = vrot.slane %v1390, 1
      %v2523 = vsel %vm2059, %v2520, %v2522
      %v2524 = vrot.slane %v1391, 1
      %v2525 = vsel %vm2059, %v2522, %v2524
      %v2526 = vrot.slane %v1392, 1
      %v2527 = vsel %vm2059, %v2524, %v2526
      %v2528 = vrot.slane %v1393, 1
      %v2529 = vsel %vm2059, %v2526, %v2528
      %v2530 = vrot.slane %v1394, 1
      %v2531 = vsel %vm2059, %v2528, %v2530
      %v2532 = vrot.slane %v1395, 1
      %v2533 = vsel %vm2059, %v2530, %v2532
      %v2534 = vrot.slane %v1396, 1
      %v2535 = vsel %vm2059, %v2532, %v2534
      %v2536 = vrot.slane %v1397, 1
      %v2537 = vsel %vm2059, %v2534, %v2536
      %v2538 = vrot.slane %v1398, 1
      %v2539 = vsel %vm2059, %v2536, %v2538
      %v2540 = vrot.slane %v1399, 1
      %v2541 = vsel %vm2059, %v2538, %v2540
      %v2542 = vrot.slane %v1400, 1
      %v2543 = vsel %vm2059, %v2540, %v2542
      %v2544 = vrot.slane %v1401, 1
      %v2545 = vsel %vm2059, %v2542, %v2544
      %v2546 = vrot.slane %v1402, 1
      %v2547 = vsel %vm2059, %v2544, %v2546
      %v2548 = vrot.slane %v1403, 1
      %v2549 = vsel %vm2059, %v2546, %v2548
      %v2550 = vrot.slane %v1404, 1
      %v2551 = vsel %vm2059, %v2548, %v2550
      %v2552 = vrot.slane %v1405, 1
      %v2553 = vsel %vm2059, %v2550, %v2552
      %v2554 = vrot.slane %v1406, 1
      %v2555 = vsel %vm2059, %v2552, %v2554
      %v2556 = vrot.slane %v1407, 1
      %v2557 = vsel %vm2059, %v2554, %v2556
      %v2558 = vrot.slane %v1408, 1
      %v2559 = vsel %vm2059, %v2556, %v2558
      %v2560 = vrot.slane %v1409, 1
      %v2561 = vsel %vm2059, %v2558, %v2560
      %v2562 = vrot.slane %v1410, 1
      %v2563 = vsel %vm2059, %v2560, %v2562
      %v2564 = vrot.slane %v1411, 1
      %v2565 = vsel %vm2059, %v2562, %v2564
      %v2566 = vrot.slane %v1412, 1
      %v2567 = vsel %vm2059, %v2564, %v2566
      %v2568 = vrot.slane %v1413, 1
      %v2569 = vsel %vm2059, %v2566, %v2568
      %v2570 = vrot.slane %v1414, 1
      %v2571 = vsel %vm2059, %v2568, %v2570
      %v2572 = vrot.slane %v1415, 1
      %v2573 = vsel %vm2059, %v2570, %v2572
      %2574 = vrot.lane.b32.xlu0 %v2512, 32
      %v2575 = vpop.permute.xlu0 %2574
      %2576 = vrot.lane.b32.xlu0 %v2513, 32
      %v2577 = vpop.permute.xlu0 %2576
      %2578 = vrot.lane.b32.xlu0 %v2515, 32
      %v2579 = vpop.permute.xlu0 %2578
      %2580 = vrot.lane.b32.xlu0 %v2517, 32
      %v2581 = vpop.permute.xlu0 %2580
      %2582 = vrot.lane.b32.xlu0 %v2519, 32
      %v2583 = vpop.permute.xlu0 %2582
      %2584 = vrot.lane.b32.xlu0 %v2521, 32
      %v2585 = vpop.permute.xlu0 %2584
      %2586 = vrot.lane.b32.xlu0 %v2523, 32
      %v2587 = vpop.permute.xlu0 %2586
      %2588 = vrot.lane.b32.xlu0 %v2525, 32
      %v2589 = vpop.permute.xlu0 %2588
      %2590 = vrot.lane.b32.xlu0 %v2527, 32
      %v2591 = vpop.permute.xlu0 %2590
      %2592 = vrot.lane.b32.xlu0 %v2529, 32
      %v2593 = vpop.permute.xlu0 %2592
      %2594 = vrot.lane.b32.xlu0 %v2531, 32
      %v2595 = vpop.permute.xlu0 %2594
      %2596 = vrot.lane.b32.xlu0 %v2533, 32
      %v2597 = vpop.permute.xlu0 %2596
      %2598 = vrot.lane.b32.xlu0 %v2535, 32
      %v2599 = vpop.permute.xlu0 %2598
      %2600 = vrot.lane.b32.xlu0 %v2537, 32
      %v2601 = vpop.permute.xlu0 %2600
      %2602 = vrot.lane.b32.xlu0 %v2539, 32
      %v2603 = vpop.permute.xlu0 %2602
      %2604 = vrot.lane.b32.xlu0 %v2541, 32
      %v2605 = vpop.permute.xlu0 %2604
      %2606 = vrot.lane.b32.xlu0 %v2543, 32
      %v2607 = vpop.permute.xlu0 %2606
      %2608 = vrot.lane.b32.xlu0 %v2545, 32
      %v2609 = vpop.permute.xlu0 %2608
      %2610 = vrot.lane.b32.xlu0 %v2547, 32
      %v2611 = vpop.permute.xlu0 %2610
      %2612 = vrot.lane.b32.xlu0 %v2549, 32
      %v2613 = vpop.permute.xlu0 %2612
      %2614 = vrot.lane.b32.xlu0 %v2551, 32
      %v2615 = vpop.permute.xlu0 %2614
      %2616 = vrot.lane.b32.xlu0 %v2553, 32
      %v2617 = vpop.permute.xlu0 %2616
      %2618 = vrot.lane.b32.xlu0 %v2555, 32
      %v2619 = vpop.permute.xlu0 %2618
      %2620 = vrot.lane.b32.xlu0 %v2557, 32
      %v2621 = vpop.permute.xlu0 %2620
      %2622 = vrot.lane.b32.xlu0 %v2559, 32
      %v2623 = vpop.permute.xlu0 %2622
      %2624 = vrot.lane.b32.xlu0 %v2561, 32
      %v2625 = vpop.permute.xlu0 %2624
      %2626 = vrot.lane.b32.xlu0 %v2563, 32
      %v2627 = vpop.permute.xlu0 %2626
      %2628 = vrot.lane.b32.xlu0 %v2565, 32
      %v2629 = vpop.permute.xlu0 %2628
      %2630 = vrot.lane.b32.xlu0 %v2567, 32
      %v2631 = vpop.permute.xlu0 %2630
      %2632 = vrot.lane.b32.xlu0 %v2569, 32
      %v2633 = vpop.permute.xlu0 %2632
      %2634 = vrot.lane.b32.xlu0 %v2571, 32
      %v2635 = vpop.permute.xlu0 %2634
      %2636 = vrot.lane.b32.xlu0 %v2573, 32
      %v2637 = vpop.permute.xlu0 %2636
      %2638 = vrot.lane.b32.xlu0 %v2572, 32
      %v2639 = vpop.permute.xlu0 %2638
      %vm2706 = vcmask 1045504
      %v2707 = vrot.slane %v2318, 2
      %v2708 = vrot.slane %v2319, 2
      %v2709 = vsel %vm2706, %v2707, %v2708
      %v2710 = vrot.slane %v2320, 2
      %v2711 = vsel %vm2706, %v2708, %v2710
      %v2712 = vrot.slane %v2321, 2
      %v2713 = vsel %vm2706, %v2710, %v2712
      %v2714 = vrot.slane %v2322, 2
      %v2715 = vsel %vm2706, %v2712, %v2714
      %v2716 = vrot.slane %v2323, 2
      %v2717 = vsel %vm2706, %v2714, %v2716
      %v2718 = vrot.slane %v2324, 2
      %v2719 = vsel %vm2706, %v2716, %v2718
      %v2720 = vrot.slane %v2325, 2
      %v2721 = vsel %vm2706, %v2718, %v2720
      %v2722 = vrot.slane %v2326, 2
      %v2723 = vsel %vm2706, %v2720, %v2722
      %v2724 = vrot.slane %v2327, 2
      %v2725 = vsel %vm2706, %v2722, %v2724
      %v2726 = vrot.slane %v2328, 2
      %v2727 = vsel %vm2706, %v2724, %v2726
      %v2728 = vrot.slane %v2329, 2
      %v2729 = vsel %vm2706, %v2726, %v2728
      %v2730 = vrot.slane %v2330, 2
      %v2731 = vsel %vm2706, %v2728, %v2730
      %v2732 = vrot.slane %v2331, 2
      %v2733 = vsel %vm2706, %v2730, %v2732
      %v2734 = vrot.slane %v2332, 2
      %v2735 = vsel %vm2706, %v2732, %v2734
      %v2736 = vrot.slane %v2333, 2
      %v2737 = vsel %vm2706, %v2734, %v2736
      %v2738 = vrot.slane %v2334, 2
      %v2739 = vsel %vm2706, %v2736, %v2738
      %v2740 = vrot.slane %v2335, 2
      %v2741 = vsel %vm2706, %v2738, %v2740
      %v2742 = vrot.slane %v2336, 2
      %v2743 = vsel %vm2706, %v2740, %v2742
      %v2744 = vrot.slane %v2337, 2
      %v2745 = vsel %vm2706, %v2742, %v2744
      %v2746 = vrot.slane %v2338, 2
      %v2747 = vsel %vm2706, %v2744, %v2746
      %v2748 = vrot.slane %v2339, 2
      %v2749 = vsel %vm2706, %v2746, %v2748
      %v2750 = vrot.slane %v2340, 2
      %v2751 = vsel %vm2706, %v2748, %v2750
      %v2752 = vrot.slane %v2341, 2
      %v2753 = vsel %vm2706, %v2750, %v2752
      %v2754 = vrot.slane %v2342, 2
      %v2755 = vsel %vm2706, %v2752, %v2754
      %v2756 = vrot.slane %v2343, 2
      %v2757 = vsel %vm2706, %v2754, %v2756
      %v2758 = vrot.slane %v2344, 2
      %v2759 = vsel %vm2706, %v2756, %v2758
      %v2760 = vrot.slane %v2345, 2
      %v2761 = vsel %vm2706, %v2758, %v2760
      %v2762 = vrot.slane %v2346, 2
      %v2763 = vsel %vm2706, %v2760, %v2762
      %v2764 = vrot.slane %v2347, 2
      %v2765 = vsel %vm2706, %v2762, %v2764
      %v2766 = vrot.slane %v2348, 2
      %v2767 = vsel %vm2706, %v2764, %v2766
      %v2768 = vrot.slane %v2349, 2
      %v2769 = vsel %vm2706, %v2766, %v2768
      %v2770 = vrot.slane %v2350, 2
      %v2771 = vsel %vm2706, %v2768, %v2770
      %2772 = vrot.lane.b32.xlu0 %v2707, 64
      %v2773 = vpop.permute.xlu0 %2772
      %2774 = vrot.lane.b32.xlu0 %v2709, 64
      %v2775 = vpop.permute.xlu0 %2774
      %2776 = vrot.lane.b32.xlu0 %v2711, 64
      %v2777 = vpop.permute.xlu0 %2776
      %2778 = vrot.lane.b32.xlu0 %v2713, 64
      %v2779 = vpop.permute.xlu0 %2778
      %2780 = vrot.lane.b32.xlu0 %v2715, 64
      %v2781 = vpop.permute.xlu0 %2780
      %2782 = vrot.lane.b32.xlu0 %v2717, 64
      %v2783 = vpop.permute.xlu0 %2782
      %2784 = vrot.lane.b32.xlu0 %v2719, 64
      %v2785 = vpop.permute.xlu0 %2784
      %2786 = vrot.lane.b32.xlu0 %v2721, 64
      %v2787 = vpop.permute.xlu0 %2786
      %2788 = vrot.lane.b32.xlu0 %v2723, 64
      %v2789 = vpop.permute.xlu0 %2788
      %2790 = vrot.lane.b32.xlu0 %v2725, 64
      %v2791 = vpop.permute.xlu0 %2790
      %2792 = vrot.lane.b32.xlu0 %v2727, 64
      %v2793 = vpop.permute.xlu0 %2792
      %2794 = vrot.lane.b32.xlu0 %v2729, 64
      %v2795 = vpop.permute.xlu0 %2794
      %2796 = vrot.lane.b32.xlu0 %v2731, 64
      %v2797 = vpop.permute.xlu0 %2796
      %2798 = vrot.lane.b32.xlu0 %v2733, 64
      %v2799 = vpop.permute.xlu0 %2798
      %2800 = vrot.lane.b32.xlu0 %v2735, 64
      %v2801 = vpop.permute.xlu0 %2800
      %2802 = vrot.lane.b32.xlu0 %v2737, 64
      %v2803 = vpop.permute.xlu0 %2802
      %2804 = vrot.lane.b32.xlu0 %v2739, 64
      %v2805 = vpop.permute.xlu0 %2804
      %2806 = vrot.lane.b32.xlu0 %v2741, 64
      %v2807 = vpop.permute.xlu0 %2806
      %2808 = vrot.lane.b32.xlu0 %v2743, 64
      %v2809 = vpop.permute.xlu0 %2808
      %2810 = vrot.lane.b32.xlu0 %v2745, 64
      %v2811 = vpop.permute.xlu0 %2810
      %2812 = vrot.lane.b32.xlu0 %v2747, 64
      %v2813 = vpop.permute.xlu0 %2812
      %2814 = vrot.lane.b32.xlu0 %v2749, 64
      %v2815 = vpop.permute.xlu0 %2814
      %2816 = vrot.lane.b32.xlu0 %v2751, 64
      %v2817 = vpop.permute.xlu0 %2816
      %2818 = vrot.lane.b32.xlu0 %v2753, 64
      %v2819 = vpop.permute.xlu0 %2818
      %2820 = vrot.lane.b32.xlu0 %v2755, 64
      %v2821 = vpop.permute.xlu0 %2820
      %2822 = vrot.lane.b32.xlu0 %v2757, 64
      %v2823 = vpop.permute.xlu0 %2822
      %2824 = vrot.lane.b32.xlu0 %v2759, 64
      %v2825 = vpop.permute.xlu0 %2824
      %2826 = vrot.lane.b32.xlu0 %v2761, 64
      %v2827 = vpop.permute.xlu0 %2826
      %2828 = vrot.lane.b32.xlu0 %v2763, 64
      %v2829 = vpop.permute.xlu0 %2828
      %2830 = vrot.lane.b32.xlu0 %v2765, 64
      %v2831 = vpop.permute.xlu0 %2830
      %2832 = vrot.lane.b32.xlu0 %v2767, 64
      %v2833 = vpop.permute.xlu0 %2832
      %2834 = vrot.lane.b32.xlu0 %v2769, 64
      %v2835 = vpop.permute.xlu0 %2834
      %2836 = vrot.lane.b32.xlu0 %v2771, 64
      %v2837 = vpop.permute.xlu0 %2836
      %2904 = vrot.lane.b32.xlu0 %v2156, 96
      %v2905 = vpop.permute.xlu0 %2904
      %2906 = vrot.lane.b32.xlu0 %v2351, 96
      %v2907 = vpop.permute.xlu0 %2906
      %2908 = vrot.lane.b32.xlu0 %v2352, 96
      %v2909 = vpop.permute.xlu0 %2908
      %2910 = vrot.lane.b32.xlu0 %v2353, 96
      %v2911 = vpop.permute.xlu0 %2910
      %2912 = vrot.lane.b32.xlu0 %v2354, 96
      %v2913 = vpop.permute.xlu0 %2912
      %2914 = vrot.lane.b32.xlu0 %v2355, 96
      %v2915 = vpop.permute.xlu0 %2914
      %2916 = vrot.lane.b32.xlu0 %v2356, 96
      %v2917 = vpop.permute.xlu0 %2916
      %2918 = vrot.lane.b32.xlu0 %v2357, 96
      %v2919 = vpop.permute.xlu0 %2918
      %2920 = vrot.lane.b32.xlu0 %v2358, 96
      %v2921 = vpop.permute.xlu0 %2920
      %2922 = vrot.lane.b32.xlu0 %v2359, 96
      %v2923 = vpop.permute.xlu0 %2922
      %2924 = vrot.lane.b32.xlu0 %v2360, 96
      %v2925 = vpop.permute.xlu0 %2924
      %2926 = vrot.lane.b32.xlu0 %v2361, 96
      %v2927 = vpop.permute.xlu0 %2926
      %2928 = vrot.lane.b32.xlu0 %v2362, 96
      %v2929 = vpop.permute.xlu0 %2928
      %2930 = vrot.lane.b32.xlu0 %v2363, 96
      %v2931 = vpop.permute.xlu0 %2930
      %2932 = vrot.lane.b32.xlu0 %v2364, 96
      %v2933 = vpop.permute.xlu0 %2932
      %2934 = vrot.lane.b32.xlu0 %v2365, 96
      %v2935 = vpop.permute.xlu0 %2934
      %2936 = vrot.lane.b32.xlu0 %v2366, 96
      %v2937 = vpop.permute.xlu0 %2936
      %2938 = vrot.lane.b32.xlu0 %v2367, 96
      %v2939 = vpop.permute.xlu0 %2938
      %2940 = vrot.lane.b32.xlu0 %v2368, 96
      %v2941 = vpop.permute.xlu0 %2940
      %2942 = vrot.lane.b32.xlu0 %v2369, 96
      %v2943 = vpop.permute.xlu0 %2942
      %2944 = vrot.lane.b32.xlu0 %v2370, 96
      %v2945 = vpop.permute.xlu0 %2944
      %2946 = vrot.lane.b32.xlu0 %v2371, 96
      %v2947 = vpop.permute.xlu0 %2946
      %2948 = vrot.lane.b32.xlu0 %v2372, 96
      %v2949 = vpop.permute.xlu0 %2948
      %2950 = vrot.lane.b32.xlu0 %v2373, 96
      %v2951 = vpop.permute.xlu0 %2950
      %2952 = vrot.lane.b32.xlu0 %v2374, 96
      %v2953 = vpop.permute.xlu0 %2952
      %2954 = vrot.lane.b32.xlu0 %v2375, 96
      %v2955 = vpop.permute.xlu0 %2954
      %2956 = vrot.lane.b32.xlu0 %v2376, 96
      %v2957 = vpop.permute.xlu0 %2956
      %2958 = vrot.lane.b32.xlu0 %v2377, 96
      %v2959 = vpop.permute.xlu0 %2958
      %2960 = vrot.lane.b32.xlu0 %v2378, 96
      %v2961 = vpop.permute.xlu0 %2960
      %2962 = vrot.lane.b32.xlu0 %v2379, 96
      %v2963 = vpop.permute.xlu0 %2962
      %2964 = vrot.lane.b32.xlu0 %v2380, 96
      %v2965 = vpop.permute.xlu0 %2964
      %2966 = vrot.lane.b32.xlu0 %v2381, 96
      %v2967 = vpop.permute.xlu0 %2966
      %2968 = vrot.lane.b32.xlu0 %v2382, 96
      %v2969 = vpop.permute.xlu0 %2968
      %v3005 = vrot.slane %v1416, 1
      %v3006 = vsel %vm2059, %v2572, %v3005
      %v3007 = vrot.slane %v1417, 1
      %v3008 = vsel %vm2059, %v3005, %v3007
      %v3075 = vrot.slane %v2383, 2
      %v3076 = vrot.slane %v2384, 2
      %v3077 = vsel %vm2706, %v3075, %v3076
      %v3078 = vrot.slane %v2385, 2
      %v3079 = vsel %vm2706, %v3076, %v3078
      %v3080 = vrot.slane %v2386, 2
      %v3081 = vsel %vm2706, %v3078, %v3080
      %v3082 = vrot.slane %v2387, 2
      %v3083 = vsel %vm2706, %v3080, %v3082
      %v3084 = vrot.slane %v2388, 2
      %v3085 = vsel %vm2706, %v3082, %v3084
      %v3086 = vrot.slane %v2389, 2
      %v3087 = vsel %vm2706, %v3084, %v3086
      %v3088 = vrot.slane %v2390, 2
      %v3089 = vsel %vm2706, %v3086, %v3088
      %v3090 = vrot.slane %v2391, 2
      %v3091 = vsel %vm2706, %v3088, %v3090
      %v3092 = vrot.slane %v2392, 2
      %v3093 = vsel %vm2706, %v3090, %v3092
      %v3094 = vrot.slane %v2393, 2
      %v3095 = vsel %vm2706, %v3092, %v3094
      %v3096 = vrot.slane %v2394, 2
      %v3097 = vsel %vm2706, %v3094, %v3096
      %v3098 = vrot.slane %v2395, 2
      %v3099 = vsel %vm2706, %v3096, %v3098
      %v3100 = vrot.slane %v2396, 2
      %v3101 = vsel %vm2706, %v3098, %v3100
      %v3102 = vrot.slane %v2397, 2
      %v3103 = vsel %vm2706, %v3100, %v3102
      %v3104 = vrot.slane %v2398, 2
      %v3105 = vsel %vm2706, %v3102, %v3104
      %v3106 = vrot.slane %v2399, 2
      %v3107 = vsel %vm2706, %v3104, %v3106
      %v3108 = vrot.slane %v2400, 2
      %v3109 = vsel %vm2706, %v3106, %v3108
      %v3110 = vrot.slane %v2401, 2
      %v3111 = vsel %vm2706, %v3108, %v3110
      %v3112 = vrot.slane %v2402, 2
      %v3113 = vsel %vm2706, %v3110, %v3112
      %v3114 = vrot.slane %v2403, 2
      %v3115 = vsel %vm2706, %v3112, %v3114
      %v3116 = vrot.slane %v2404, 2
      %v3117 = vsel %vm2706, %v3114, %v3116
      %v3118 = vrot.slane %v2405, 2
      %v3119 = vsel %vm2706, %v3116, %v3118
      %v3120 = vrot.slane %v2406, 2
      %v3121 = vsel %vm2706, %v3118, %v3120
      %v3122 = vrot.slane %v2407, 2
      %v3123 = vsel %vm2706, %v3120, %v3122
      %v3124 = vrot.slane %v2408, 2
      %v3125 = vsel %vm2706, %v3122, %v3124
      %v3126 = vrot.slane %v2409, 2
      %v3127 = vsel %vm2706, %v3124, %v3126
      %v3128 = vrot.slane %v2410, 2
      %v3129 = vsel %vm2706, %v3126, %v3128
      %v3130 = vrot.slane %v2411, 2
      %v3131 = vsel %vm2706, %v3128, %v3130
      %v3132 = vrot.slane %v2412, 2
      %v3133 = vsel %vm2706, %v3130, %v3132
      %v3134 = vrot.slane %v2413, 2
      %v3135 = vsel %vm2706, %v3132, %v3134
      %v3136 = vrot.slane %v2414, 2
      %v3137 = vsel %vm2706, %v3134, %v3136
      %v3138 = vrot.slane %v2415, 2
      %v3139 = vsel %vm2706, %v3136, %v3138
      %3140 = vrot.lane.b32.xlu0 %v3075, 32
      %v3141 = vpop.permute.xlu0 %3140
      %3142 = vrot.lane.b32.xlu0 %v3077, 32
      %v3143 = vpop.permute.xlu0 %3142
      %3144 = vrot.lane.b32.xlu0 %v3079, 32
      %v3145 = vpop.permute.xlu0 %3144
      %3146 = vrot.lane.b32.xlu0 %v3081, 32
      %v3147 = vpop.permute.xlu0 %3146
      %3148 = vrot.lane.b32.xlu0 %v3083, 32
      %v3149 = vpop.permute.xlu0 %3148
      %3150 = vrot.lane.b32.xlu0 %v3085, 32
      %v3151 = vpop.permute.xlu0 %3150
      %3152 = vrot.lane.b32.xlu0 %v3087, 32
      %v3153 = vpop.permute.xlu0 %3152
      %3154 = vrot.lane.b32.xlu0 %v3089, 32
      %v3155 = vpop.permute.xlu0 %3154
      %3156 = vrot.lane.b32.xlu0 %v3091, 32
      %v3157 = vpop.permute.xlu0 %3156
      %3158 = vrot.lane.b32.xlu0 %v3093, 32
      %v3159 = vpop.permute.xlu0 %3158
      %3160 = vrot.lane.b32.xlu0 %v3095, 32
      %v3161 = vpop.permute.xlu0 %3160
      %3162 = vrot.lane.b32.xlu0 %v3097, 32
      %v3163 = vpop.permute.xlu0 %3162
      %3164 = vrot.lane.b32.xlu0 %v3099, 32
      %v3165 = vpop.permute.xlu0 %3164
      %3166 = vrot.lane.b32.xlu0 %v3101, 32
      %v3167 = vpop.permute.xlu0 %3166
      %3168 = vrot.lane.b32.xlu0 %v3103, 32
      %v3169 = vpop.permute.xlu0 %3168
      %3170 = vrot.lane.b32.xlu0 %v3105, 32
      %v3171 = vpop.permute.xlu0 %3170
      %3172 = vrot.lane.b32.xlu0 %v3107, 32
      %v3173 = vpop.permute.xlu0 %3172
      %3174 = vrot.lane.b32.xlu0 %v3109, 32
      %v3175 = vpop.permute.xlu0 %3174
      %3176 = vrot.lane.b32.xlu0 %v3111, 32
      %v3177 = vpop.permute.xlu0 %3176
      %3178 = vrot.lane.b32.xlu0 %v3113, 32
      %v3179 = vpop.permute.xlu0 %3178
      %3180 = vrot.lane.b32.xlu0 %v3115, 32
      %v3181 = vpop.permute.xlu0 %3180
      %3182 = vrot.lane.b32.xlu0 %v3117, 32
      %v3183 = vpop.permute.xlu0 %3182
      %3184 = vrot.lane.b32.xlu0 %v3119, 32
      %v3185 = vpop.permute.xlu0 %3184
      %3186 = vrot.lane.b32.xlu0 %v3121, 32
      %v3187 = vpop.permute.xlu0 %3186
      %3188 = vrot.lane.b32.xlu0 %v3123, 32
      %v3189 = vpop.permute.xlu0 %3188
      %3190 = vrot.lane.b32.xlu0 %v3125, 32
      %v3191 = vpop.permute.xlu0 %3190
      %3192 = vrot.lane.b32.xlu0 %v3127, 32
      %v3193 = vpop.permute.xlu0 %3192
      %3194 = vrot.lane.b32.xlu0 %v3129, 32
      %v3195 = vpop.permute.xlu0 %3194
      %3196 = vrot.lane.b32.xlu0 %v3131, 32
      %v3197 = vpop.permute.xlu0 %3196
      %3198 = vrot.lane.b32.xlu0 %v3133, 32
      %v3199 = vpop.permute.xlu0 %3198
      %3200 = vrot.lane.b32.xlu0 %v3135, 32
      %v3201 = vpop.permute.xlu0 %3200
      %3202 = vrot.lane.b32.xlu0 %v3137, 32
      %v3203 = vpop.permute.xlu0 %3202
      %3204 = vrot.lane.b32.xlu0 %v3139, 32
      %v3205 = vpop.permute.xlu0 %3204
      %3272 = vrot.lane.b32.xlu0 %v2416, 64
      %v3273 = vpop.permute.xlu0 %3272
      %3274 = vrot.lane.b32.xlu0 %v2417, 64
      %v3275 = vpop.permute.xlu0 %3274
      %3276 = vrot.lane.b32.xlu0 %v2418, 64
      %v3277 = vpop.permute.xlu0 %3276
      %3278 = vrot.lane.b32.xlu0 %v2419, 64
      %v3279 = vpop.permute.xlu0 %3278
      %3280 = vrot.lane.b32.xlu0 %v2420, 64
      %v3281 = vpop.permute.xlu0 %3280
      %3282 = vrot.lane.b32.xlu0 %v2421, 64
      %v3283 = vpop.permute.xlu0 %3282
      %3284 = vrot.lane.b32.xlu0 %v2422, 64
      %v3285 = vpop.permute.xlu0 %3284
      %3286 = vrot.lane.b32.xlu0 %v2423, 64
      %v3287 = vpop.permute.xlu0 %3286
      %3288 = vrot.lane.b32.xlu0 %v2424, 64
      %v3289 = vpop.permute.xlu0 %3288
      %3290 = vrot.lane.b32.xlu0 %v2425, 64
      %v3291 = vpop.permute.xlu0 %3290
      %3292 = vrot.lane.b32.xlu0 %v2426, 64
      %v3293 = vpop.permute.xlu0 %3292
      %3294 = vrot.lane.b32.xlu0 %v2427, 64
      %v3295 = vpop.permute.xlu0 %3294
      %3296 = vrot.lane.b32.xlu0 %v2428, 64
      %v3297 = vpop.permute.xlu0 %3296
      %3298 = vrot.lane.b32.xlu0 %v2429, 64
      %v3299 = vpop.permute.xlu0 %3298
      %3300 = vrot.lane.b32.xlu0 %v2430, 64
      %v3301 = vpop.permute.xlu0 %3300
      %3302 = vrot.lane.b32.xlu0 %v2431, 64
      %v3303 = vpop.permute.xlu0 %3302
      %3304 = vrot.lane.b32.xlu0 %v2432, 64
      %v3305 = vpop.permute.xlu0 %3304
      %3306 = vrot.lane.b32.xlu0 %v2433, 64
      %v3307 = vpop.permute.xlu0 %3306
      %3308 = vrot.lane.b32.xlu0 %v2434, 64
      %v3309 = vpop.permute.xlu0 %3308
      %3310 = vrot.lane.b32.xlu0 %v2435, 64
      %v3311 = vpop.permute.xlu0 %3310
      %3312 = vrot.lane.b32.xlu0 %v2436, 64
      %v3313 = vpop.permute.xlu0 %3312
      %3314 = vrot.lane.b32.xlu0 %v2437, 64
      %v3315 = vpop.permute.xlu0 %3314
      %3316 = vrot.lane.b32.xlu0 %v2438, 64
      %v3317 = vpop.permute.xlu0 %3316
      %3318 = vrot.lane.b32.xlu0 %v2439, 64
      %v3319 = vpop.permute.xlu0 %3318
      %3320 = vrot.lane.b32.xlu0 %v2440, 64
      %v3321 = vpop.permute.xlu0 %3320
      %3322 = vrot.lane.b32.xlu0 %v2441, 64
      %v3323 = vpop.permute.xlu0 %3322
      %3324 = vrot.lane.b32.xlu0 %v2442, 64
      %v3325 = vpop.permute.xlu0 %3324
      %3326 = vrot.lane.b32.xlu0 %v2443, 64
      %v3327 = vpop.permute.xlu0 %3326
      %3328 = vrot.lane.b32.xlu0 %v2444, 64
      %v3329 = vpop.permute.xlu0 %3328
      %3330 = vrot.lane.b32.xlu0 %v2445, 64
      %v3331 = vpop.permute.xlu0 %3330
      %3332 = vrot.lane.b32.xlu0 %v2446, 64
      %v3333 = vpop.permute.xlu0 %3332
      %3334 = vrot.lane.b32.xlu0 %v2447, 64
      %v3335 = vpop.permute.xlu0 %3334
      %3336 = vrot.lane.b32.xlu0 %v2448, 64
      %v3337 = vpop.permute.xlu0 %3336
      %v3371 = vsel %vm2059, %v3007, %v2512
      %3372 = vrot.lane.b32.xlu0 %v2518, 96
      %v3373 = vpop.permute.xlu0 %3372
      %3374 = vrot.lane.b32.xlu0 %v2521, 96
      %v3375 = vpop.permute.xlu0 %3374
      %3376 = vrot.lane.b32.xlu0 %v2523, 96
      %v3377 = vpop.permute.xlu0 %3376
      %3378 = vrot.lane.b32.xlu0 %v2525, 96
      %v3379 = vpop.permute.xlu0 %3378
      %3380 = vrot.lane.b32.xlu0 %v2527, 96
      %v3381 = vpop.permute.xlu0 %3380
      %3382 = vrot.lane.b32.xlu0 %v2529, 96
      %v3383 = vpop.permute.xlu0 %3382
      %3384 = vrot.lane.b32.xlu0 %v2531, 96
      %v3385 = vpop.permute.xlu0 %3384
      %3386 = vrot.lane.b32.xlu0 %v2533, 96
      %v3387 = vpop.permute.xlu0 %3386
      %3388 = vrot.lane.b32.xlu0 %v2535, 96
      %v3389 = vpop.permute.xlu0 %3388
      %3390 = vrot.lane.b32.xlu0 %v2537, 96
      %v3391 = vpop.permute.xlu0 %3390
      %3392 = vrot.lane.b32.xlu0 %v2539, 96
      %v3393 = vpop.permute.xlu0 %3392
      %3394 = vrot.lane.b32.xlu0 %v2541, 96
      %v3395 = vpop.permute.xlu0 %3394
      %3396 = vrot.lane.b32.xlu0 %v2543, 96
      %v3397 = vpop.permute.xlu0 %3396
      %3398 = vrot.lane.b32.xlu0 %v2545, 96
      %v3399 = vpop.permute.xlu0 %3398
      %3400 = vrot.lane.b32.xlu0 %v2547, 96
      %v3401 = vpop.permute.xlu0 %3400
      %3402 = vrot.lane.b32.xlu0 %v2549, 96
      %v3403 = vpop.permute.xlu0 %3402
      %3404 = vrot.lane.b32.xlu0 %v2551, 96
      %v3405 = vpop.permute.xlu0 %3404
      %3406 = vrot.lane.b32.xlu0 %v2553, 96
      %v3407 = vpop.permute.xlu0 %3406
      %3408 = vrot.lane.b32.xlu0 %v2555, 96
      %v3409 = vpop.permute.xlu0 %3408
      %3410 = vrot.lane.b32.xlu0 %v2557, 96
      %v3411 = vpop.permute.xlu0 %3410
      %3412 = vrot.lane.b32.xlu0 %v2559, 96
      %v3413 = vpop.permute.xlu0 %3412
      %3414 = vrot.lane.b32.xlu0 %v2561, 96
      %v3415 = vpop.permute.xlu0 %3414
      %3416 = vrot.lane.b32.xlu0 %v2563, 96
      %v3417 = vpop.permute.xlu0 %3416
      %3418 = vrot.lane.b32.xlu0 %v2565, 96
      %v3419 = vpop.permute.xlu0 %3418
      %3420 = vrot.lane.b32.xlu0 %v2567, 96
      %v3421 = vpop.permute.xlu0 %3420
      %3422 = vrot.lane.b32.xlu0 %v2569, 96
      %v3423 = vpop.permute.xlu0 %3422
      %3424 = vrot.lane.b32.xlu0 %v2571, 96
      %v3425 = vpop.permute.xlu0 %3424
      %3426 = vrot.lane.b32.xlu0 %v2573, 96
      %v3427 = vpop.permute.xlu0 %3426
      %3428 = vrot.lane.b32.xlu0 %v3006, 96
      %v3429 = vpop.permute.xlu0 %3428
      %3430 = vrot.lane.b32.xlu0 %v3008, 96
      %v3431 = vpop.permute.xlu0 %3430
      %3432 = vrot.lane.b32.xlu0 %v3371, 96
      %v3433 = vpop.permute.xlu0 %3432
      %3434 = vrot.lane.b32.xlu0 %v2513, 96
      %v3435 = vpop.permute.xlu0 %3434
      %3436 = vrot.lane.b32.xlu0 %v2512, 96
      %v3437 = vpop.permute.xlu0 %3436
      %v3503 = vrot.slane %v2449, 2
      %v3504 = vrot.slane %v2450, 2
      %v3505 = vsel %vm2706, %v3503, %v3504
      %v3506 = vrot.slane %v2451, 2
      %v3507 = vsel %vm2706, %v3504, %v3506
      %v3508 = vrot.slane %v2452, 2
      %v3509 = vsel %vm2706, %v3506, %v3508
      %v3510 = vrot.slane %v2453, 2
      %v3511 = vsel %vm2706, %v3508, %v3510
      %v3512 = vrot.slane %v2454, 2
      %v3513 = vsel %vm2706, %v3510, %v3512
      %v3514 = vrot.slane %v2455, 2
      %v3515 = vsel %vm2706, %v3512, %v3514
      %v3516 = vrot.slane %v2456, 2
      %v3517 = vsel %vm2706, %v3514, %v3516
      %v3518 = vrot.slane %v2457, 2
      %v3519 = vsel %vm2706, %v3516, %v3518
      %v3520 = vrot.slane %v2458, 2
      %v3521 = vsel %vm2706, %v3518, %v3520
      %v3522 = vrot.slane %v2459, 2
      %v3523 = vsel %vm2706, %v3520, %v3522
      %v3524 = vrot.slane %v2460, 2
      %v3525 = vsel %vm2706, %v3522, %v3524
      %v3526 = vrot.slane %v2461, 2
      %v3527 = vsel %vm2706, %v3524, %v3526
      %v3528 = vrot.slane %v2462, 2
      %v3529 = vsel %vm2706, %v3526, %v3528
      %v3530 = vrot.slane %v2463, 2
      %v3531 = vsel %vm2706, %v3528, %v3530
      %v3532 = vrot.slane %v2464, 2
      %v3533 = vsel %vm2706, %v3530, %v3532
      %v3534 = vrot.slane %v2465, 2
      %v3535 = vsel %vm2706, %v3532, %v3534
      %v3536 = vrot.slane %v2466, 2
      %v3537 = vsel %vm2706, %v3534, %v3536
      %v3538 = vrot.slane %v2467, 2
      %v3539 = vsel %vm2706, %v3536, %v3538
      %v3540 = vrot.slane %v2468, 2
      %v3541 = vsel %vm2706, %v3538, %v3540
      %v3542 = vrot.slane %v2469, 2
      %v3543 = vsel %vm2706, %v3540, %v3542
      %v3544 = vrot.slane %v2470, 2
      %v3545 = vsel %vm2706, %v3542, %v3544
      %v3546 = vrot.slane %v2471, 2
      %v3547 = vsel %vm2706, %v3544, %v3546
      %v3548 = vrot.slane %v2472, 2
      %v3549 = vsel %vm2706, %v3546, %v3548
      %v3550 = vrot.slane %v2473, 2
      %v3551 = vsel %vm2706, %v3548, %v3550
      %v3552 = vrot.slane %v2474, 2
      %v3553 = vsel %vm2706, %v3550, %v3552
      %v3554 = vrot.slane %v2475, 2
      %v3555 = vsel %vm2706, %v3552, %v3554
      %v3556 = vrot.slane %v2476, 2
      %v3557 = vsel %vm2706, %v3554, %v3556
      %v3558 = vrot.slane %v2477, 2
      %v3559 = vsel %vm2706, %v3556, %v3558
      %v3560 = vrot.slane %v2478, 2
      %v3561 = vsel %vm2706, %v3558, %v3560
      %v3562 = vrot.slane %v2479, 2
      %v3563 = vsel %vm2706, %v3560, %v3562
      %v3564 = vrot.slane %v2480, 2
      %v3565 = vsel %vm2706, %v3562, %v3564
      %v3566 = vsel %vm2706, %v3564, %v3138
      %v3600 = vsel %vm310, %v2156, %v2575
      %v3601 = vsel %vm310, %v2157, %v2577
      %v3602 = vsel %vm310, %v2158, %v2579
      %v3603 = vsel %vm310, %v2159, %v2581
      %v3604 = vsel %vm310, %v2160, %v2583
      %v3605 = vsel %vm310, %v2161, %v2585
      %v3606 = vsel %vm310, %v2162, %v2587
      %v3607 = vsel %vm310, %v2163, %v2589
      %v3608 = vsel %vm310, %v2164, %v2591
      %v3609 = vsel %vm310, %v2165, %v2593
      %v3610 = vsel %vm310, %v2166, %v2595
      %v3611 = vsel %vm310, %v2167, %v2597
      %v3612 = vsel %vm310, %v2168, %v2599
      %v3613 = vsel %vm310, %v2169, %v2601
      %v3614 = vsel %vm310, %v2170, %v2603
      %v3615 = vsel %vm310, %v2171, %v2605
      %v3616 = vsel %vm310, %v2172, %v2607
      %v3617 = vsel %vm310, %v2173, %v2609
      %v3618 = vsel %vm310, %v2174, %v2611
      %v3619 = vsel %vm310, %v2175, %v2613
      %v3620 = vsel %vm310, %v2176, %v2615
      %v3621 = vsel %vm310, %v2177, %v2617
      %v3622 = vsel %vm310, %v2178, %v2619
      %v3623 = vsel %vm310, %v2179, %v2621
      %v3624 = vsel %vm310, %v2180, %v2623
      %v3625 = vsel %vm310, %v2181, %v2625
      %v3626 = vsel %vm310, %v2182, %v2627
      %v3627 = vsel %vm310, %v2183, %v2629
      %v3628 = vsel %vm310, %v2184, %v2631
      %v3629 = vsel %vm310, %v2185, %v2633
      %v3630 = vsel %vm310, %v2186, %v2635
      %v3631 = vsel %vm310, %v2187, %v2637
      %v3632 = vsel %vm310, %v2188, %v2639
      %vm3633 = vcmask 523264
      %v3634 = vsel %vm3633, %v3600, %v2773
      %v3635 = vsel %vm3633, %v3601, %v2775
      %v3636 = vsel %vm3633, %v3602, %v2777
      %v3637 = vsel %vm3633, %v3603, %v2779
      %v3638 = vsel %vm3633, %v3604, %v2781
      %v3639 = vsel %vm3633, %v3605, %v2783
      %v3640 = vsel %vm3633, %v3606, %v2785
      %v3641 = vsel %vm3633, %v3607, %v2787
      %v3642 = vsel %vm3633, %v3608, %v2789
      %v3643 = vsel %vm3633, %v3609, %v2791
      %v3644 = vsel %vm3633, %v3610, %v2793
      %v3645 = vsel %vm3633, %v3611, %v2795
      %v3646 = vsel %vm3633, %v3612, %v2797
      %v3647 = vsel %vm3633, %v3613, %v2799
      %v3648 = vsel %vm3633, %v3614, %v2801
      %v3649 = vsel %vm3633, %v3615, %v2803
      %v3650 = vsel %vm3633, %v3616, %v2805
      %v3651 = vsel %vm3633, %v3617, %v2807
      %v3652 = vsel %vm3633, %v3618, %v2809
      %v3653 = vsel %vm3633, %v3619, %v2811
      %v3654 = vsel %vm3633, %v3620, %v2813
      %v3655 = vsel %vm3633, %v3621, %v2815
      %v3656 = vsel %vm3633, %v3622, %v2817
      %v3657 = vsel %vm3633, %v3623, %v2819
      %v3658 = vsel %vm3633, %v3624, %v2821
      %v3659 = vsel %vm3633, %v3625, %v2823
      %v3660 = vsel %vm3633, %v3626, %v2825
      %v3661 = vsel %vm3633, %v3627, %v2827
      %v3662 = vsel %vm3633, %v3628, %v2829
      %v3663 = vsel %vm3633, %v3629, %v2831
      %v3664 = vsel %vm3633, %v3630, %v2833
      %v3665 = vsel %vm3633, %v3631, %v2835
      %v3666 = vsel %vm3633, %v3632, %v2837
      %vm3667 = vcmask 785408
      %v3668 = vsel %vm3667, %v3634, %v2905
      %v3669 = vsel %vm3667, %v3635, %v2907
      %v3670 = vsel %vm3667, %v3636, %v2909
      %v3671 = vsel %vm3667, %v3637, %v2911
      %v3672 = vsel %vm3667, %v3638, %v2913
      %v3673 = vsel %vm3667, %v3639, %v2915
      %v3674 = vsel %vm3667, %v3640, %v2917
      %v3675 = vsel %vm3667, %v3641, %v2919
      %v3676 = vsel %vm3667, %v3642, %v2921
      %v3677 = vsel %vm3667, %v3643, %v2923
      %v3678 = vsel %vm3667, %v3644, %v2925
      %v3679 = vsel %vm3667, %v3645, %v2927
      %v3680 = vsel %vm3667, %v3646, %v2929
      %v3681 = vsel %vm3667, %v3647, %v2931
      %v3682 = vsel %vm3667, %v3648, %v2933
      %v3683 = vsel %vm3667, %v3649, %v2935
      %v3684 = vsel %vm3667, %v3650, %v2937
      %v3685 = vsel %vm3667, %v3651, %v2939
      %v3686 = vsel %vm3667, %v3652, %v2941
      %v3687 = vsel %vm3667, %v3653, %v2943
      %v3688 = vsel %vm3667, %v3654, %v2945
      %v3689 = vsel %vm3667, %v3655, %v2947
      %v3690 = vsel %vm3667, %v3656, %v2949
      %v3691 = vsel %vm3667, %v3657, %v2951
      %v3692 = vsel %vm3667, %v3658, %v2953
      %v3693 = vsel %vm3667, %v3659, %v2955
      %v3694 = vsel %vm3667, %v3660, %v2957
      %v3695 = vsel %vm3667, %v3661, %v2959
      %v3696 = vsel %vm3667, %v3662, %v2961
      %v3697 = vsel %vm3667, %v3663, %v2963
      %v3698 = vsel %vm3667, %v3664, %v2965
      %v3699 = vsel %vm3667, %v3665, %v2967
      %v3700 = vsel %vm3667, %v3666, %v2969
      %v3701 = vsel %vm310, %v2514, %v3141
      %v3702 = vsel %vm310, %v2517, %v3143
      %v3703 = vsel %vm310, %v2519, %v3145
      %v3704 = vsel %vm310, %v2521, %v3147
      %v3705 = vsel %vm310, %v2523, %v3149
      %v3706 = vsel %vm310, %v2525, %v3151
      %v3707 = vsel %vm310, %v2527, %v3153
      %v3708 = vsel %vm310, %v2529, %v3155
      %v3709 = vsel %vm310, %v2531, %v3157
      %v3710 = vsel %vm310, %v2533, %v3159
      %v3711 = vsel %vm310, %v2535, %v3161
      %v3712 = vsel %vm310, %v2537, %v3163
      %v3713 = vsel %vm310, %v2539, %v3165
      %v3714 = vsel %vm310, %v2541, %v3167
      %v3715 = vsel %vm310, %v2543, %v3169
      %v3716 = vsel %vm310, %v2545, %v3171
      %v3717 = vsel %vm310, %v2547, %v3173
      %v3718 = vsel %vm310, %v2549, %v3175
      %v3719 = vsel %vm310, %v2551, %v3177
      %v3720 = vsel %vm310, %v2553, %v3179
      %v3721 = vsel %vm310, %v2555, %v3181
      %v3722 = vsel %vm310, %v2557, %v3183
      %v3723 = vsel %vm310, %v2559, %v3185
      %v3724 = vsel %vm310, %v2561, %v3187
      %v3725 = vsel %vm310, %v2563, %v3189
      %v3726 = vsel %vm310, %v2565, %v3191
      %v3727 = vsel %vm310, %v2567, %v3193
      %v3728 = vsel %vm310, %v2569, %v3195
      %v3729 = vsel %vm310, %v2571, %v3197
      %v3730 = vsel %vm310, %v2573, %v3199
      %v3731 = vsel %vm310, %v3006, %v3201
      %v3732 = vsel %vm310, %v3008, %v3203
      %v3733 = vsel %vm310, %v3007, %v3205
      %v3734 = vsel %vm3633, %v3701, %v3273
      %v3735 = vsel %vm3633, %v3702, %v3275
      %v3736 = vsel %vm3633, %v3703, %v3277
      %v3737 = vsel %vm3633, %v3704, %v3279
      %v3738 = vsel %vm3633, %v3705, %v3281
      %v3739 = vsel %vm3633, %v3706, %v3283
      %v3740 = vsel %vm3633, %v3707, %v3285
      %v3741 = vsel %vm3633, %v3708, %v3287
      %v3742 = vsel %vm3633, %v3709, %v3289
      %v3743 = vsel %vm3633, %v3710, %v3291
      %v3744 = vsel %vm3633, %v3711, %v3293
      %v3745 = vsel %vm3633, %v3712, %v3295
      %v3746 = vsel %vm3633, %v3713, %v3297
      %v3747 = vsel %vm3633, %v3714, %v3299
      %v3748 = vsel %vm3633, %v3715, %v3301
      %v3749 = vsel %vm3633, %v3716, %v3303
      %v3750 = vsel %vm3633, %v3717, %v3305
      %v3751 = vsel %vm3633, %v3718, %v3307
      %v3752 = vsel %vm3633, %v3719, %v3309
      %v3753 = vsel %vm3633, %v3720, %v3311
      %v3754 = vsel %vm3633, %v3721, %v3313
      %v3755 = vsel %vm3633, %v3722, %v3315
      %v3756 = vsel %vm3633, %v3723, %v3317
      %v3757 = vsel %vm3633, %v3724, %v3319
      %v3758 = vsel %vm3633, %v3725, %v3321
      %v3759 = vsel %vm3633, %v3726, %v3323
      %v3760 = vsel %vm3633, %v3727, %v3325
      %v3761 = vsel %vm3633, %v3728, %v3327
      %v3762 = vsel %vm3633, %v3729, %v3329
      %v3763 = vsel %vm3633, %v3730, %v3331
      %v3764 = vsel %vm3633, %v3731, %v3333
      %v3765 = vsel %vm3633, %v3732, %v3335
      %v3766 = vsel %vm3633, %v3733, %v3337
      %v3767 = vsel %vm3667, %v3734, %v3373
      %v3768 = vsel %vm3667, %v3735, %v3375
      %v3769 = vsel %vm3667, %v3736, %v3377
      %v3770 = vsel %vm3667, %v3737, %v3379
      %v3771 = vsel %vm3667, %v3738, %v3381
      %v3772 = vsel %vm3667, %v3739, %v3383
      %v3773 = vsel %vm3667, %v3740, %v3385
      %v3774 = vsel %vm3667, %v3741, %v3387
      %v3775 = vsel %vm3667, %v3742, %v3389
      %v3776 = vsel %vm3667, %v3743, %v3391
      %v3777 = vsel %vm3667, %v3744, %v3393
      %v3778 = vsel %vm3667, %v3745, %v3395
      %v3779 = vsel %vm3667, %v3746, %v3397
      %v3780 = vsel %vm3667, %v3747, %v3399
      %v3781 = vsel %vm3667, %v3748, %v3401
      %v3782 = vsel %vm3667, %v3749, %v3403
      %v3783 = vsel %vm3667, %v3750, %v3405
      %v3784 = vsel %vm3667, %v3751, %v3407
      %v3785 = vsel %vm3667, %v3752, %v3409
      %v3786 = vsel %vm3667, %v3753, %v3411
      %v3787 = vsel %vm3667, %v3754, %v3413
      %v3788 = vsel %vm3667, %v3755, %v3415
      %v3789 = vsel %vm3667, %v3756, %v3417
      %v3790 = vsel %vm3667, %v3757, %v3419
      %v3791 = vsel %vm3667, %v3758, %v3421
      %v3792 = vsel %vm3667, %v3759, %v3423
      %v3793 = vsel %vm3667, %v3760, %v3425
      %v3794 = vsel %vm3667, %v3761, %v3427
      %v3795 = vsel %vm3667, %v3762, %v3429
      %v3796 = vsel %vm3667, %v3763, %v3431
      %v3797 = vsel %vm3667, %v3764, %v3433
      %v3798 = vsel %vm3667, %v3765, %v3435
      %v3799 = vsel %vm3667, %v3766, %v3437
      %v3800 = vpack.c.bf16 %v3669, %v3668
      %v3801 = vpack.c.bf16 %v3768, %v3767
      %v3802 = vpack.c.bf16 %v3505, %v3503
      %v3803 = vpack.c.bf16 %v3671, %v3670
      %v3804 = vpack.c.bf16 %v3770, %v3769
      %v3805 = vpack.c.bf16 %v3509, %v3507
      %v3806 = vpack.c.bf16 %v3673, %v3672
      %v3807 = vpack.c.bf16 %v3772, %v3771
      %v3808 = vpack.c.bf16 %v3513, %v3511
      %v3809 = vpack.c.bf16 %v3675, %v3674
      %v3810 = vpack.c.bf16 %v3774, %v3773
      %v3811 = vpack.c.bf16 %v3517, %v3515
      %v3812 = vpack.c.bf16 %v3677, %v3676
      %v3813 = vpack.c.bf16 %v3776, %v3775
      %v3814 = vpack.c.bf16 %v3521, %v3519
      %v3815 = vpack.c.bf16 %v3679, %v3678
      %v3816 = vpack.c.bf16 %v3778, %v3777
      %v3817 = vpack.c.bf16 %v3525, %v3523
      %v3818 = vpack.c.bf16 %v3681, %v3680
      %v3819 = vpack.c.bf16 %v3780, %v3779
      %v3820 = vpack.c.bf16 %v3529, %v3527
      %v3821 = vpack.c.bf16 %v3683, %v3682
      %v3822 = vpack.c.bf16 %v3782, %v3781
      %v3823 = vpack.c.bf16 %v3533, %v3531
      %v3824 = vpack.c.bf16 %v3685, %v3684
      %v3825 = vpack.c.bf16 %v3784, %v3783
      %v3826 = vpack.c.bf16 %v3537, %v3535
      %v3827 = vpack.c.bf16 %v3687, %v3686
      %v3828 = vpack.c.bf16 %v3786, %v3785
      %v3829 = vpack.c.bf16 %v3541, %v3539
      %v3830 = vpack.c.bf16 %v3689, %v3688
      %v3831 = vpack.c.bf16 %v3788, %v3787
      %v3832 = vpack.c.bf16 %v3545, %v3543
      %v3833 = vpack.c.bf16 %v3691, %v3690
      %v3834 = vpack.c.bf16 %v3790, %v3789
      %v3835 = vpack.c.bf16 %v3549, %v3547
      %v3836 = vpack.c.bf16 %v3693, %v3692
      %v3837 = vpack.c.bf16 %v3792, %v3791
      %v3838 = vpack.c.bf16 %v3553, %v3551
      %v3839 = vpack.c.bf16 %v3695, %v3694
      %v3840 = vpack.c.bf16 %v3794, %v3793
      %v3841 = vpack.c.bf16 %v3557, %v3555
      %v3842 = vpack.c.bf16 %v3697, %v3696
      %v3843 = vpack.c.bf16 %v3796, %v3795
      %v3844 = vpack.c.bf16 %v3561, %v3559
      %v3845 = vpack.c.bf16 %v3699, %v3698
      %v3846 = vpack.c.bf16 %v3798, %v3797
      %v3847 = vpack.c.bf16 %v3565, %v3563
      %v3848 = vpack.c.bf16 %v3700, %v3700
      %v3849 = vpack.c.bf16 %v3799, %v3799
      %v3850 = vpack.c.bf16 %v3566, %v3566
      %v3851 = vld [vmem:[%s3] sm:$0xf]
      %v3852 = vld [vmem:[%s3 + $0x4] sm:$0xf]
      %v3853 = vld [vmem:[%s3 + $0x8] sm:$0xf]
      %v3854 = vld [vmem:[%s3 + $0xc] sm:$0xf]
      %v3855 = vld [vmem:[%s3 + $0x10] sm:$0xf]
      %v3856 = vld [vmem:[%s3 + $0x14] sm:$0xf]
      %v3857 = vld [vmem:[%s3 + $0x18] sm:$0xf]
      %v3858 = vld [vmem:[%s3 + $0x1c] sm:$0xf]
      %v3859 = vld [vmem:[%s3 + $0x20] sm:$0xf]
      %v3860 = vld [vmem:[%s3 + $0x24] sm:$0xf]
      %v3861 = vld [vmem:[%s3 + $0x28] sm:$0xf]
      %v3862 = vld [vmem:[%s3 + $0x2c] sm:$0xf]
      %v3863 = vld [vmem:[%s3 + $0x30] sm:$0xf]
      %v3864 = vld [vmem:[%s3 + $0x34] sm:$0xf]
      %v3865 = vld [vmem:[%s3 + $0x38] sm:$0xf]
      %v3866 = vld [vmem:[%s3 + $0x3c] sm:$0xf]
      %v3867 = vld [vmem:[%s3 + $0x40] sm:$0xf]
      %v3868 = vld [vmem:[%s3 + $0x44] sm:$0xf]
      %v3869 = vld [vmem:[%s3 + $0x48] sm:$0xf]
      %v3870 = vld [vmem:[%s3 + $0x4c] sm:$0xf]
      %v3871 = vld [vmem:[%s3 + $0x50] sm:$0xf]
      %v3872 = vld [vmem:[%s3 + $0x54] sm:$0xf]
      %v3873 = vld [vmem:[%s3 + $0x58] sm:$0xf]
      %v3874 = vld [vmem:[%s3 + $0x5c] sm:$0xf]
      %v3875 = vld [vmem:[%s3 + $0x60] sm:$0xf]
      %v3876 = vld [vmem:[%s3 + $0x64] sm:$0xf]
      %v3877 = vld [vmem:[%s3 + $0x68] sm:$0xf]
      %v3878 = vld [vmem:[%s3 + $0x6c] sm:$0xf]
      %v3879 = vld [vmem:[%s3 + $0x70] sm:$0xf]
      %v3880 = vld [vmem:[%s3 + $0x74] sm:$0xf]
      %v3881 = vld [vmem:[%s3 + $0x78] sm:$0xf]
      %v3882 = vld [vmem:[%s3 + $0x7c] sm:$0xf]
      %v3883 = vld [vmem:[%s3 + $0x80] sm:$0xf]
      %v3884 = vld [vmem:[%s3 + $0x84] sm:$0xf]
      %v3885 = vld [vmem:[%s3 + $0x88] sm:$0xf]
      %v3886 = vld [vmem:[%s3 + $0x8c] sm:$0xf]
      %v3887 = vld [vmem:[%s4] sm:$0x1]
      %v3889 = vlaneseq
      %v3890 = vshrl.u32 %v3889, 7
      %v3891 = vsub.s32 0, %v3890
      %v3892 = vrot.slane %v3887, %v3891
      %vm3894 = vsmask.f32 4352
      %v3896 = vshrl.u32 %v3800, 16
      %v3898 = vrot.slane %v3896, 3
      %v3899 = vshll.u32 %v3800, 16
      %v3901 = vrot.slane %v3899, 4
      %v3902 = vor.u32 %v3898, %v3901
      %v3904 = vshrl.u32 %v3803, 16
      %v3906 = vrot.slane %v3904, 3
      %v3907 = vshll.u32 %v3803, 16
      %v3909 = vrot.slane %v3907, 4
      %v3910 = vor.u32 %v3906, %v3909
      %v3911 = vsel %vm3894, %v3902, %v3910
      %v3913 = vshrl.u32 %v3801, 16
      %v3915 = vrot.slane %v3913, 3
      %v3916 = vshll.u32 %v3801, 16
      %v3918 = vrot.slane %v3916, 4
      %v3919 = vor.u32 %v3915, %v3918
      %v3921 = vshrl.u32 %v3804, 16
      %v3923 = vrot.slane %v3921, 3
      %v3924 = vshll.u32 %v3804, 16
      %v3926 = vrot.slane %v3924, 4
      %v3927 = vor.u32 %v3923, %v3926
      %v3928 = vsel %vm3894, %v3919, %v3927
      %v3930 = vshrl.u32 %v3802, 16
      %v3932 = vrot.slane %v3930, 3
      %v3933 = vshll.u32 %v3802, 16
      %v3935 = vrot.slane %v3933, 4
      %v3936 = vor.u32 %v3932, %v3935
      %v3938 = vshrl.u32 %v3805, 16
      %v3940 = vrot.slane %v3938, 3
      %v3941 = vshll.u32 %v3805, 16
      %v3943 = vrot.slane %v3941, 4
      %v3944 = vor.u32 %v3940, %v3943
      %v3945 = vsel %vm3894, %v3936, %v3944
      %v3947 = vshrl.u32 %v3806, 16
      %v3949 = vrot.slane %v3947, 3
      %v3950 = vshll.u32 %v3806, 16
      %v3952 = vrot.slane %v3950, 4
      %v3953 = vor.u32 %v3949, %v3952
      %v3954 = vsel %vm3894, %v3910, %v3953
      %v3956 = vshrl.u32 %v3807, 16
      %v3958 = vrot.slane %v3956, 3
      %v3959 = vshll.u32 %v3807, 16
      %v3961 = vrot.slane %v3959, 4
      %v3962 = vor.u32 %v3958, %v3961
      %v3963 = vsel %vm3894, %v3927, %v3962
      %v3965 = vshrl.u32 %v3808, 16
      %v3967 = vrot.slane %v3965, 3
      %v3968 = vshll.u32 %v3808, 16
      %v3970 = vrot.slane %v3968, 4
      %v3971 = vor.u32 %v3967, %v3970
      %v3972 = vsel %vm3894, %v3944, %v3971
      %v3974 = vshrl.u32 %v3809, 16
      %v3976 = vrot.slane %v3974, 3
      %v3977 = vshll.u32 %v3809, 16
      %v3979 = vrot.slane %v3977, 4
      %v3980 = vor.u32 %v3976, %v3979
      %v3981 = vsel %vm3894, %v3953, %v3980
      %v3983 = vshrl.u32 %v3810, 16
      %v3985 = vrot.slane %v3983, 3
      %v3986 = vshll.u32 %v3810, 16
      %v3988 = vrot.slane %v3986, 4
      %v3989 = vor.u32 %v3985, %v3988
      %v3990 = vsel %vm3894, %v3962, %v3989
      %v3992 = vshrl.u32 %v3811, 16
      %v3994 = vrot.slane %v3992, 3
      %v3995 = vshll.u32 %v3811, 16
      %v3997 = vrot.slane %v3995, 4
      %v3998 = vor.u32 %v3994, %v3997
      %v3999 = vsel %vm3894, %v3971, %v3998
      %v4001 = vshrl.u32 %v3812, 16
      %v4003 = vrot.slane %v4001, 3
      %v4004 = vshll.u32 %v3812, 16
      %v4006 = vrot.slane %v4004, 4
      %v4007 = vor.u32 %v4003, %v4006
      %v4008 = vsel %vm3894, %v3980, %v4007
      %v4010 = vshrl.u32 %v3813, 16
      %v4012 = vrot.slane %v4010, 3
      %v4013 = vshll.u32 %v3813, 16
      %v4015 = vrot.slane %v4013, 4
      %v4016 = vor.u32 %v4012, %v4015
      %v4017 = vsel %vm3894, %v3989, %v4016
      %v4019 = vshrl.u32 %v3814, 16
      %v4021 = vrot.slane %v4019, 3
      %v4022 = vshll.u32 %v3814, 16
      %v4024 = vrot.slane %v4022, 4
      %v4025 = vor.u32 %v4021, %v4024
      %v4026 = vsel %vm3894, %v3998, %v4025
      %v4028 = vshrl.u32 %v3815, 16
      %v4030 = vrot.slane %v4028, 3
      %v4031 = vshll.u32 %v3815, 16
      %v4033 = vrot.slane %v4031, 4
      %v4034 = vor.u32 %v4030, %v4033
      %v4035 = vsel %vm3894, %v4007, %v4034
      %v4037 = vshrl.u32 %v3816, 16
      %v4039 = vrot.slane %v4037, 3
      %v4040 = vshll.u32 %v3816, 16
      %v4042 = vrot.slane %v4040, 4
      %v4043 = vor.u32 %v4039, %v4042
      %v4044 = vsel %vm3894, %v4016, %v4043
      %v4046 = vshrl.u32 %v3817, 16
      %v4048 = vrot.slane %v4046, 3
      %v4049 = vshll.u32 %v3817, 16
      %v4051 = vrot.slane %v4049, 4
      %v4052 = vor.u32 %v4048, %v4051
      %v4053 = vsel %vm3894, %v4025, %v4052
      %v4055 = vshrl.u32 %v3818, 16
      %v4057 = vrot.slane %v4055, 3
      %v4058 = vshll.u32 %v3818, 16
      %v4060 = vrot.slane %v4058, 4
      %v4061 = vor.u32 %v4057, %v4060
      %v4062 = vsel %vm3894, %v4034, %v4061
      %v4064 = vshrl.u32 %v3819, 16
      %v4066 = vrot.slane %v4064, 3
      %v4067 = vshll.u32 %v3819, 16
      %v4069 = vrot.slane %v4067, 4
      %v4070 = vor.u32 %v4066, %v4069
      %v4071 = vsel %vm3894, %v4043, %v4070
      %v4073 = vshrl.u32 %v3820, 16
      %v4075 = vrot.slane %v4073, 3
      %v4076 = vshll.u32 %v3820, 16
      %v4078 = vrot.slane %v4076, 4
      %v4079 = vor.u32 %v4075, %v4078
      %v4080 = vsel %vm3894, %v4052, %v4079
      %v4082 = vshrl.u32 %v3821, 16
      %v4084 = vrot.slane %v4082, 3
      %v4085 = vshll.u32 %v3821, 16
      %v4087 = vrot.slane %v4085, 4
      %v4088 = vor.u32 %v4084, %v4087
      %v4089 = vsel %vm3894, %v4061, %v4088
      %v4091 = vshrl.u32 %v3822, 16
      %v4093 = vrot.slane %v4091, 3
      %v4094 = vshll.u32 %v3822, 16
      %v4096 = vrot.slane %v4094, 4
      %v4097 = vor.u32 %v4093, %v4096
      %v4098 = vsel %vm3894, %v4070, %v4097
      %v4100 = vshrl.u32 %v3823, 16
      %v4102 = vrot.slane %v4100, 3
      %v4103 = vshll.u32 %v3823, 16
      %v4105 = vrot.slane %v4103, 4
      %v4106 = vor.u32 %v4102, %v4105
      %v4107 = vsel %vm3894, %v4079, %v4106
      %v4109 = vshrl.u32 %v3824, 16
      %v4111 = vrot.slane %v4109, 3
      %v4112 = vshll.u32 %v3824, 16
      %v4114 = vrot.slane %v4112, 4
      %v4115 = vor.u32 %v4111, %v4114
      %v4116 = vsel %vm3894, %v4088, %v4115
      %v4118 = vshrl.u32 %v3825, 16
      %v4120 = vrot.slane %v4118, 3
      %v4121 = vshll.u32 %v3825, 16
      %v4123 = vrot.slane %v4121, 4
      %v4124 = vor.u32 %v4120, %v4123
      %v4125 = vsel %vm3894, %v4097, %v4124
      %v4127 = vshrl.u32 %v3826, 16
      %v4129 = vrot.slane %v4127, 3
      %v4130 = vshll.u32 %v3826, 16
      %v4132 = vrot.slane %v4130, 4
      %v4133 = vor.u32 %v4129, %v4132
      %v4134 = vsel %vm3894, %v4106, %v4133
      %v4136 = vshrl.u32 %v3827, 16
      %v4138 = vrot.slane %v4136, 3
      %v4139 = vshll.u32 %v3827, 16
      %v4141 = vrot.slane %v4139, 4
      %v4142 = vor.u32 %v4138, %v4141
      %v4143 = vsel %vm3894, %v4115, %v4142
      %v4145 = vshrl.u32 %v3828, 16
      %v4147 = vrot.slane %v4145, 3
      %v4148 = vshll.u32 %v3828, 16
      %v4150 = vrot.slane %v4148, 4
      %v4151 = vor.u32 %v4147, %v4150
      %v4152 = vsel %vm3894, %v4124, %v4151
      %v4154 = vshrl.u32 %v3829, 16
      %v4156 = vrot.slane %v4154, 3
      %v4157 = vshll.u32 %v3829, 16
      %v4159 = vrot.slane %v4157, 4
      %v4160 = vor.u32 %v4156, %v4159
      %v4161 = vsel %vm3894, %v4133, %v4160
      %v4163 = vshrl.u32 %v3830, 16
      %v4165 = vrot.slane %v4163, 3
      %v4166 = vshll.u32 %v3830, 16
      %v4168 = vrot.slane %v4166, 4
      %v4169 = vor.u32 %v4165, %v4168
      %v4170 = vsel %vm3894, %v4142, %v4169
      %v4172 = vshrl.u32 %v3831, 16
      %v4174 = vrot.slane %v4172, 3
      %v4175 = vshll.u32 %v3831, 16
      %v4177 = vrot.slane %v4175, 4
      %v4178 = vor.u32 %v4174, %v4177
      %v4179 = vsel %vm3894, %v4151, %v4178
      %v4181 = vshrl.u32 %v3832, 16
      %v4183 = vrot.slane %v4181, 3
      %v4184 = vshll.u32 %v3832, 16
      %v4186 = vrot.slane %v4184, 4
      %v4187 = vor.u32 %v4183, %v4186
      %v4188 = vsel %vm3894, %v4160, %v4187
      %v4190 = vshrl.u32 %v3833, 16
      %v4192 = vrot.slane %v4190, 3
      %v4193 = vshll.u32 %v3833, 16
      %v4195 = vrot.slane %v4193, 4
      %v4196 = vor.u32 %v4192, %v4195
      %v4197 = vsel %vm3894, %v4169, %v4196
      %v4199 = vshrl.u32 %v3834, 16
      %v4201 = vrot.slane %v4199, 3
      %v4202 = vshll.u32 %v3834, 16
      %v4204 = vrot.slane %v4202, 4
      %v4205 = vor.u32 %v4201, %v4204
      %v4206 = vsel %vm3894, %v4178, %v4205
      %v4208 = vshrl.u32 %v3835, 16
      %v4210 = vrot.slane %v4208, 3
      %v4211 = vshll.u32 %v3835, 16
      %v4213 = vrot.slane %v4211, 4
      %v4214 = vor.u32 %v4210, %v4213
      %v4215 = vsel %vm3894, %v4187, %v4214
      %v4217 = vshrl.u32 %v3836, 16
      %v4219 = vrot.slane %v4217, 3
      %v4220 = vshll.u32 %v3836, 16
      %v4222 = vrot.slane %v4220, 4
      %v4223 = vor.u32 %v4219, %v4222
      %v4224 = vsel %vm3894, %v4196, %v4223
      %v4226 = vshrl.u32 %v3837, 16
      %v4228 = vrot.slane %v4226, 3
      %v4229 = vshll.u32 %v3837, 16
      %v4231 = vrot.slane %v4229, 4
      %v4232 = vor.u32 %v4228, %v4231
      %v4233 = vsel %vm3894, %v4205, %v4232
      %v4235 = vshrl.u32 %v3838, 16
      %v4237 = vrot.slane %v4235, 3
      %v4238 = vshll.u32 %v3838, 16
      %v4240 = vrot.slane %v4238, 4
      %v4241 = vor.u32 %v4237, %v4240
      %v4242 = vsel %vm3894, %v4214, %v4241
      %v4244 = vshrl.u32 %v3839, 16
      %v4246 = vrot.slane %v4244, 3
      %v4247 = vshll.u32 %v3839, 16
      %v4249 = vrot.slane %v4247, 4
      %v4250 = vor.u32 %v4246, %v4249
      %v4251 = vsel %vm3894, %v4223, %v4250
      %v4253 = vshrl.u32 %v3840, 16
      %v4255 = vrot.slane %v4253, 3
      %v4256 = vshll.u32 %v3840, 16
      %v4258 = vrot.slane %v4256, 4
      %v4259 = vor.u32 %v4255, %v4258
      %v4260 = vsel %vm3894, %v4232, %v4259
      %v4262 = vshrl.u32 %v3841, 16
      %v4264 = vrot.slane %v4262, 3
      %v4265 = vshll.u32 %v3841, 16
      %v4267 = vrot.slane %v4265, 4
      %v4268 = vor.u32 %v4264, %v4267
      %v4269 = vsel %vm3894, %v4241, %v4268
      %v4271 = vshrl.u32 %v3842, 16
      %v4273 = vrot.slane %v4271, 3
      %v4274 = vshll.u32 %v3842, 16
      %v4276 = vrot.slane %v4274, 4
      %v4277 = vor.u32 %v4273, %v4276
      %v4278 = vsel %vm3894, %v4250, %v4277
      %v4280 = vshrl.u32 %v3843, 16
      %v4282 = vrot.slane %v4280, 3
      %v4283 = vshll.u32 %v3843, 16
      %v4285 = vrot.slane %v4283, 4
      %v4286 = vor.u32 %v4282, %v4285
      %v4287 = vsel %vm3894, %v4259, %v4286
      %v4289 = vshrl.u32 %v3844, 16
      %v4291 = vrot.slane %v4289, 3
      %v4292 = vshll.u32 %v3844, 16
      %v4294 = vrot.slane %v4292, 4
      %v4295 = vor.u32 %v4291, %v4294
      %v4296 = vsel %vm3894, %v4268, %v4295
      %v4298 = vshrl.u32 %v3845, 16
      %v4300 = vrot.slane %v4298, 3
      %v4301 = vshll.u32 %v3845, 16
      %v4303 = vrot.slane %v4301, 4
      %v4304 = vor.u32 %v4300, %v4303
      %v4305 = vsel %vm3894, %v4277, %v4304
      %v4307 = vshrl.u32 %v3846, 16
      %v4309 = vrot.slane %v4307, 3
      %v4310 = vshll.u32 %v3846, 16
      %v4312 = vrot.slane %v4310, 4
      %v4313 = vor.u32 %v4309, %v4312
      %v4314 = vsel %vm3894, %v4286, %v4313
      %v4316 = vshrl.u32 %v3847, 16
      %v4318 = vrot.slane %v4316, 3
      %v4319 = vshll.u32 %v3847, 16
      %v4321 = vrot.slane %v4319, 4
      %v4322 = vor.u32 %v4318, %v4321
      %v4323 = vsel %vm3894, %v4295, %v4322
      %v4325 = vshrl.u32 %v3848, 16
      %v4327 = vrot.slane %v4325, 3
      %v4328 = vshll.u32 %v3848, 16
      %v4330 = vrot.slane %v4328, 4
      %v4331 = vor.u32 %v4327, %v4330
      %v4332 = vsel %vm3894, %v4304, %v4331
      %v4334 = vshrl.u32 %v3849, 16
      %v4336 = vrot.slane %v4334, 3
      %v4337 = vshll.u32 %v3849, 16
      %v4339 = vrot.slane %v4337, 4
      %v4340 = vor.u32 %v4336, %v4339
      %v4341 = vsel %vm3894, %v4313, %v4340
      %v4343 = vshrl.u32 %v3850, 16
      %v4345 = vrot.slane %v4343, 3
      %v4346 = vshll.u32 %v3850, 16
      %v4348 = vrot.slane %v4346, 4
      %v4349 = vor.u32 %v4345, %v4348
      %v4350 = vsel %vm3894, %v4322, %v4349
      %v4419 = vunpack.c.l.b16 %v3851
      %v4420 = vunpack.c.l.b16 %v3852
      %v4421 = vunpack.c.l.b16 %v3853
      %v4422 = vunpack.c.l.b16 %v3854
      %v4423 = vunpack.c.l.b16 %v3855
      %v4424 = vunpack.c.l.b16 %v3856
      %v4425 = vunpack.c.l.b16 %v3857
      %v4426 = vunpack.c.l.b16 %v3858
      %v4427 = vunpack.c.l.b16 %v3859
      %v4428 = vunpack.c.l.b16 %v3860
      %v4429 = vunpack.c.l.b16 %v3861
      %v4430 = vunpack.c.l.b16 %v3862
      %v4431 = vunpack.c.l.b16 %v3863
      %v4432 = vunpack.c.l.b16 %v3864
      %v4433 = vunpack.c.l.b16 %v3865
      %v4434 = vunpack.c.l.b16 %v3866
      %v4435 = vunpack.c.l.b16 %v3867
      %v4436 = vunpack.c.l.b16 %v3868
      %v4437 = vunpack.c.l.b16 %v3869
      %v4438 = vunpack.c.l.b16 %v3870
      %v4439 = vunpack.c.l.b16 %v3871
      %v4440 = vunpack.c.l.b16 %v3872
      %v4441 = vunpack.c.l.b16 %v3873
      %v4442 = vunpack.c.l.b16 %v3874
      %v4443 = vunpack.c.l.b16 %v3875
      %v4444 = vunpack.c.l.b16 %v3876
      %v4445 = vunpack.c.l.b16 %v3877
      %v4446 = vunpack.c.l.b16 %v3878
      %v4447 = vunpack.c.l.b16 %v3879
      %v4448 = vunpack.c.l.b16 %v3880
      %v4449 = vunpack.c.l.b16 %v3881
      %v4450 = vunpack.c.l.b16 %v3882
      %v4451 = vunpack.c.l.b16 %v3883
      %v4452 = vunpack.c.l.b16 %v3884
      %v4453 = vunpack.c.l.b16 %v3885
      %v4454 = vunpack.c.l.b16 %v3886
      %v4455 = vpack.c.b16 %v4420, %v4419
      %v4456 = vpack.c.b16 %v4422, %v4421
      %v4457 = vpack.c.b16 %v4424, %v4423
      %v4458 = vpack.c.b16 %v4426, %v4425
      %v4459 = vpack.c.b16 %v4428, %v4427
      %v4460 = vpack.c.b16 %v4430, %v4429
      %v4461 = vpack.c.b16 %v4432, %v4431
      %v4462 = vpack.c.b16 %v4434, %v4433
      %v4463 = vpack.c.b16 %v4436, %v4435
      %v4464 = vpack.c.b16 %v4438, %v4437
      %v4465 = vpack.c.b16 %v4440, %v4439
      %v4466 = vpack.c.b16 %v4442, %v4441
      %v4467 = vpack.c.b16 %v4444, %v4443
      %v4468 = vpack.c.b16 %v4446, %v4445
      %v4469 = vpack.c.b16 %v4448, %v4447
      %v4470 = vpack.c.b16 %v4450, %v4449
      %v4471 = vpack.c.b16 %v4452, %v4451
      %v4472 = vpack.c.b16 %v4454, %v4453
      %v4492 = vsel %vm310, %v3945, 0
      %v4495 = vsel %vm310, %v3972, 0
      %v4498 = vsel %vm310, %v3999, 0
      %v4501 = vsel %vm310, %v4026, 0
      %v4504 = vsel %vm310, %v4053, 0
      %v4507 = vsel %vm310, %v4080, 0
      %v4510 = vsel %vm310, %v4107, 0
      %v4513 = vsel %vm310, %v4134, 0
      %v4516 = vsel %vm310, %v4161, 0
      %v4519 = vsel %vm310, %v4188, 0
      %v4522 = vsel %vm310, %v4215, 0
      %v4525 = vsel %vm310, %v4242, 0
      %v4528 = vsel %vm310, %v4269, 0
      %v4531 = vsel %vm310, %v4296, 0
      %v4534 = vsel %vm310, %v4323, 0
      %v4537 = vsel %vm310, %v4350, 0
      %4539 = vmatprep.subr.bf16.mxu0 0
      %4540 = vmatpush1.bf16.msra.mxu0 %v4455
      %4541 = vmatprep.subr.bf16.mxu0 0
      %4542 = vmatpush1.bf16.msra.mxu0 %v4456
      %4543 = vmatprep.subr.bf16.mxu0 0
      %4544 = vmatpush1.bf16.msra.mxu0 %v4457
      %4545 = vmatprep.subr.bf16.mxu0 0
      %4546 = vmatpush1.bf16.msra.mxu0 %v4458
      %4547 = vmatprep.subr.bf16.mxu0 0
      %4548 = vmatpush1.bf16.msra.mxu0 %v4459
      %4549 = vmatprep.subr.bf16.mxu0 0
      %4550 = vmatpush1.bf16.msra.mxu0 %v4460
      %4551 = vmatprep.subr.bf16.mxu0 0
      %4552 = vmatpush1.bf16.msra.mxu0 %v4461
      %4553 = vmatprep.subr.bf16.mxu0 0
      %4554 = vmatpush1.bf16.msra.mxu0 %v4462
      %4555 = vmatprep.subr.bf16.mxu0 0
      %4556 = vmatpush1.bf16.msra.mxu0 %v4463
      %4557 = vmatprep.subr.bf16.mxu0 0
      %4558 = vmatpush1.bf16.msra.mxu0 %v4464
      %4559 = vmatprep.subr.bf16.mxu0 0
      %4560 = vmatpush1.bf16.msra.mxu0 %v4465
      %4561 = vmatprep.subr.bf16.mxu0 0
      %4562 = vmatpush1.bf16.msra.mxu0 %v4466
      %4563 = vmatprep.subr.bf16.mxu0 0
      %4564 = vmatpush1.bf16.msra.mxu0 %v4467
      %4565 = vmatprep.subr.bf16.mxu0 0
      %4566 = vmatpush1.bf16.msra.mxu0 %v4468
      %4567 = vmatprep.subr.bf16.mxu0 0
      %4568 = vmatpush1.bf16.msra.mxu0 %v4469
      %4569 = vmatprep.subr.bf16.mxu0 0
      %4570 = vmatpush1.bf16.msra.mxu0 %v4470
      %4571 = vmatprep.mubr.bf16.mxu0 %v3928
      %4572 = vmatmul.mubr.bf16.gmra.mrb[0].mxu0 %v3911
      %v4573 = vpop.f32.mrb[0].mxu0
      %v4574 = vadd.f32 %v3892, %v4573
      %v4575 = vpop.f32.mrb[0].mxu0
      %v4576 = vpop.f32.mrb[0].mxu0
      %v4577 = vadd.f32 %v3892, %v4576
      %v4578 = vpop.f32.mrb[0].mxu0
      %4579 = vmatprep.mubr.bf16.mxu0 %v3963
      %4580 = vmatmul.mubr.bf16.gmra.mrb[0].mxu0 %v3954
      %v4581 = vpop.f32.mrb[0].mxu0
      %v4582 = vadd.f32 %v3892, %v4581
      %v4583 = vpop.f32.mrb[0].mxu0
      %v4584 = vpop.f32.mrb[0].mxu0
      %v4585 = vadd.f32 %v3892, %v4584
      %v4586 = vpop.f32.mrb[0].mxu0
      %4587 = vmatprep.mubr.bf16.mxu0 %v3990
      %4588 = vmatmul.mubr.bf16.gmra.mrb[0].mxu0 %v3981
      %v4589 = vpop.f32.mrb[0].mxu0
      %v4590 = vadd.f32 %v3892, %v4589
      %v4591 = vpop.f32.mrb[0].mxu0
      %v4592 = vpop.f32.mrb[0].mxu0
      %v4593 = vadd.f32 %v3892, %v4592
      %v4594 = vpop.f32.mrb[0].mxu0
      %4595 = vmatprep.mubr.bf16.mxu0 %v4017
      %4596 = vmatmul.mubr.bf16.gmra.mrb[0].mxu0 %v4008
      %v4597 = vpop.f32.mrb[0].mxu0
      %v4598 = vadd.f32 %v3892, %v4597
      %v4599 = vpop.f32.mrb[0].mxu0
      %v4600 = vpop.f32.mrb[0].mxu0
      %v4601 = vadd.f32 %v3892, %v4600
      %v4602 = vpop.f32.mrb[0].mxu0
      %4603 = vmatprep.mubr.bf16.mxu0 %v4044
      %4604 = vmatmul.mubr.bf16.gmra.mrb[0].mxu0 %v4035
      %v4605 = vpop.f32.mrb[0].mxu0
      %v4606 = vadd.f32 %v3892, %v4605
      %v4607 = vpop.f32.mrb[0].mxu0
      %v4608 = vpop.f32.mrb[0].mxu0
      %v4609 = vadd.f32 %v3892, %v4608
      %v4610 = vpop.f32.mrb[0].mxu0
      %4611 = vmatprep.mubr.bf16.mxu0 %v4071
      %4612 = vmatmul.mubr.bf16.gmra.mrb[0].mxu0 %v4062
      %v4613 = vpop.f32.mrb[0].mxu0
      %v4614 = vadd.f32 %v3892, %v4613
      %v4615 = vpop.f32.mrb[0].mxu0
      %v4616 = vpop.f32.mrb[0].mxu0
      %v4617 = vadd.f32 %v3892, %v4616
      %v4618 = vpop.f32.mrb[0].mxu0
      %4619 = vmatprep.mubr.bf16.mxu0 %v4098
      %4620 = vmatmul.mubr.bf16.gmra.mrb[0].mxu0 %v4089
      %v4621 = vpop.f32.mrb[0].mxu0
      %v4622 = vadd.f32 %v3892, %v4621
      %v4623 = vpop.f32.mrb[0].mxu0
      %v4624 = vpop.f32.mrb[0].mxu0
      %v4625 = vadd.f32 %v3892, %v4624
      %v4626 = vpop.f32.mrb[0].mxu0
      %4627 = vmatprep.mubr.bf16.mxu0 %v4125
      %4628 = vmatmul.mubr.bf16.gmra.mrb[0].mxu0 %v4116
      %v4629 = vpop.f32.mrb[0].mxu0
      %v4630 = vadd.f32 %v3892, %v4629
      %v4631 = vpop.f32.mrb[0].mxu0
      %v4632 = vpop.f32.mrb[0].mxu0
      %v4633 = vadd.f32 %v3892, %v4632
      %v4634 = vpop.f32.mrb[0].mxu0
      %4635 = vmatprep.mubr.bf16.mxu0 %v4152
      %4636 = vmatmul.mubr.bf16.gmra.mrb[0].mxu0 %v4143
      %v4637 = vpop.f32.mrb[0].mxu0
      %v4638 = vadd.f32 %v3892, %v4637
      %v4639 = vpop.f32.mrb[0].mxu0
      %v4640 = vpop.f32.mrb[0].mxu0
      %v4641 = vadd.f32 %v3892, %v4640
      %v4642 = vpop.f32.mrb[0].mxu0
      %4643 = vmatprep.mubr.bf16.mxu0 %v4179
      %4644 = vmatmul.mubr.bf16.gmra.mrb[0].mxu0 %v4170
      %v4645 = vpop.f32.mrb[0].mxu0
      %v4646 = vadd.f32 %v3892, %v4645
      %v4647 = vpop.f32.mrb[0].mxu0
      %v4648 = vpop.f32.mrb[0].mxu0
      %v4649 = vadd.f32 %v3892, %v4648
      %v4650 = vpop.f32.mrb[0].mxu0
      %4651 = vmatprep.mubr.bf16.mxu0 %v4206
      %4652 = vmatmul.mubr.bf16.gmra.mrb[0].mxu0 %v4197
      %v4653 = vpop.f32.mrb[0].mxu0
      %v4654 = vadd.f32 %v3892, %v4653
      %v4655 = vpop.f32.mrb[0].mxu0
      %v4656 = vpop.f32.mrb[0].mxu0
      %v4657 = vadd.f32 %v3892, %v4656
      %v4658 = vpop.f32.mrb[0].mxu0
      %4659 = vmatprep.mubr.bf16.mxu0 %v4233
      %4660 = vmatmul.mubr.bf16.gmra.mrb[0].mxu0 %v4224
      %v4661 = vpop.f32.mrb[0].mxu0
      %v4662 = vadd.f32 %v3892, %v4661
      %v4663 = vpop.f32.mrb[0].mxu0
      %v4664 = vpop.f32.mrb[0].mxu0
      %v4665 = vadd.f32 %v3892, %v4664
      %v4666 = vpop.f32.mrb[0].mxu0
      %4667 = vmatprep.mubr.bf16.mxu0 %v4260
      %4668 = vmatmul.mubr.bf16.gmra.mrb[0].mxu0 %v4251
      %v4669 = vpop.f32.mrb[0].mxu0
      %v4670 = vadd.f32 %v3892, %v4669
      %v4671 = vpop.f32.mrb[0].mxu0
      %v4672 = vpop.f32.mrb[0].mxu0
      %v4673 = vadd.f32 %v3892, %v4672
      %v4674 = vpop.f32.mrb[0].mxu0
      %4675 = vmatprep.mubr.bf16.mxu0 %v4287
      %4676 = vmatmul.mubr.bf16.gmra.mrb[0].mxu0 %v4278
      %v4677 = vpop.f32.mrb[0].mxu0
      %v4678 = vadd.f32 %v3892, %v4677
      %v4679 = vpop.f32.mrb[0].mxu0
      %v4680 = vpop.f32.mrb[0].mxu0
      %v4681 = vadd.f32 %v3892, %v4680
      %v4682 = vpop.f32.mrb[0].mxu0
      %4683 = vmatprep.mubr.bf16.mxu0 %v4314
      %4684 = vmatmul.mubr.bf16.gmra.mrb[0].mxu0 %v4305
      %v4685 = vpop.f32.mrb[0].mxu0
      %v4686 = vadd.f32 %v3892, %v4685
      %v4687 = vpop.f32.mrb[0].mxu0
      %v4688 = vpop.f32.mrb[0].mxu0
      %v4689 = vadd.f32 %v3892, %v4688
      %v4690 = vpop.f32.mrb[0].mxu0
      %4691 = vmatprep.mubr.bf16.mxu0 %v4341
      %4692 = vmatmul.mubr.bf16.gmra.mrb[0].mxu0 %v4332
      %v4693 = vpop.f32.mrb[0].mxu0
      %v4694 = vadd.f32 %v3892, %v4693
      %v4695 = vpop.f32.mrb[0].mxu0
      %v4696 = vpop.f32.mrb[0].mxu0
      %v4697 = vadd.f32 %v3892, %v4696
      %v4698 = vpop.f32.mrb[0].mxu0
      %4699 = vdwg.mxu0
      %4700 = vmatprep.subr.bf16.mxu0 0
      %4701 = vmatpush1.bf16.msra.mxu0 %v4471
      %4702 = vmatprep.subr.bf16.mxu0 0
      %4703 = vmatpush1.bf16.msra.mxu0 %v4472
      %4704 = vmatprep.subr.bf16.mxu0 0
      %4705 = vmatpush1.bf16.msra.mxu0 0
      %4706 = vmatprep.subr.bf16.mxu0 0
      %4707 = vmatpush1.bf16.msra.mxu0 0
      %4708 = vmatprep.subr.bf16.mxu0 0
      %4709 = vmatpush1.bf16.msra.mxu0 0
      %4710 = vmatprep.subr.bf16.mxu0 0
      %4711 = vmatpush1.bf16.msra.mxu0 0
      %4712 = vmatprep.subr.bf16.mxu0 0
      %4713 = vmatpush1.bf16.msra.mxu0 0
      %4714 = vmatprep.subr.bf16.mxu0 0
      %4715 = vmatpush1.bf16.msra.mxu0 0
      %4716 = vmatprep.subr.bf16.mxu0 0
      %4717 = vmatpush1.bf16.msra.mxu0 0
      %4718 = vmatprep.subr.bf16.mxu0 0
      %4719 = vmatpush1.bf16.msra.mxu0 0
      %4720 = vmatprep.subr.bf16.mxu0 0
      %4721 = vmatpush1.bf16.msra.mxu0 0
      %4722 = vmatprep.subr.bf16.mxu0 0
      %4723 = vmatpush1.bf16.msra.mxu0 0
      %4724 = vmatprep.subr.bf16.mxu0 0
      %4725 = vmatpush1.bf16.msra.mxu0 0
      %4726 = vmatprep.subr.bf16.mxu0 0
      %4727 = vmatpush1.bf16.msra.mxu0 0
      %4728 = vmatprep.subr.bf16.mxu0 0
      %4729 = vmatpush1.bf16.msra.mxu0 0
      %4730 = vmatprep.subr.bf16.mxu0 0
      %4731 = vmatpush1.bf16.msra.mxu0 0
      %4732 = vmatprep.mubr.bf16.mxu0 0
      %4733 = vmatmul.mubr.bf16.gmra.mrb[0].mxu0 %v4492
      %v4734 = vpop.f32.mrb[0].mxu0
      %v4735 = vadd.f32 %v4574, %v4734
      %v4736 = vpop.f32.mrb[0].mxu0
      %v4737 = vpop.f32.mrb[0].mxu0
      %v4738 = vadd.f32 %v4577, %v4737
      %v4739 = vpop.f32.mrb[0].mxu0
      %4740 = vmatprep.mubr.bf16.mxu0 0
      %4741 = vmatmul.mubr.bf16.gmra.mrb[0].mxu0 %v4495
      %v4742 = vpop.f32.mrb[0].mxu0
      %v4743 = vadd.f32 %v4582, %v4742
      %v4744 = vpop.f32.mrb[0].mxu0
      %v4745 = vpop.f32.mrb[0].mxu0
      %v4746 = vadd.f32 %v4585, %v4745
      %v4747 = vpop.f32.mrb[0].mxu0
      %4748 = vmatprep.mubr.bf16.mxu0 0
      %4749 = vmatmul.mubr.bf16.gmra.mrb[0].mxu0 %v4498
      %v4750 = vpop.f32.mrb[0].mxu0
      %v4751 = vadd.f32 %v4590, %v4750
      %v4752 = vpop.f32.mrb[0].mxu0
      %v4753 = vpop.f32.mrb[0].mxu0
      %v4754 = vadd.f32 %v4593, %v4753
      %v4755 = vpop.f32.mrb[0].mxu0
      %4756 = vmatprep.mubr.bf16.mxu0 0
      %4757 = vmatmul.mubr.bf16.gmra.mrb[0].mxu0 %v4501
      %v4758 = vpop.f32.mrb[0].mxu0
      %v4759 = vadd.f32 %v4598, %v4758
      %v4760 = vpop.f32.mrb[0].mxu0
      %v4761 = vpop.f32.mrb[0].mxu0
      %v4762 = vadd.f32 %v4601, %v4761
      %v4763 = vpop.f32.mrb[0].mxu0
      %4764 = vmatprep.mubr.bf16.mxu0 0
      %4765 = vmatmul.mubr.bf16.gmra.mrb[0].mxu0 %v4504
      %v4766 = vpop.f32.mrb[0].mxu0
      %v4767 = vadd.f32 %v4606, %v4766
      %v4768 = vpop.f32.mrb[0].mxu0
      %v4769 = vpop.f32.mrb[0].mxu0
      %v4770 = vadd.f32 %v4609, %v4769
      %v4771 = vpop.f32.mrb[0].mxu0
      %4772 = vmatprep.mubr.bf16.mxu0 0
      %4773 = vmatmul.mubr.bf16.gmra.mrb[0].mxu0 %v4507
      %v4774 = vpop.f32.mrb[0].mxu0
      %v4775 = vadd.f32 %v4614, %v4774
      %v4776 = vpop.f32.mrb[0].mxu0
      %v4777 = vpop.f32.mrb[0].mxu0
      %v4778 = vadd.f32 %v4617, %v4777
      %v4779 = vpop.f32.mrb[0].mxu0
      %4780 = vmatprep.mubr.bf16.mxu0 0
      %4781 = vmatmul.mubr.bf16.gmra.mrb[0].mxu0 %v4510
      %v4782 = vpop.f32.mrb[0].mxu0
      %v4783 = vadd.f32 %v4622, %v4782
      %v4784 = vpop.f32.mrb[0].mxu0
      %v4785 = vpop.f32.mrb[0].mxu0
      %v4786 = vadd.f32 %v4625, %v4785
      %v4787 = vpop.f32.mrb[0].mxu0
      %4788 = vmatprep.mubr.bf16.mxu0 0
      %4789 = vmatmul.mubr.bf16.gmra.mrb[0].mxu0 %v4513
      %v4790 = vpop.f32.mrb[0].mxu0
      %v4791 = vadd.f32 %v4630, %v4790
      %v4792 = vpop.f32.mrb[0].mxu0
      %v4793 = vpop.f32.mrb[0].mxu0
      %v4794 = vadd.f32 %v4633, %v4793
      %v4795 = vpop.f32.mrb[0].mxu0
      %4796 = vmatprep.mubr.bf16.mxu0 0
      %4797 = vmatmul.mubr.bf16.gmra.mrb[0].mxu0 %v4516
      %v4798 = vpop.f32.mrb[0].mxu0
      %v4799 = vadd.f32 %v4638, %v4798
      %v4800 = vpop.f32.mrb[0].mxu0
      %v4801 = vpop.f32.mrb[0].mxu0
      %v4802 = vadd.f32 %v4641, %v4801
      %v4803 = vpop.f32.mrb[0].mxu0
      %4804 = vmatprep.mubr.bf16.mxu0 0
      %4805 = vmatmul.mubr.bf16.gmra.mrb[0].mxu0 %v4519
      %v4806 = vpop.f32.mrb[0].mxu0
      %v4807 = vadd.f32 %v4646, %v4806
      %v4808 = vpop.f32.mrb[0].mxu0
      %v4809 = vpop.f32.mrb[0].mxu0
      %v4810 = vadd.f32 %v4649, %v4809
      %v4811 = vpop.f32.mrb[0].mxu0
      %4812 = vmatprep.mubr.bf16.mxu0 0
      %4813 = vmatmul.mubr.bf16.gmra.mrb[0].mxu0 %v4522
      %v4814 = vpop.f32.mrb[0].mxu0
      %v4815 = vadd.f32 %v4654, %v4814
      %v4816 = vpop.f32.mrb[0].mxu0
      %v4817 = vpop.f32.mrb[0].mxu0
      %v4818 = vadd.f32 %v4657, %v4817
      %v4819 = vpop.f32.mrb[0].mxu0
      %4820 = vmatprep.mubr.bf16.mxu0 0
      %4821 = vmatmul.mubr.bf16.gmra.mrb[0].mxu0 %v4525
      %v4822 = vpop.f32.mrb[0].mxu0
      %v4823 = vadd.f32 %v4662, %v4822
      %v4824 = vpop.f32.mrb[0].mxu0
      %v4825 = vpop.f32.mrb[0].mxu0
      %v4826 = vadd.f32 %v4665, %v4825
      %v4827 = vpop.f32.mrb[0].mxu0
      %4828 = vmatprep.mubr.bf16.mxu0 0
      %4829 = vmatmul.mubr.bf16.gmra.mrb[0].mxu0 %v4528
      %v4830 = vpop.f32.mrb[0].mxu0
      %v4831 = vadd.f32 %v4670, %v4830
      %v4832 = vpop.f32.mrb[0].mxu0
      %v4833 = vpop.f32.mrb[0].mxu0
      %v4834 = vadd.f32 %v4673, %v4833
      %v4835 = vpop.f32.mrb[0].mxu0
      %4836 = vmatprep.mubr.bf16.mxu0 0
      %4837 = vmatmul.mubr.bf16.gmra.mrb[0].mxu0 %v4531
      %v4838 = vpop.f32.mrb[0].mxu0
      %v4839 = vadd.f32 %v4678, %v4838
      %v4840 = vpop.f32.mrb[0].mxu0
      %v4841 = vpop.f32.mrb[0].mxu0
      %v4842 = vadd.f32 %v4681, %v4841
      %v4843 = vpop.f32.mrb[0].mxu0
      %4844 = vmatprep.mubr.bf16.mxu0 0
      %4845 = vmatmul.mubr.bf16.gmra.mrb[0].mxu0 %v4534
      %v4846 = vpop.f32.mrb[0].mxu0
      %v4847 = vadd.f32 %v4686, %v4846
      %v4848 = vpop.f32.mrb[0].mxu0
      %v4849 = vpop.f32.mrb[0].mxu0
      %v4850 = vadd.f32 %v4689, %v4849
      %v4851 = vpop.f32.mrb[0].mxu0
      %4852 = vmatprep.mubr.bf16.mxu0 0
      %4853 = vmatmul.mubr.bf16.gmra.mrb[0].mxu0 %v4537
      %v4854 = vpop.f32.mrb[0].mxu0
      %v4855 = vadd.f32 %v4694, %v4854
      %v4856 = vpop.f32.mrb[0].mxu0
      %v4857 = vpop.f32.mrb[0].mxu0
      %v4858 = vadd.f32 %v4697, %v4857
      %v4859 = vpop.f32.mrb[0].mxu0
      %4860 = vdwg.mxu0
      %v4861 = vmax.f32 %v4735, 0.0
      %v4862 = vmax.f32 %v4738, 0.0
      %v4863 = vmax.f32 %v4743, 0.0
      %v4864 = vmax.f32 %v4746, 0.0
      %v4865 = vmax.f32 %v4751, 0.0
      %v4866 = vmax.f32 %v4754, 0.0
      %v4867 = vmax.f32 %v4759, 0.0
      %v4868 = vmax.f32 %v4762, 0.0
      %v4869 = vmax.f32 %v4767, 0.0
      %v4870 = vmax.f32 %v4770, 0.0
      %v4871 = vmax.f32 %v4775, 0.0
      %v4872 = vmax.f32 %v4778, 0.0
      %v4873 = vmax.f32 %v4783, 0.0
      %v4874 = vmax.f32 %v4786, 0.0
      %v4875 = vmax.f32 %v4791, 0.0
      %v4876 = vmax.f32 %v4794, 0.0
      %v4877 = vmax.f32 %v4799, 0.0
      %v4878 = vmax.f32 %v4802, 0.0
      %v4879 = vmax.f32 %v4807, 0.0
      %v4880 = vmax.f32 %v4810, 0.0
      %v4881 = vmax.f32 %v4815, 0.0
      %v4882 = vmax.f32 %v4818, 0.0
      %v4883 = vmax.f32 %v4823, 0.0
      %v4884 = vmax.f32 %v4826, 0.0
      %v4885 = vmax.f32 %v4831, 0.0
      %v4886 = vmax.f32 %v4834, 0.0
      %v4887 = vmax.f32 %v4839, 0.0
      %v4888 = vmax.f32 %v4842, 0.0
      %v4889 = vmax.f32 %v4847, 0.0
      %v4890 = vmax.f32 %v4850, 0.0
      %v4891 = vmax.f32 %v4855, 0.0
      %v4892 = vmax.f32 %v4858, 0.0
      %v4893 = vadd.f32 %v4861, %v226
      %v4894 = vadd.f32 %v4862, %v227
      %v4895 = vadd.f32 %v4863, %v228
      %v4896 = vadd.f32 %v4864, %v229
      %v4897 = vadd.f32 %v4865, %v230
      %v4898 = vadd.f32 %v4866, %v231
      %v4899 = vadd.f32 %v4867, %v232
      %v4900 = vadd.f32 %v4868, %v233
      %v4901 = vadd.f32 %v4869, %v234
      %v4902 = vadd.f32 %v4870, %v235
      %v4903 = vadd.f32 %v4871, %v236
      %v4904 = vadd.f32 %v4872, %v237
      %v4905 = vadd.f32 %v4873, %v238
      %v4906 = vadd.f32 %v4874, %v239
      %v4907 = vadd.f32 %v4875, %v240
      %v4908 = vadd.f32 %v4876, %v241
      %v4909 = vadd.f32 %v4877, %v242
      %v4910 = vadd.f32 %v4878, %v243
      %v4911 = vadd.f32 %v4879, %v244
      %v4912 = vadd.f32 %v4880, %v245
      %v4913 = vadd.f32 %v4881, %v246
      %v4914 = vadd.f32 %v4882, %v247
      %v4915 = vadd.f32 %v4883, %v248
      %v4916 = vadd.f32 %v4884, %v249
      %v4917 = vadd.f32 %v4885, %v250
      %v4918 = vadd.f32 %v4886, %v251
      %v4919 = vadd.f32 %v4887, %v252
      %v4920 = vadd.f32 %v4888, %v253
      %v4921 = vadd.f32 %v4889, %v254
      %v4922 = vadd.f32 %v4890, %v255
      %v4923 = vadd.f32 %v4891, %v256
      %v4924 = vadd.f32 %v4892, %v257
      %4925 = vst.msk [vmem:[%s224] sm:$0xff] %vm310, %v4893
      %4926 = vst.msk [vmem:[%s224 + $0x8] sm:$0xff] %vm310, %v4894
      %4927 = vst.msk [vmem:[%s224 + $0x10] sm:$0xff] %vm310, %v4895
      %4928 = vst.msk [vmem:[%s224 + $0x18] sm:$0xff] %vm310, %v4896
      %4929 = vst.msk [vmem:[%s224 + $0x20] sm:$0xff] %vm310, %v4897
      %4930 = vst.msk [vmem:[%s224 + $0x28] sm:$0xff] %vm310, %v4898
      %4931 = vst.msk [vmem:[%s224 + $0x30] sm:$0xff] %vm310, %v4899
      %4932 = vst.msk [vmem:[%s224 + $0x38] sm:$0xff] %vm310, %v4900
      %4933 = vst.msk [vmem:[%s224 + $0x40] sm:$0xff] %vm310, %v4901
      %4934 = vst.msk [vmem:[%s224 + $0x48] sm:$0xff] %vm310, %v4902
      %4935 = vst.msk [vmem:[%s224 + $0x50] sm:$0xff] %vm310, %v4903
      %4936 = vst.msk [vmem:[%s224 + $0x58] sm:$0xff] %vm310, %v4904
      %4937 = vst.msk [vmem:[%s224 + $0x60] sm:$0xff] %vm310, %v4905
      %4938 = vst.msk [vmem:[%s224 + $0x68] sm:$0xff] %vm310, %v4906
      %4939 = vst.msk [vmem:[%s224 + $0x70] sm:$0xff] %vm310, %v4907
      %4940 = vst.msk [vmem:[%s224 + $0x78] sm:$0xff] %vm310, %v4908
      %4941 = vst.msk [vmem:[%s224 + $0x80] sm:$0xff] %vm310, %v4909
      %4942 = vst.msk [vmem:[%s224 + $0x88] sm:$0xff] %vm310, %v4910
      %4943 = vst.msk [vmem:[%s224 + $0x90] sm:$0xff] %vm310, %v4911
      %4944 = vst.msk [vmem:[%s224 + $0x98] sm:$0xff] %vm310, %v4912
      %4945 = vst.msk [vmem:[%s224 + $0xa0] sm:$0xff] %vm310, %v4913
      %4946 = vst.msk [vmem:[%s224 + $0xa8] sm:$0xff] %vm310, %v4914
      %4947 = vst.msk [vmem:[%s224 + $0xb0] sm:$0xff] %vm310, %v4915
      %4948 = vst.msk [vmem:[%s224 + $0xb8] sm:$0xff] %vm310, %v4916
      %4949 = vst.msk [vmem:[%s224 + $0xc0] sm:$0xff] %vm310, %v4917
      %4950 = vst.msk [vmem:[%s224 + $0xc8] sm:$0xff] %vm310, %v4918
      %4951 = vst.msk [vmem:[%s224 + $0xd0] sm:$0xff] %vm310, %v4919
      %4952 = vst.msk [vmem:[%s224 + $0xd8] sm:$0xff] %vm310, %v4920
      %4953 = vst.msk [vmem:[%s224 + $0xe0] sm:$0xff] %vm310, %v4921
      %4954 = vst.msk [vmem:[%s224 + $0xe8] sm:$0xff] %vm310, %v4922
      %4955 = vst.msk [vmem:[%s224 + $0xf0] sm:$0xff] %vm310, %v4923
      %4956 = vst.msk [vmem:[%s224 + $0xf8] sm:$0xff] %vm310, %v4924
      %p4957 = scmp.lt.s32.totalorder %s16, 1
      %s4958 = scalar_select %p4957, %s16, 1
      %s4959 = smul.addr %s4958, 32
      %s4960 = smul.addr %s4959, 8
      %s4961 = scalar_lea.vmem %s5, %s4960
      // Predicated region
      $region41: #{tpu_custom_call.1} parent=39 // pred_check
        %p4962 = pneg %p144
      $region42: #{tpu_custom_call.1} parent=39 // pred_check_branch
        %4964 = sbr.rel (%p4962) target = $region44
      $region43: #{tpu_custom_call.1} parent=39 // pred_region
        _
      $region44: #{tpu_custom_call.1} parent=39 // pred_fallthru
        _
    $region40: #{tpu_custom_call.1} parent=5 // pred_fallthru
      _
    %p4965 = scmp.le.s32.totalorder 2, %s11
    // Predicated region
    $region45: #{tpu_custom_call.1} parent=5 // pred_check
      %p4966 = pneg %p4965
    $region46: #{tpu_custom_call.1} parent=5 // pred_check_branch
      %4968 = sbr.rel (%p4966) target = $region48
    $region47: #{tpu_custom_call.1} parent=5 // pred_region
      %s4969 = ssub.s32 %s11, 2
      // Predicated region
      $region49: #{tpu_custom_call.1} parent=47 // pred_check
        %p4970 = pneg %p150
      $region50: #{tpu_custom_call.1} parent=47 // pred_check_branch
        %4972 = sbr.rel (%p4970) target = $region52
      $region51: #{tpu_custom_call.1} parent=47 // pred_region
        %p4973 = scmp.lt.s32.totalorder %s17, 1
        %s4974 = scalar_select %p4973, %s17, 1
        %s4975 = smul.addr %s4974, 32
        %s4976 = smul.addr %s4975, 8
        %s4977 = scalar_lea.vmem %s5, %s4976
      $region52: #{tpu_custom_call.1} parent=47 // pred_fallthru
        _
    $region48: #{tpu_custom_call.1} parent=5 // pred_fallthru
      _
  $region6: #{tpu_custom_call.1} parent=0 // loop_footer
    %s15 = sadd.s32 1, %s11
  $region7: #{tpu_custom_call.1} parent=0 // loop_footer_branch
    %10 = sbr.rel target = $region3
  $region8: #{tpu_custom_call.1} parent=0 // loop_exit
    _

</llo_original>
